<compile_context>
chip_gen: v7x
topology: tpu7x:2x2x1
jax: 0.10.0
libtpu: 0.0.40
codegen_flags: <defaults>
</compile_context>

<pallas_src>
import jax
import jax.numpy as jnp
from jax.experimental import pallas as pl
from jax.experimental.pallas import tpu as pltpu

LATENT_DIM = 512
HIDDEN = 512
NUM_ATTR = 40
BATCH = 32                     # hard-coded by the module's z.view(batch_size, -1)
K_CENTER = 4 * LATENT_DIM      # 4 non-padded conv taps * Cin = 2048


# ---------------------------------------------------------------------------
# Fused Pallas kernel: conv-as-matmul + FC1/ReLU + FC2 + sigmoid, single step.
# ---------------------------------------------------------------------------
def _disc_kernel(a_ref, wc_ref, bc_ref, w1_ref, b1_ref, w2_ref, b2_ref, o_ref):
    # Conv2d(512,512,k4,s2,p1) on the 2x2 latent == one (M,2048)x(2048,512) matmul
    # (only the 4 taps that see non-padded data).  bf16 MXU inputs, f32 accumulate.
    y0 = jnp.dot(a_ref[...], wc_ref[...],
                 preferred_element_type=jnp.float32) + bc_ref[...]
    # fc1 + ReLU   (elementwise math stays f32: v5e has no bf16 VPU/EUP path)
    y1 = jnp.dot(y0.astype(jnp.bfloat16), w1_ref[...],
                 preferred_element_type=jnp.float32) + b1_ref[...]
    y1 = jnp.maximum(y1, 0.0)
    # fc2 + bias
    y2 = jnp.dot(y1.astype(jnp.bfloat16), w2_ref[...],
                 preferred_element_type=jnp.float32) + b2_ref[...]
    # Dropout(0.3): identity at inference.
    # TODO(synk): training-mode dropout needs pltpu.prng_seed / prng_random_bits.
    # Numerically-stable sigmoid: exp on the EUP + approx reciprocal (off the VALU).
    e = jnp.exp(-jnp.abs(y2))
    r = pl.reciprocal(1.0 + e, approx=True)
    o_ref[...] = jnp.where(y2 >= 0.0, r, e * r).astype(o_ref.dtype)


def fused_discriminator_head(a, wc, bc, w1, b1, w2, b2):
    """a:(M,2048) bf16 patches; wc:(2048,512) bf16; w1:(512,512) bf16; w2:(512,40) bf16."""
    M = a.shape[0]
    return pl.pallas_call(
        _disc_kernel,
        out_shape=jax.ShapeDtypeStruct((M, NUM_ATTR), jnp.float32),
        grid_spec=pltpu.PrefetchScalarGridSpec(
            num_scalar_prefetch=0,
            grid=(1,),   # whole problem (~3 MiB) fits VMEM -> single step, no K pipeline
            in_specs=[
                pl.BlockSpec((M, K_CENTER), lambda i: (0, 0)),        # patches
                pl.BlockSpec((K_CENTER, HIDDEN), lambda i: (0, 0)),   # pruned conv weight
                pl.BlockSpec((1, HIDDEN), lambda i: (0, 0)),          # conv bias
                pl.BlockSpec((HIDDEN, HIDDEN), lambda i: (0, 0)),     # fc1 weight
                pl.BlockSpec((1, HIDDEN), lambda i: (0, 0)),          # fc1 bias
                pl.BlockSpec((HIDDEN, NUM_ATTR), lambda i: (0, 0)),   # fc2 weight
                pl.BlockSpec((1, NUM_ATTR), lambda i: (0, 0)),        # fc2 bias
            ],
            out_specs=pl.BlockSpec((M, NUM_ATTR), lambda i: (0, 0)),  # exact width, no pad
        ),
        compiler_params=pltpu.CompilerParams(
            dimension_semantics=("arbitrary",)),
    )(a, wc, bc, w1, b1, w2, b2)


# ---------------------------------------------------------------------------
# Parameters (PyTorch layout) + one-time kernel-ready preprocessing (hoisted).
# ---------------------------------------------------------------------------
def init_params(key):
    k = jax.random.split(key, 6)
    return {
        "conv_w": 0.02 * jax.random.normal(k[0], (512, LATENT_DIM, 4, 4), jnp.float32),
        "conv_b": 0.01 * jax.random.normal(k[1], (512,), jnp.float32),
        "fc1_w": 0.05 * jax.random.normal(k[2], (HIDDEN, 512), jnp.float32),   # (out,in)
        "fc1_b": 0.01 * jax.random.normal(k[3], (HIDDEN,), jnp.float32),
        "fc2_w": 0.05 * jax.random.normal(k[4], (NUM_ATTR, HIDDEN), jnp.float32),
        "fc2_b": 0.01 * jax.random.normal(k[5], (NUM_ATTR,), jnp.float32),
    }


def prepare_params(params):
    """Run ONCE: tap-prune + transpose + bf16-cast weights, reshape biases."""
    conv_w = params["conv_w"]                                # (Cout, Cin, 4, 4)
    # Only taps (kh,kw) in {1,2}x{1,2} see non-padded data for the 2x2 latent map; the
    # other 12 taps multiply padding zeros.  Column order (cin, kh, kw) matches a plain
    # z.reshape(B, Cin*2*2) of the NCHW input, so the activation needs no transpose.
    wc = conv_w[:, :, 1:3, 1:3].transpose(1, 2, 3, 0).reshape(K_CENTER, 512)
    return {
        "wc": wc.astype(jnp.bfloat16),
        "bc": params["conv_b"].reshape(1, -1).astype(jnp.float32),
        "w1": params["fc1_w"].T.astype(jnp.bfloat16),        # (in, out)
        "b1": params["fc1_b"].reshape(1, -1).astype(jnp.float32),
        "w2": params["fc2_w"].T.astype(jnp.bfloat16),        # (in, out)
        "b2": params["fc2_b"].reshape(1, -1).astype(jnp.float32),
    }


# ---------------------------------------------------------------------------
# Forward (per-call work: one tiny reshape + bf16 cast of the activation)
# ---------------------------------------------------------------------------
def discriminator_forward(prepped, z_nchw):
    B, C, H, W = z_nchw.shape
    assert (C, H, W) == (LATENT_DIM, 2, 2), \
        "Discriminator's view(batch,-1)+Linear(512) requires a 512x2x2 latent"
    # For the 2x2 input the im2col rows over the 4 non-padded taps (cin,kh,kw order)
    # are exactly the flattened NCHW sample.
    a = z_nchw.reshape(B, C * H * W).astype(jnp.bfloat16)
    return fused_discriminator_head(a, prepped["wc"], prepped["bc"],
                                    prepped["w1"], prepped["b1"],
                                    prepped["w2"], prepped["b2"])


# Pure-JAX f32 reference (full 4x4 kernel over explicitly padded input).
def reference_forward(params, z_nchw):
    zp = jnp.pad(z_nchw, ((0, 0), (0, 0), (1, 1), (1, 1)))        # (B, C, 4, 4)
    y0 = jnp.einsum("bchw,ochw->bo", zp, params["conv_w"]) + params["conv_b"]
    y1 = jnp.maximum(y0 @ params["fc1_w"].T + params["fc1_b"], 0.0)
    y2 = y1 @ params["fc2_w"].T + params["fc2_b"]
    return jax.nn.sigmoid(y2)


if __name__ == "__main__":
    key = jax.random.PRNGKey(0)
    kp, kz = jax.random.split(key)

    params = init_params(kp)
    prepped = prepare_params(params)          # hoisted: computed once, not per forward
    z = jax.random.normal(kz, (BATCH, LATENT_DIM, 2, 2), jnp.float32)

    fwd = jax.jit(discriminator_forward)
    out = jax.block_until_ready(fwd(prepped, z))

    assert out.shape == (BATCH, NUM_ATTR), out.shape
    assert bool(jnp.all(jnp.isfinite(out)))
    assert bool(jnp.all((out >= 0.0) & (out <= 1.0)))

    ref = reference_forward(params, z)
    max_err = float(jnp.max(jnp.abs(out - ref)))
    assert max_err < 5e-2, max_err            # bf16-MXU / f32-accumulate tolerance

    print("KERNEL_OK")
</pallas_src>

<mosaic_0001>
module attributes {stable_mosaic.version = 11 : i64} {
  func.func @_disc_kernel(%arg0: i32, %arg1: memref<32x2048xbf16, #tpu.memory_space<vmem>>, %arg2: memref<2048x512xbf16, #tpu.memory_space<vmem>>, %arg3: memref<1x512xf32, #tpu.memory_space<vmem>>, %arg4: memref<512x512xbf16, #tpu.memory_space<vmem>>, %arg5: memref<1x512xf32, #tpu.memory_space<vmem>>, %arg6: memref<512x40xbf16, #tpu.memory_space<vmem>>, %arg7: memref<1x40xf32, #tpu.memory_space<vmem>>, %arg8: memref<32x40xf32, #tpu.memory_space<vmem>>) attributes {dimension_semantics = [#tpu.dimension_semantics<arbitrary>], iteration_bounds = array<i64: 1>, scalar_prefetch = 0 : i64, scratch_operands = 0 : i64, tpu.core_type = #tpu.core_type<tc>, window_params = [{pipeline_mode = #tpu.pipeline_mode<synchronous>, transform_indices = @transform_0, window_bounds = array<i64: 32, 2048>}, {pipeline_mode = #tpu.pipeline_mode<synchronous>, transform_indices = @transform_1, window_bounds = array<i64: 2048, 512>}, {pipeline_mode = #tpu.pipeline_mode<synchronous>, transform_indices = @transform_2, window_bounds = array<i64: 1, 512>}, {pipeline_mode = #tpu.pipeline_mode<synchronous>, transform_indices = @transform_3, window_bounds = array<i64: 512, 512>}, {pipeline_mode = #tpu.pipeline_mode<synchronous>, transform_indices = @transform_4, window_bounds = array<i64: 1, 512>}, {pipeline_mode = #tpu.pipeline_mode<synchronous>, transform_indices = @transform_5, window_bounds = array<i64: 512, 40>}, {pipeline_mode = #tpu.pipeline_mode<synchronous>, transform_indices = @transform_6, window_bounds = array<i64: 1, 40>}, {pipeline_mode = #tpu.pipeline_mode<synchronous>, transform_indices = @transform_7, window_bounds = array<i64: 32, 40>}]} {
    %c0 = arith.constant 0 : index
    %c0_0 = arith.constant 0 : index
    %0 = vector.load %arg1[%c0, %c0_0] : memref<32x2048xbf16, #tpu.memory_space<vmem>>, vector<32x2048xbf16>
    %c0_1 = arith.constant 0 : index
    %c0_2 = arith.constant 0 : index
    %1 = vector.load %arg2[%c0_1, %c0_2] : memref<2048x512xbf16, #tpu.memory_space<vmem>>, vector<2048x512xbf16>
    %cst = arith.constant dense<0.000000e+00> : vector<32x512xf32>
    %2 = tpu.matmul %0, %1, %cst {dimension_numbers = #tpu.dot_dimension_numbers<[1], [0], [0], [1], [0, 0, 1, 1], [], []>} : vector<32x2048xbf16>, vector<2048x512xbf16>, vector<32x512xf32> -> vector<32x512xf32>
    %c0_3 = arith.constant 0 : index
    %c0_4 = arith.constant 0 : index
    %3 = vector.load %arg3[%c0_3, %c0_4] : memref<1x512xf32, #tpu.memory_space<vmem>>, vector<1x512xf32>
    %4 = vector.broadcast %3 : vector<1x512xf32> to vector<32x512xf32>
    %5 = arith.addf %2, %4 : vector<32x512xf32>
    %6 = arith.truncf %5 : vector<32x512xf32> to vector<32x512xbf16>
    %c0_5 = arith.constant 0 : index
    %c0_6 = arith.constant 0 : index
    %7 = vector.load %arg4[%c0_5, %c0_6] : memref<512x512xbf16, #tpu.memory_space<vmem>>, vector<512x512xbf16>
    %cst_7 = arith.constant dense<0.000000e+00> : vector<32x512xf32>
    %8 = tpu.matmul %6, %7, %cst_7 {dimension_numbers = #tpu.dot_dimension_numbers<[1], [0], [0], [1], [0, 0, 1, 1], [], []>} : vector<32x512xbf16>, vector<512x512xbf16>, vector<32x512xf32> -> vector<32x512xf32>
    %c0_8 = arith.constant 0 : index
    %c0_9 = arith.constant 0 : index
    %9 = vector.load %arg5[%c0_8, %c0_9] : memref<1x512xf32, #tpu.memory_space<vmem>>, vector<1x512xf32>
    %10 = vector.broadcast %9 : vector<1x512xf32> to vector<32x512xf32>
    %11 = arith.addf %8, %10 : vector<32x512xf32>
    %cst_10 = arith.constant 0.000000e+00 : f32
    %12 = vector.broadcast %cst_10 : f32 to vector<32x512xf32>
    %13 = arith.maximumf %11, %12 : vector<32x512xf32>
    %14 = arith.truncf %13 : vector<32x512xf32> to vector<32x512xbf16>
    %c0_11 = arith.constant 0 : index
    %c0_12 = arith.constant 0 : index
    %15 = vector.load %arg6[%c0_11, %c0_12] : memref<512x40xbf16, #tpu.memory_space<vmem>>, vector<512x40xbf16>
    %cst_13 = arith.constant dense<0.000000e+00> : vector<32x40xf32>
    %16 = tpu.matmul %14, %15, %cst_13 {dimension_numbers = #tpu.dot_dimension_numbers<[1], [0], [0], [1], [0, 0, 1, 1], [], []>} : vector<32x512xbf16>, vector<512x40xbf16>, vector<32x40xf32> -> vector<32x40xf32>
    %c0_14 = arith.constant 0 : index
    %c0_15 = arith.constant 0 : index
    %17 = vector.load %arg7[%c0_14, %c0_15] : memref<1x40xf32, #tpu.memory_space<vmem>>, vector<1x40xf32>
    %18 = vector.broadcast %17 : vector<1x40xf32> to vector<32x40xf32>
    %19 = arith.addf %16, %18 : vector<32x40xf32>
    %20 = math.absf %19 : vector<32x40xf32>
    %cst_16 = arith.constant 0.000000e+00 : f32
    %21 = vector.broadcast %cst_16 : f32 to vector<32x40xf32>
    %22 = arith.subf %21, %20 : vector<32x40xf32>
    %23 = math.exp %22 : vector<32x40xf32>
    %cst_17 = arith.constant 1.000000e+00 : f32
    %24 = vector.broadcast %cst_17 : f32 to vector<32x40xf32>
    %25 = arith.addf %24, %23 : vector<32x40xf32>
    %26 = tpu.reciprocal %25 {approx = true} : vector<32x40xf32> -> vector<32x40xf32>
    %cst_18 = arith.constant 0.000000e+00 : f32
    %27 = vector.broadcast %cst_18 : f32 to vector<32x40xf32>
    %28 = arith.cmpf oge, %19, %27 : vector<32x40xf32>
    %29 = arith.mulf %23, %26 : vector<32x40xf32>
    %30 = arith.select %28, %26, %29 : vector<32x40xi1>, vector<32x40xf32>
    %c0_19 = arith.constant 0 : index
    %c0_20 = arith.constant 0 : index
    %31 = vector.load %arg8[%c0_19, %c0_20] : memref<32x40xf32, #tpu.memory_space<vmem>>, vector<32x40xf32>
    tpu.vector_store %arg8[%c0_19, %c0_20], %30 {strides = array<i32>} : memref<32x40xf32, #tpu.memory_space<vmem>>, vector<32x40xf32>,
    return
  }
  func.func @transform_0(%arg0: i32) -> (i32, i32) {
    %c0_i32 = arith.constant 0 : i32
    %c0_i32_0 = arith.constant 0 : i32
    %c0_i32_1 = arith.constant 0 : i32
    return %c0_i32, %c0_i32_0 : i32, i32
  }
  func.func @transform_1(%arg0: i32) -> (i32, i32) {
    %c0_i32 = arith.constant 0 : i32
    %c0_i32_0 = arith.constant 0 : i32
    %c0_i32_1 = arith.constant 0 : i32
    return %c0_i32, %c0_i32_0 : i32, i32
  }
  func.func @transform_2(%arg0: i32) -> (i32, i32) {
    %c0_i32 = arith.constant 0 : i32
    %c0_i32_0 = arith.constant 0 : i32
    %c0_i32_1 = arith.constant 0 : i32
    return %c0_i32, %c0_i32_0 : i32, i32
  }
  func.func @transform_3(%arg0: i32) -> (i32, i32) {
    %c0_i32 = arith.constant 0 : i32
    %c0_i32_0 = arith.constant 0 : i32
    %c0_i32_1 = arith.constant 0 : i32
    return %c0_i32, %c0_i32_0 : i32, i32
  }
  func.func @transform_4(%arg0: i32) -> (i32, i32) {
    %c0_i32 = arith.constant 0 : i32
    %c0_i32_0 = arith.constant 0 : i32
    %c0_i32_1 = arith.constant 0 : i32
    return %c0_i32, %c0_i32_0 : i32, i32
  }
  func.func @transform_5(%arg0: i32) -> (i32, i32) {
    %c0_i32 = arith.constant 0 : i32
    %c0_i32_0 = arith.constant 0 : i32
    %c0_i32_1 = arith.constant 0 : i32
    return %c0_i32, %c0_i32_0 : i32, i32
  }
  func.func @transform_6(%arg0: i32) -> (i32, i32) {
    %c0_i32 = arith.constant 0 : i32
    %c0_i32_0 = arith.constant 0 : i32
    %c0_i32_1 = arith.constant 0 : i32
    return %c0_i32, %c0_i32_0 : i32, i32
  }
  func.func @transform_7(%arg0: i32) -> (i32, i32) {
    %c0_i32 = arith.constant 0 : i32
    %c0_i32_0 = arith.constant 0 : i32
    %c0_i32_1 = arith.constant 0 : i32
    return %c0_i32, %c0_i32_0 : i32, i32
  }
}

</mosaic_0001>

<llo_original>
// kernel: discriminator_forward.1
$region0: #{discriminator_forward.1}
  #allocation0 [shape = 'u32[]', space=smem, size = 0x4, offset = 0x4, fixed_abs, tag = 'smem constant byte address 0x4 - core index']
  #allocation1 [shape = 'u32[144,128]{1,0:T(1,128)}', space=vmem, size = 0x12000, scoped, tag = 'internal scratch']
  %s0 = inlined_call_operand.vmem [shape: bf16[32,2048], index: 0, kind: input, shape index: {}]
  %s1 = inlined_call_operand.hbm [shape: bf16[2048,512], index: 1, kind: input, shape index: {}]
  %s2 = inlined_call_operand.hbm [shape: f32[1,512], index: 2, kind: input, shape index: {}]
  %s3 = inlined_call_operand.vmem [shape: bf16[512,512], index: 3, kind: input, shape index: {}]
  %s4 = inlined_call_operand.hbm [shape: f32[1,512], index: 4, kind: input, shape index: {}]
  %s5 = inlined_call_operand.vmem [shape: bf16[512,40], index: 5, kind: input, shape index: {}]
  %s6 = inlined_call_operand.hbm [shape: f32[1,40], index: 6, kind: input, shape index: {}]
  %s7 = inlined_call_operand.hbm [shape: f32[32,40], index: 7, kind: output, shape index: {}]
  %s8 = sld [smem:[#allocation0]]
  $region54: #{discriminator_forward.1} parent=0
    _
  %s10 = ssub.s32 1, %s8
  %s11 = scalar_select 0, %s10, %s8
  $region1: #{discriminator_forward.1} parent=0
    #allocation2 [shape = 'u8[2097152]{0}', space=vmem, size = 0x200000, scoped, tag = 'input window, operand 1, single buffered']
    #allocation3 [shape = 's32[1]{0}', space=sflag, size = 0x4, scoped, tag = 'scoped memory for discriminator_forward.1']
    #allocation4 [shape = 's32[1]{0}', space=sflag, size = 0x4, scoped, tag = 'scoped memory for discriminator_forward.1']
    #allocation5 [shape = 'u8[2048]{0}', space=vmem, size = 0x800, scoped, tag = 'input window, operand 2, single buffered']
    #allocation6 [shape = 's32[1]{0}', space=sflag, size = 0x4, scoped, tag = 'scoped memory for discriminator_forward.1']
    #allocation7 [shape = 'u8[2048]{0}', space=vmem, size = 0x800, scoped, tag = 'input window, operand 4, single buffered']
    #allocation8 [shape = 'u8[512]{0}', space=vmem, size = 0x400, scoped, tag = 'input window, operand 6, single buffered']
    #allocation9 [shape = 's32[1]{0}', space=sflag, size = 0x4, scoped, tag = 'scoped memory for discriminator_forward.1']
    #allocation10 [shape = 'u8[16384]{0}', space=vmem, size = 0x4000, scoped, tag = 'output window, operand 0, single buffered']
    %12 = vsyncpa [#allocation3], 0
    %13 = vsyncpa [#allocation6], 0
    %14 = vsyncpa [#allocation9], 0
    %15 = vsyncpa [#allocation4], 0
    // Predicated region
    $region2: #{discriminator_forward.1} parent=1 // pred_check
      _
    $region3: #{discriminator_forward.1} parent=1 // pred_check_branch
      %17 = sbr.rel (0) target = $region5
    $region4: #{discriminator_forward.1} parent=1 // pred_region
      _
    $region5: #{discriminator_forward.1} parent=1 // pred_fallthru
      _
    // Predicated region
    $region6: #{discriminator_forward.1} parent=1 // pred_check
      _
    $region7: #{discriminator_forward.1} parent=1 // pred_check_branch
      %19 = sbr.rel (0) target = $region9
    $region8: #{discriminator_forward.1} parent=1 // pred_region
      %s21 = ssub.s32 65536, 65536
      %22 = vsyncadd [#allocation3], %s21
      %s23 = sshll.u32 [#allocation2], 4
      %s24 = int_to_ptr.vmem [resolvable:$true] %s23
      %29 = dma.hbm_to_vmem [thread:$0]  %s1, 65536, %s24, [#allocation3], 256, 256, 16
    $region9: #{discriminator_forward.1} parent=1 // pred_fallthru
      _
    // Predicated region
    $region10: #{discriminator_forward.1} parent=1 // pred_check
      _
    $region11: #{discriminator_forward.1} parent=1 // pred_check_branch
      %31 = sbr.rel (0) target = $region13
    $region12: #{discriminator_forward.1} parent=1 // pred_region
      %s33 = ssub.s32 64, 64
      %34 = vsyncadd [#allocation6], %s33
      %s36 = sshll.u32 [#allocation5], 4
      %s37 = int_to_ptr.vmem [resolvable:$true] %s36
      %39 = dma.hbm_to_vmem [thread:$0]  %s2, 64, %s37, [#allocation6]
    $region13: #{discriminator_forward.1} parent=1 // pred_fallthru
      _
    // Predicated region
    $region14: #{discriminator_forward.1} parent=1 // pred_check
      _
    $region15: #{discriminator_forward.1} parent=1 // pred_check_branch
      %41 = sbr.rel (0) target = $region17
    $region16: #{discriminator_forward.1} parent=1 // pred_region
      _
    $region17: #{discriminator_forward.1} parent=1 // pred_fallthru
      _
    // Predicated region
    $region18: #{discriminator_forward.1} parent=1 // pred_check
      _
    $region19: #{discriminator_forward.1} parent=1 // pred_check_branch
      %43 = sbr.rel (0) target = $region21
    $region20: #{discriminator_forward.1} parent=1 // pred_region
      %s45 = ssub.s32 64, 64
      %46 = vsyncadd [#allocation6], %s45
      %s48 = sshll.u32 [#allocation7], 4
      %s49 = int_to_ptr.vmem [resolvable:$true] %s48
      %51 = dma.hbm_to_vmem [thread:$0]  %s4, 64, %s49, [#allocation6]
    $region21: #{discriminator_forward.1} parent=1 // pred_fallthru
      _
    // Predicated region
    $region22: #{discriminator_forward.1} parent=1 // pred_check
      _
    $region23: #{discriminator_forward.1} parent=1 // pred_check_branch
      %53 = sbr.rel (0) target = $region25
    $region24: #{discriminator_forward.1} parent=1 // pred_region
      _
    $region25: #{discriminator_forward.1} parent=1 // pred_fallthru
      _
    // Predicated region
    $region26: #{discriminator_forward.1} parent=1 // pred_check
      _
    $region27: #{discriminator_forward.1} parent=1 // pred_check_branch
      %55 = sbr.rel (0) target = $region29
    $region28: #{discriminator_forward.1} parent=1 // pred_region
      %s57 = ssub.s32 16, 16
      %58 = vsyncadd [#allocation9], %s57
      %s60 = sshll.u32 [#allocation8], 4
      %s61 = int_to_ptr.vmem [resolvable:$true] %s60
      %63 = dma.hbm_to_vmem [thread:$0]  %s6, 16, %s61, [#allocation9]
    $region29: #{discriminator_forward.1} parent=1 // pred_fallthru
      _
    // Predicated region
    $region30: #{discriminator_forward.1} parent=1 // pred_check
      _
    $region31: #{discriminator_forward.1} parent=1 // pred_check_branch
      %65 = sbr.rel (0) target = $region33
    $region32: #{discriminator_forward.1} parent=1 // pred_region
      %66 = dma.done [#allocation3], 65536
    $region33: #{discriminator_forward.1} parent=1 // pred_fallthru
      _
    // Predicated region
    $region34: #{discriminator_forward.1} parent=1 // pred_check
      _
    $region35: #{discriminator_forward.1} parent=1 // pred_check_branch
      %68 = sbr.rel (0) target = $region37
    $region36: #{discriminator_forward.1} parent=1 // pred_region
      %69 = dma.done [#allocation6], 64
    $region37: #{discriminator_forward.1} parent=1 // pred_fallthru
      _
    // Predicated region
    $region38: #{discriminator_forward.1} parent=1 // pred_check
      _
    $region39: #{discriminator_forward.1} parent=1 // pred_check_branch
      %71 = sbr.rel (0) target = $region41
    $region40: #{discriminator_forward.1} parent=1 // pred_region
      %72 = dma.done [#allocation6], 64
    $region41: #{discriminator_forward.1} parent=1 // pred_fallthru
      _
    // Predicated region
    $region42: #{discriminator_forward.1} parent=1 // pred_check
      _
    $region43: #{discriminator_forward.1} parent=1 // pred_check_branch
      %74 = sbr.rel (0) target = $region45
    $region44: #{discriminator_forward.1} parent=1 // pred_region
      %75 = dma.done [#allocation9], 16
    $region45: #{discriminator_forward.1} parent=1 // pred_fallthru
      _
    %v77 = vld [vmem:[%s0] sm:$0xff]
    %v78 = vld [vmem:[%s0 + $0x8] sm:$0xff]
    %v79 = vld [vmem:[%s0 + $0x10] sm:$0xff]
    %v80 = vld [vmem:[%s0 + $0x18] sm:$0xff]
    %v81 = vld [vmem:[%s0 + $0x20] sm:$0xff]
    %v82 = vld [vmem:[%s0 + $0x28] sm:$0xff]
    %v83 = vld [vmem:[%s0 + $0x30] sm:$0xff]
    %v84 = vld [vmem:[%s0 + $0x38] sm:$0xff]
    %v85 = vld [vmem:[%s0 + $0x40] sm:$0xff]
    %v86 = vld [vmem:[%s0 + $0x48] sm:$0xff]
    %v87 = vld [vmem:[%s0 + $0x50] sm:$0xff]
    %v88 = vld [vmem:[%s0 + $0x58] sm:$0xff]
    %v89 = vld [vmem:[%s0 + $0x60] sm:$0xff]
    %v90 = vld [vmem:[%s0 + $0x68] sm:$0xff]
    %v91 = vld [vmem:[%s0 + $0x70] sm:$0xff]
    %v92 = vld [vmem:[%s0 + $0x78] sm:$0xff]
    %v93 = vld [vmem:[%s0 + $0x80] sm:$0xff]
    %v94 = vld [vmem:[%s0 + $0x88] sm:$0xff]
    %v95 = vld [vmem:[%s0 + $0x90] sm:$0xff]
    %v96 = vld [vmem:[%s0 + $0x98] sm:$0xff]
    %v97 = vld [vmem:[%s0 + $0xa0] sm:$0xff]
    %v98 = vld [vmem:[%s0 + $0xa8] sm:$0xff]
    %v99 = vld [vmem:[%s0 + $0xb0] sm:$0xff]
    %v100 = vld [vmem:[%s0 + $0xb8] sm:$0xff]
    %v101 = vld [vmem:[%s0 + $0xc0] sm:$0xff]
    %v102 = vld [vmem:[%s0 + $0xc8] sm:$0xff]
    %v103 = vld [vmem:[%s0 + $0xd0] sm:$0xff]
    %v104 = vld [vmem:[%s0 + $0xd8] sm:$0xff]
    %v105 = vld [vmem:[%s0 + $0xe0] sm:$0xff]
    %v106 = vld [vmem:[%s0 + $0xe8] sm:$0xff]
    %v107 = vld [vmem:[%s0 + $0xf0] sm:$0xff]
    %v108 = vld [vmem:[%s0 + $0xf8] sm:$0xff]
    %v109 = vld [vmem:[#allocation2] sm:$0xff]
    %v110 = vld [vmem:[#allocation2 + $0x8] sm:$0xff]
    %v111 = vld [vmem:[#allocation2 + $0x10] sm:$0xff]
    %v112 = vld [vmem:[#allocation2 + $0x18] sm:$0xff]
    %v113 = vld [vmem:[#allocation2 + $0x20] sm:$0xff]
    %v114 = vld [vmem:[#allocation2 + $0x28] sm:$0xff]
    %v115 = vld [vmem:[#allocation2 + $0x30] sm:$0xff]
    %v116 = vld [vmem:[#allocation2 + $0x38] sm:$0xff]
    %v117 = vld [vmem:[#allocation2 + $0x40] sm:$0xff]
    %v118 = vld [vmem:[#allocation2 + $0x48] sm:$0xff]
    %v119 = vld [vmem:[#allocation2 + $0x50] sm:$0xff]
    %v120 = vld [vmem:[#allocation2 + $0x58] sm:$0xff]
    %v121 = vld [vmem:[#allocation2 + $0x60] sm:$0xff]
    %v122 = vld [vmem:[#allocation2 + $0x68] sm:$0xff]
    %v123 = vld [vmem:[#allocation2 + $0x70] sm:$0xff]
    %v124 = vld [vmem:[#allocation2 + $0x78] sm:$0xff]
    %v125 = vld [vmem:[#allocation2 + $0x80] sm:$0xff]
    %v126 = vld [vmem:[#allocation2 + $0x88] sm:$0xff]
    %v127 = vld [vmem:[#allocation2 + $0x90] sm:$0xff]
    %v128 = vld [vmem:[#allocation2 + $0x98] sm:$0xff]
    %v129 = vld [vmem:[#allocation2 + $0xa0] sm:$0xff]
    %v130 = vld [vmem:[#allocation2 + $0xa8] sm:$0xff]
    %v131 = vld [vmem:[#allocation2 + $0xb0] sm:$0xff]
    %v132 = vld [vmem:[#allocation2 + $0xb8] sm:$0xff]
    %v133 = vld [vmem:[#allocation2 + $0xc0] sm:$0xff]
    %v134 = vld [vmem:[#allocation2 + $0xc8] sm:$0xff]
    %v135 = vld [vmem:[#allocation2 + $0xd0] sm:$0xff]
    %v136 = vld [vmem:[#allocation2 + $0xd8] sm:$0xff]
    %v137 = vld [vmem:[#allocation2 + $0xe0] sm:$0xff]
    %v138 = vld [vmem:[#allocation2 + $0xe8] sm:$0xff]
    %v139 = vld [vmem:[#allocation2 + $0xf0] sm:$0xff]
    %v140 = vld [vmem:[#allocation2 + $0xf8] sm:$0xff]
    %v141 = vld [vmem:[#allocation2 + $0x100] sm:$0xff]
    %v142 = vld [vmem:[#allocation2 + $0x108] sm:$0xff]
    %v143 = vld [vmem:[#allocation2 + $0x110] sm:$0xff]
    %v144 = vld [vmem:[#allocation2 + $0x118] sm:$0xff]
    %v145 = vld [vmem:[#allocation2 + $0x120] sm:$0xff]
    %v146 = vld [vmem:[#allocation2 + $0x128] sm:$0xff]
    %v147 = vld [vmem:[#allocation2 + $0x130] sm:$0xff]
    %v148 = vld [vmem:[#allocation2 + $0x138] sm:$0xff]
    %v149 = vld [vmem:[#allocation2 + $0x140] sm:$0xff]
    %v150 = vld [vmem:[#allocation2 + $0x148] sm:$0xff]
    %v151 = vld [vmem:[#allocation2 + $0x150] sm:$0xff]
    %v152 = vld [vmem:[#allocation2 + $0x158] sm:$0xff]
    %v153 = vld [vmem:[#allocation2 + $0x160] sm:$0xff]
    %v154 = vld [vmem:[#allocation2 + $0x168] sm:$0xff]
    %v155 = vld [vmem:[#allocation2 + $0x170] sm:$0xff]
    %v156 = vld [vmem:[#allocation2 + $0x178] sm:$0xff]
    %v157 = vld [vmem:[#allocation2 + $0x180] sm:$0xff]
    %v158 = vld [vmem:[#allocation2 + $0x188] sm:$0xff]
    %v159 = vld [vmem:[#allocation2 + $0x190] sm:$0xff]
    %v160 = vld [vmem:[#allocation2 + $0x198] sm:$0xff]
    %v161 = vld [vmem:[#allocation2 + $0x1a0] sm:$0xff]
    %v162 = vld [vmem:[#allocation2 + $0x1a8] sm:$0xff]
    %v163 = vld [vmem:[#allocation2 + $0x1b0] sm:$0xff]
    %v164 = vld [vmem:[#allocation2 + $0x1b8] sm:$0xff]
    %v165 = vld [vmem:[#allocation2 + $0x1c0] sm:$0xff]
    %v166 = vld [vmem:[#allocation2 + $0x1c8] sm:$0xff]
    %v167 = vld [vmem:[#allocation2 + $0x1d0] sm:$0xff]
    %v168 = vld [vmem:[#allocation2 + $0x1d8] sm:$0xff]
    %v169 = vld [vmem:[#allocation2 + $0x1e0] sm:$0xff]
    %v170 = vld [vmem:[#allocation2 + $0x1e8] sm:$0xff]
    %v171 = vld [vmem:[#allocation2 + $0x1f0] sm:$0xff]
    %v172 = vld [vmem:[#allocation2 + $0x1f8] sm:$0xff]
    %v173 = vld [vmem:[#allocation2 + $0x200] sm:$0xff]
    %v174 = vld [vmem:[#allocation2 + $0x208] sm:$0xff]
    %v175 = vld [vmem:[#allocation2 + $0x210] sm:$0xff]
    %v176 = vld [vmem:[#allocation2 + $0x218] sm:$0xff]
    %v177 = vld [vmem:[#allocation2 + $0x220] sm:$0xff]
    %v178 = vld [vmem:[#allocation2 + $0x228] sm:$0xff]
    %v179 = vld [vmem:[#allocation2 + $0x230] sm:$0xff]
    %v180 = vld [vmem:[#allocation2 + $0x238] sm:$0xff]
    %v181 = vld [vmem:[#allocation2 + $0x240] sm:$0xff]
    %v182 = vld [vmem:[#allocation2 + $0x248] sm:$0xff]
    %v183 = vld [vmem:[#allocation2 + $0x250] sm:$0xff]
    %v184 = vld [vmem:[#allocation2 + $0x258] sm:$0xff]
    %v185 = vld [vmem:[#allocation2 + $0x260] sm:$0xff]
    %v186 = vld [vmem:[#allocation2 + $0x268] sm:$0xff]
    %v187 = vld [vmem:[#allocation2 + $0x270] sm:$0xff]
    %v188 = vld [vmem:[#allocation2 + $0x278] sm:$0xff]
    %v189 = vld [vmem:[#allocation2 + $0x280] sm:$0xff]
    %v190 = vld [vmem:[#allocation2 + $0x288] sm:$0xff]
    %v191 = vld [vmem:[#allocation2 + $0x290] sm:$0xff]
    %v192 = vld [vmem:[#allocation2 + $0x298] sm:$0xff]
    %v193 = vld [vmem:[#allocation2 + $0x2a0] sm:$0xff]
    %v194 = vld [vmem:[#allocation2 + $0x2a8] sm:$0xff]
    %v195 = vld [vmem:[#allocation2 + $0x2b0] sm:$0xff]
    %v196 = vld [vmem:[#allocation2 + $0x2b8] sm:$0xff]
    %v197 = vld [vmem:[#allocation2 + $0x2c0] sm:$0xff]
    %v198 = vld [vmem:[#allocation2 + $0x2c8] sm:$0xff]
    %v199 = vld [vmem:[#allocation2 + $0x2d0] sm:$0xff]
    %v200 = vld [vmem:[#allocation2 + $0x2d8] sm:$0xff]
    %v201 = vld [vmem:[#allocation2 + $0x2e0] sm:$0xff]
    %v202 = vld [vmem:[#allocation2 + $0x2e8] sm:$0xff]
    %v203 = vld [vmem:[#allocation2 + $0x2f0] sm:$0xff]
    %v204 = vld [vmem:[#allocation2 + $0x2f8] sm:$0xff]
    %v205 = vld [vmem:[#allocation2 + $0x300] sm:$0xff]
    %v206 = vld [vmem:[#allocation2 + $0x308] sm:$0xff]
    %v207 = vld [vmem:[#allocation2 + $0x310] sm:$0xff]
    %v208 = vld [vmem:[#allocation2 + $0x318] sm:$0xff]
    %v209 = vld [vmem:[#allocation2 + $0x320] sm:$0xff]
    %v210 = vld [vmem:[#allocation2 + $0x328] sm:$0xff]
    %v211 = vld [vmem:[#allocation2 + $0x330] sm:$0xff]
    %v212 = vld [vmem:[#allocation2 + $0x338] sm:$0xff]
    %v213 = vld [vmem:[#allocation2 + $0x340] sm:$0xff]
    %v214 = vld [vmem:[#allocation2 + $0x348] sm:$0xff]
    %v215 = vld [vmem:[#allocation2 + $0x350] sm:$0xff]
    %v216 = vld [vmem:[#allocation2 + $0x358] sm:$0xff]
    %v217 = vld [vmem:[#allocation2 + $0x360] sm:$0xff]
    %v218 = vld [vmem:[#allocation2 + $0x368] sm:$0xff]
    %v219 = vld [vmem:[#allocation2 + $0x370] sm:$0xff]
    %v220 = vld [vmem:[#allocation2 + $0x378] sm:$0xff]
    %v221 = vld [vmem:[#allocation2 + $0x380] sm:$0xff]
    %v222 = vld [vmem:[#allocation2 + $0x388] sm:$0xff]
    %v223 = vld [vmem:[#allocation2 + $0x390] sm:$0xff]
    %v224 = vld [vmem:[#allocation2 + $0x398] sm:$0xff]
    %v225 = vld [vmem:[#allocation2 + $0x3a0] sm:$0xff]
    %v226 = vld [vmem:[#allocation2 + $0x3a8] sm:$0xff]
    %v227 = vld [vmem:[#allocation2 + $0x3b0] sm:$0xff]
    %v228 = vld [vmem:[#allocation2 + $0x3b8] sm:$0xff]
    %v229 = vld [vmem:[#allocation2 + $0x3c0] sm:$0xff]
    %v230 = vld [vmem:[#allocation2 + $0x3c8] sm:$0xff]
    %v231 = vld [vmem:[#allocation2 + $0x3d0] sm:$0xff]
    %v232 = vld [vmem:[#allocation2 + $0x3d8] sm:$0xff]
    %v233 = vld [vmem:[#allocation2 + $0x3e0] sm:$0xff]
    %v234 = vld [vmem:[#allocation2 + $0x3e8] sm:$0xff]
    %v235 = vld [vmem:[#allocation2 + $0x3f0] sm:$0xff]
    %v236 = vld [vmem:[#allocation2 + $0x3f8] sm:$0xff]
    %v237 = vld [vmem:[#allocation2 + $0x400] sm:$0xff]
    %v238 = vld [vmem:[#allocation2 + $0x408] sm:$0xff]
    %v239 = vld [vmem:[#allocation2 + $0x410] sm:$0xff]
    %v240 = vld [vmem:[#allocation2 + $0x418] sm:$0xff]
    %v241 = vld [vmem:[#allocation2 + $0x420] sm:$0xff]
    %v242 = vld [vmem:[#allocation2 + $0x428] sm:$0xff]
    %v243 = vld [vmem:[#allocation2 + $0x430] sm:$0xff]
    %v244 = vld [vmem:[#allocation2 + $0x438] sm:$0xff]
    %v245 = vld [vmem:[#allocation2 + $0x440] sm:$0xff]
    %v246 = vld [vmem:[#allocation2 + $0x448] sm:$0xff]
    %v247 = vld [vmem:[#allocation2 + $0x450] sm:$0xff]
    %v248 = vld [vmem:[#allocation2 + $0x458] sm:$0xff]
    %v249 = vld [vmem:[#allocation2 + $0x460] sm:$0xff]
    %v250 = vld [vmem:[#allocation2 + $0x468] sm:$0xff]
    %v251 = vld [vmem:[#allocation2 + $0x470] sm:$0xff]
    %v252 = vld [vmem:[#allocation2 + $0x478] sm:$0xff]
    %v253 = vld [vmem:[#allocation2 + $0x480] sm:$0xff]
    %v254 = vld [vmem:[#allocation2 + $0x488] sm:$0xff]
    %v255 = vld [vmem:[#allocation2 + $0x490] sm:$0xff]
    %v256 = vld [vmem:[#allocation2 + $0x498] sm:$0xff]
    %v257 = vld [vmem:[#allocation2 + $0x4a0] sm:$0xff]
    %v258 = vld [vmem:[#allocation2 + $0x4a8] sm:$0xff]
    %v259 = vld [vmem:[#allocation2 + $0x4b0] sm:$0xff]
    %v260 = vld [vmem:[#allocation2 + $0x4b8] sm:$0xff]
    %v261 = vld [vmem:[#allocation2 + $0x4c0] sm:$0xff]
    %v262 = vld [vmem:[#allocation2 + $0x4c8] sm:$0xff]
    %v263 = vld [vmem:[#allocation2 + $0x4d0] sm:$0xff]
    %v264 = vld [vmem:[#allocation2 + $0x4d8] sm:$0xff]
    %v265 = vld [vmem:[#allocation2 + $0x4e0] sm:$0xff]
    %v266 = vld [vmem:[#allocation2 + $0x4e8] sm:$0xff]
    %v267 = vld [vmem:[#allocation2 + $0x4f0] sm:$0xff]
    %v268 = vld [vmem:[#allocation2 + $0x4f8] sm:$0xff]
    %v269 = vld [vmem:[#allocation2 + $0x500] sm:$0xff]
    %v270 = vld [vmem:[#allocation2 + $0x508] sm:$0xff]
    %v271 = vld [vmem:[#allocation2 + $0x510] sm:$0xff]
    %v272 = vld [vmem:[#allocation2 + $0x518] sm:$0xff]
    %v273 = vld [vmem:[#allocation2 + $0x520] sm:$0xff]
    %v274 = vld [vmem:[#allocation2 + $0x528] sm:$0xff]
    %v275 = vld [vmem:[#allocation2 + $0x530] sm:$0xff]
    %v276 = vld [vmem:[#allocation2 + $0x538] sm:$0xff]
    %v277 = vld [vmem:[#allocation2 + $0x540] sm:$0xff]
    %v278 = vld [vmem:[#allocation2 + $0x548] sm:$0xff]
    %v279 = vld [vmem:[#allocation2 + $0x550] sm:$0xff]
    %v280 = vld [vmem:[#allocation2 + $0x558] sm:$0xff]
    %v281 = vld [vmem:[#allocation2 + $0x560] sm:$0xff]
    %v282 = vld [vmem:[#allocation2 + $0x568] sm:$0xff]
    %v283 = vld [vmem:[#allocation2 + $0x570] sm:$0xff]
    %v284 = vld [vmem:[#allocation2 + $0x578] sm:$0xff]
    %v285 = vld [vmem:[#allocation2 + $0x580] sm:$0xff]
    %v286 = vld [vmem:[#allocation2 + $0x588] sm:$0xff]
    %v287 = vld [vmem:[#allocation2 + $0x590] sm:$0xff]
    %v288 = vld [vmem:[#allocation2 + $0x598] sm:$0xff]
    %v289 = vld [vmem:[#allocation2 + $0x5a0] sm:$0xff]
    %v290 = vld [vmem:[#allocation2 + $0x5a8] sm:$0xff]
    %v291 = vld [vmem:[#allocation2 + $0x5b0] sm:$0xff]
    %v292 = vld [vmem:[#allocation2 + $0x5b8] sm:$0xff]
    %v293 = vld [vmem:[#allocation2 + $0x5c0] sm:$0xff]
    %v294 = vld [vmem:[#allocation2 + $0x5c8] sm:$0xff]
    %v295 = vld [vmem:[#allocation2 + $0x5d0] sm:$0xff]
    %v296 = vld [vmem:[#allocation2 + $0x5d8] sm:$0xff]
    %v297 = vld [vmem:[#allocation2 + $0x5e0] sm:$0xff]
    %v298 = vld [vmem:[#allocation2 + $0x5e8] sm:$0xff]
    %v299 = vld [vmem:[#allocation2 + $0x5f0] sm:$0xff]
    %v300 = vld [vmem:[#allocation2 + $0x5f8] sm:$0xff]
    %v301 = vld [vmem:[#allocation2 + $0x600] sm:$0xff]
    %v302 = vld [vmem:[#allocation2 + $0x608] sm:$0xff]
    %v303 = vld [vmem:[#allocation2 + $0x610] sm:$0xff]
    %v304 = vld [vmem:[#allocation2 + $0x618] sm:$0xff]
    %v305 = vld [vmem:[#allocation2 + $0x620] sm:$0xff]
    %v306 = vld [vmem:[#allocation2 + $0x628] sm:$0xff]
    %v307 = vld [vmem:[#allocation2 + $0x630] sm:$0xff]
    %v308 = vld [vmem:[#allocation2 + $0x638] sm:$0xff]
    %v309 = vld [vmem:[#allocation2 + $0x640] sm:$0xff]
    %v310 = vld [vmem:[#allocation2 + $0x648] sm:$0xff]
    %v311 = vld [vmem:[#allocation2 + $0x650] sm:$0xff]
    %v312 = vld [vmem:[#allocation2 + $0x658] sm:$0xff]
    %v313 = vld [vmem:[#allocation2 + $0x660] sm:$0xff]
    %v314 = vld [vmem:[#allocation2 + $0x668] sm:$0xff]
    %v315 = vld [vmem:[#allocation2 + $0x670] sm:$0xff]
    %v316 = vld [vmem:[#allocation2 + $0x678] sm:$0xff]
    %v317 = vld [vmem:[#allocation2 + $0x680] sm:$0xff]
    %v318 = vld [vmem:[#allocation2 + $0x688] sm:$0xff]
    %v319 = vld [vmem:[#allocation2 + $0x690] sm:$0xff]
    %v320 = vld [vmem:[#allocation2 + $0x698] sm:$0xff]
    %v321 = vld [vmem:[#allocation2 + $0x6a0] sm:$0xff]
    %v322 = vld [vmem:[#allocation2 + $0x6a8] sm:$0xff]
    %v323 = vld [vmem:[#allocation2 + $0x6b0] sm:$0xff]
    %v324 = vld [vmem:[#allocation2 + $0x6b8] sm:$0xff]
    %v325 = vld [vmem:[#allocation2 + $0x6c0] sm:$0xff]
    %v326 = vld [vmem:[#allocation2 + $0x6c8] sm:$0xff]
    %v327 = vld [vmem:[#allocation2 + $0x6d0] sm:$0xff]
    %v328 = vld [vmem:[#allocation2 + $0x6d8] sm:$0xff]
    %v329 = vld [vmem:[#allocation2 + $0x6e0] sm:$0xff]
    %v330 = vld [vmem:[#allocation2 + $0x6e8] sm:$0xff]
    %v331 = vld [vmem:[#allocation2 + $0x6f0] sm:$0xff]
    %v332 = vld [vmem:[#allocation2 + $0x6f8] sm:$0xff]
    %v333 = vld [vmem:[#allocation2 + $0x700] sm:$0xff]
    %v334 = vld [vmem:[#allocation2 + $0x708] sm:$0xff]
    %v335 = vld [vmem:[#allocation2 + $0x710] sm:$0xff]
    %v336 = vld [vmem:[#allocation2 + $0x718] sm:$0xff]
    %v337 = vld [vmem:[#allocation2 + $0x720] sm:$0xff]
    %v338 = vld [vmem:[#allocation2 + $0x728] sm:$0xff]
    %v339 = vld [vmem:[#allocation2 + $0x730] sm:$0xff]
    %v340 = vld [vmem:[#allocation2 + $0x738] sm:$0xff]
    %v341 = vld [vmem:[#allocation2 + $0x740] sm:$0xff]
    %v342 = vld [vmem:[#allocation2 + $0x748] sm:$0xff]
    %v343 = vld [vmem:[#allocation2 + $0x750] sm:$0xff]
    %v344 = vld [vmem:[#allocation2 + $0x758] sm:$0xff]
    %v345 = vld [vmem:[#allocation2 + $0x760] sm:$0xff]
    %v346 = vld [vmem:[#allocation2 + $0x768] sm:$0xff]
    %v347 = vld [vmem:[#allocation2 + $0x770] sm:$0xff]
    %v348 = vld [vmem:[#allocation2 + $0x778] sm:$0xff]
    %v349 = vld [vmem:[#allocation2 + $0x780] sm:$0xff]
    %v350 = vld [vmem:[#allocation2 + $0x788] sm:$0xff]
    %v351 = vld [vmem:[#allocation2 + $0x790] sm:$0xff]
    %v352 = vld [vmem:[#allocation2 + $0x798] sm:$0xff]
    %v353 = vld [vmem:[#allocation2 + $0x7a0] sm:$0xff]
    %v354 = vld [vmem:[#allocation2 + $0x7a8] sm:$0xff]
    %v355 = vld [vmem:[#allocation2 + $0x7b0] sm:$0xff]
    %v356 = vld [vmem:[#allocation2 + $0x7b8] sm:$0xff]
    %v357 = vld [vmem:[#allocation2 + $0x7c0] sm:$0xff]
    %v358 = vld [vmem:[#allocation2 + $0x7c8] sm:$0xff]
    %v359 = vld [vmem:[#allocation2 + $0x7d0] sm:$0xff]
    %v360 = vld [vmem:[#allocation2 + $0x7d8] sm:$0xff]
    %v361 = vld [vmem:[#allocation2 + $0x7e0] sm:$0xff]
    %v362 = vld [vmem:[#allocation2 + $0x7e8] sm:$0xff]
    %v363 = vld [vmem:[#allocation2 + $0x7f0] sm:$0xff]
    %v364 = vld [vmem:[#allocation2 + $0x7f8] sm:$0xff]
    %v365 = vld [vmem:[#allocation2 + $0x800] sm:$0xff]
    %v366 = vld [vmem:[#allocation2 + $0x808] sm:$0xff]
    %v367 = vld [vmem:[#allocation2 + $0x810] sm:$0xff]
    %v368 = vld [vmem:[#allocation2 + $0x818] sm:$0xff]
    %v369 = vld [vmem:[#allocation2 + $0x820] sm:$0xff]
    %v370 = vld [vmem:[#allocation2 + $0x828] sm:$0xff]
    %v371 = vld [vmem:[#allocation2 + $0x830] sm:$0xff]
    %v372 = vld [vmem:[#allocation2 + $0x838] sm:$0xff]
    %v373 = vld [vmem:[#allocation2 + $0x840] sm:$0xff]
    %v374 = vld [vmem:[#allocation2 + $0x848] sm:$0xff]
    %v375 = vld [vmem:[#allocation2 + $0x850] sm:$0xff]
    %v376 = vld [vmem:[#allocation2 + $0x858] sm:$0xff]
    %v377 = vld [vmem:[#allocation2 + $0x860] sm:$0xff]
    %v378 = vld [vmem:[#allocation2 + $0x868] sm:$0xff]
    %v379 = vld [vmem:[#allocation2 + $0x870] sm:$0xff]
    %v380 = vld [vmem:[#allocation2 + $0x878] sm:$0xff]
    %v381 = vld [vmem:[#allocation2 + $0x880] sm:$0xff]
    %v382 = vld [vmem:[#allocation2 + $0x888] sm:$0xff]
    %v383 = vld [vmem:[#allocation2 + $0x890] sm:$0xff]
    %v384 = vld [vmem:[#allocation2 + $0x898] sm:$0xff]
    %v385 = vld [vmem:[#allocation2 + $0x8a0] sm:$0xff]
    %v386 = vld [vmem:[#allocation2 + $0x8a8] sm:$0xff]
    %v387 = vld [vmem:[#allocation2 + $0x8b0] sm:$0xff]
    %v388 = vld [vmem:[#allocation2 + $0x8b8] sm:$0xff]
    %v389 = vld [vmem:[#allocation2 + $0x8c0] sm:$0xff]
    %v390 = vld [vmem:[#allocation2 + $0x8c8] sm:$0xff]
    %v391 = vld [vmem:[#allocation2 + $0x8d0] sm:$0xff]
    %v392 = vld [vmem:[#allocation2 + $0x8d8] sm:$0xff]
    %v393 = vld [vmem:[#allocation2 + $0x8e0] sm:$0xff]
    %v394 = vld [vmem:[#allocation2 + $0x8e8] sm:$0xff]
    %v395 = vld [vmem:[#allocation2 + $0x8f0] sm:$0xff]
    %v396 = vld [vmem:[#allocation2 + $0x8f8] sm:$0xff]
    %v397 = vld [vmem:[#allocation2 + $0x900] sm:$0xff]
    %v398 = vld [vmem:[#allocation2 + $0x908] sm:$0xff]
    %v399 = vld [vmem:[#allocation2 + $0x910] sm:$0xff]
    %v400 = vld [vmem:[#allocation2 + $0x918] sm:$0xff]
    %v401 = vld [vmem:[#allocation2 + $0x920] sm:$0xff]
    %v402 = vld [vmem:[#allocation2 + $0x928] sm:$0xff]
    %v403 = vld [vmem:[#allocation2 + $0x930] sm:$0xff]
    %v404 = vld [vmem:[#allocation2 + $0x938] sm:$0xff]
    %v405 = vld [vmem:[#allocation2 + $0x940] sm:$0xff]
    %v406 = vld [vmem:[#allocation2 + $0x948] sm:$0xff]
    %v407 = vld [vmem:[#allocation2 + $0x950] sm:$0xff]
    %v408 = vld [vmem:[#allocation2 + $0x958] sm:$0xff]
    %v409 = vld [vmem:[#allocation2 + $0x960] sm:$0xff]
    %v410 = vld [vmem:[#allocation2 + $0x968] sm:$0xff]
    %v411 = vld [vmem:[#allocation2 + $0x970] sm:$0xff]
    %v412 = vld [vmem:[#allocation2 + $0x978] sm:$0xff]
    %v413 = vld [vmem:[#allocation2 + $0x980] sm:$0xff]
    %v414 = vld [vmem:[#allocation2 + $0x988] sm:$0xff]
    %v415 = vld [vmem:[#allocation2 + $0x990] sm:$0xff]
    %v416 = vld [vmem:[#allocation2 + $0x998] sm:$0xff]
    %v417 = vld [vmem:[#allocation2 + $0x9a0] sm:$0xff]
    %v418 = vld [vmem:[#allocation2 + $0x9a8] sm:$0xff]
    %v419 = vld [vmem:[#allocation2 + $0x9b0] sm:$0xff]
    %v420 = vld [vmem:[#allocation2 + $0x9b8] sm:$0xff]
    %v421 = vld [vmem:[#allocation2 + $0x9c0] sm:$0xff]
    %v422 = vld [vmem:[#allocation2 + $0x9c8] sm:$0xff]
    %v423 = vld [vmem:[#allocation2 + $0x9d0] sm:$0xff]
    %v424 = vld [vmem:[#allocation2 + $0x9d8] sm:$0xff]
    %v425 = vld [vmem:[#allocation2 + $0x9e0] sm:$0xff]
    %v426 = vld [vmem:[#allocation2 + $0x9e8] sm:$0xff]
    %v427 = vld [vmem:[#allocation2 + $0x9f0] sm:$0xff]
    %v428 = vld [vmem:[#allocation2 + $0x9f8] sm:$0xff]
    %v429 = vld [vmem:[#allocation2 + $0xa00] sm:$0xff]
    %v430 = vld [vmem:[#allocation2 + $0xa08] sm:$0xff]
    %v431 = vld [vmem:[#allocation2 + $0xa10] sm:$0xff]
    %v432 = vld [vmem:[#allocation2 + $0xa18] sm:$0xff]
    %v433 = vld [vmem:[#allocation2 + $0xa20] sm:$0xff]
    %v434 = vld [vmem:[#allocation2 + $0xa28] sm:$0xff]
    %v435 = vld [vmem:[#allocation2 + $0xa30] sm:$0xff]
    %v436 = vld [vmem:[#allocation2 + $0xa38] sm:$0xff]
    %v437 = vld [vmem:[#allocation2 + $0xa40] sm:$0xff]
    %v438 = vld [vmem:[#allocation2 + $0xa48] sm:$0xff]
    %v439 = vld [vmem:[#allocation2 + $0xa50] sm:$0xff]
    %v440 = vld [vmem:[#allocation2 + $0xa58] sm:$0xff]
    %v441 = vld [vmem:[#allocation2 + $0xa60] sm:$0xff]
    %v442 = vld [vmem:[#allocation2 + $0xa68] sm:$0xff]
    %v443 = vld [vmem:[#allocation2 + $0xa70] sm:$0xff]
    %v444 = vld [vmem:[#allocation2 + $0xa78] sm:$0xff]
    %v445 = vld [vmem:[#allocation2 + $0xa80] sm:$0xff]
    %v446 = vld [vmem:[#allocation2 + $0xa88] sm:$0xff]
    %v447 = vld [vmem:[#allocation2 + $0xa90] sm:$0xff]
    %v448 = vld [vmem:[#allocation2 + $0xa98] sm:$0xff]
    %v449 = vld [vmem:[#allocation2 + $0xaa0] sm:$0xff]
    %v450 = vld [vmem:[#allocation2 + $0xaa8] sm:$0xff]
    %v451 = vld [vmem:[#allocation2 + $0xab0] sm:$0xff]
    %v452 = vld [vmem:[#allocation2 + $0xab8] sm:$0xff]
    %v453 = vld [vmem:[#allocation2 + $0xac0] sm:$0xff]
    %v454 = vld [vmem:[#allocation2 + $0xac8] sm:$0xff]
    %v455 = vld [vmem:[#allocation2 + $0xad0] sm:$0xff]
    %v456 = vld [vmem:[#allocation2 + $0xad8] sm:$0xff]
    %v457 = vld [vmem:[#allocation2 + $0xae0] sm:$0xff]
    %v458 = vld [vmem:[#allocation2 + $0xae8] sm:$0xff]
    %v459 = vld [vmem:[#allocation2 + $0xaf0] sm:$0xff]
    %v460 = vld [vmem:[#allocation2 + $0xaf8] sm:$0xff]
    %v461 = vld [vmem:[#allocation2 + $0xb00] sm:$0xff]
    %v462 = vld [vmem:[#allocation2 + $0xb08] sm:$0xff]
    %v463 = vld [vmem:[#allocation2 + $0xb10] sm:$0xff]
    %v464 = vld [vmem:[#allocation2 + $0xb18] sm:$0xff]
    %v465 = vld [vmem:[#allocation2 + $0xb20] sm:$0xff]
    %v466 = vld [vmem:[#allocation2 + $0xb28] sm:$0xff]
    %v467 = vld [vmem:[#allocation2 + $0xb30] sm:$0xff]
    %v468 = vld [vmem:[#allocation2 + $0xb38] sm:$0xff]
    %v469 = vld [vmem:[#allocation2 + $0xb40] sm:$0xff]
    %v470 = vld [vmem:[#allocation2 + $0xb48] sm:$0xff]
    %v471 = vld [vmem:[#allocation2 + $0xb50] sm:$0xff]
    %v472 = vld [vmem:[#allocation2 + $0xb58] sm:$0xff]
    %v473 = vld [vmem:[#allocation2 + $0xb60] sm:$0xff]
    %v474 = vld [vmem:[#allocation2 + $0xb68] sm:$0xff]
    %v475 = vld [vmem:[#allocation2 + $0xb70] sm:$0xff]
    %v476 = vld [vmem:[#allocation2 + $0xb78] sm:$0xff]
    %v477 = vld [vmem:[#allocation2 + $0xb80] sm:$0xff]
    %v478 = vld [vmem:[#allocation2 + $0xb88] sm:$0xff]
    %v479 = vld [vmem:[#allocation2 + $0xb90] sm:$0xff]
    %v480 = vld [vmem:[#allocation2 + $0xb98] sm:$0xff]
    %v481 = vld [vmem:[#allocation2 + $0xba0] sm:$0xff]
    %v482 = vld [vmem:[#allocation2 + $0xba8] sm:$0xff]
    %v483 = vld [vmem:[#allocation2 + $0xbb0] sm:$0xff]
    %v484 = vld [vmem:[#allocation2 + $0xbb8] sm:$0xff]
    %v485 = vld [vmem:[#allocation2 + $0xbc0] sm:$0xff]
    %v486 = vld [vmem:[#allocation2 + $0xbc8] sm:$0xff]
    %v487 = vld [vmem:[#allocation2 + $0xbd0] sm:$0xff]
    %v488 = vld [vmem:[#allocation2 + $0xbd8] sm:$0xff]
    %v489 = vld [vmem:[#allocation2 + $0xbe0] sm:$0xff]
    %v490 = vld [vmem:[#allocation2 + $0xbe8] sm:$0xff]
    %v491 = vld [vmem:[#allocation2 + $0xbf0] sm:$0xff]
    %v492 = vld [vmem:[#allocation2 + $0xbf8] sm:$0xff]
    %v493 = vld [vmem:[#allocation2 + $0xc00] sm:$0xff]
    %v494 = vld [vmem:[#allocation2 + $0xc08] sm:$0xff]
    %v495 = vld [vmem:[#allocation2 + $0xc10] sm:$0xff]
    %v496 = vld [vmem:[#allocation2 + $0xc18] sm:$0xff]
    %v497 = vld [vmem:[#allocation2 + $0xc20] sm:$0xff]
    %v498 = vld [vmem:[#allocation2 + $0xc28] sm:$0xff]
    %v499 = vld [vmem:[#allocation2 + $0xc30] sm:$0xff]
    %v500 = vld [vmem:[#allocation2 + $0xc38] sm:$0xff]
    %v501 = vld [vmem:[#allocation2 + $0xc40] sm:$0xff]
    %v502 = vld [vmem:[#allocation2 + $0xc48] sm:$0xff]
    %v503 = vld [vmem:[#allocation2 + $0xc50] sm:$0xff]
    %v504 = vld [vmem:[#allocation2 + $0xc58] sm:$0xff]
    %v505 = vld [vmem:[#allocation2 + $0xc60] sm:$0xff]
    %v506 = vld [vmem:[#allocation2 + $0xc68] sm:$0xff]
    %v507 = vld [vmem:[#allocation2 + $0xc70] sm:$0xff]
    %v508 = vld [vmem:[#allocation2 + $0xc78] sm:$0xff]
    %v509 = vld [vmem:[#allocation2 + $0xc80] sm:$0xff]
    %v510 = vld [vmem:[#allocation2 + $0xc88] sm:$0xff]
    %v511 = vld [vmem:[#allocation2 + $0xc90] sm:$0xff]
    %v512 = vld [vmem:[#allocation2 + $0xc98] sm:$0xff]
    %v513 = vld [vmem:[#allocation2 + $0xca0] sm:$0xff]
    %v514 = vld [vmem:[#allocation2 + $0xca8] sm:$0xff]
    %v515 = vld [vmem:[#allocation2 + $0xcb0] sm:$0xff]
    %v516 = vld [vmem:[#allocation2 + $0xcb8] sm:$0xff]
    %v517 = vld [vmem:[#allocation2 + $0xcc0] sm:$0xff]
    %v518 = vld [vmem:[#allocation2 + $0xcc8] sm:$0xff]
    %v519 = vld [vmem:[#allocation2 + $0xcd0] sm:$0xff]
    %v520 = vld [vmem:[#allocation2 + $0xcd8] sm:$0xff]
    %v521 = vld [vmem:[#allocation2 + $0xce0] sm:$0xff]
    %v522 = vld [vmem:[#allocation2 + $0xce8] sm:$0xff]
    %v523 = vld [vmem:[#allocation2 + $0xcf0] sm:$0xff]
    %v524 = vld [vmem:[#allocation2 + $0xcf8] sm:$0xff]
    %v525 = vld [vmem:[#allocation2 + $0xd00] sm:$0xff]
    %v526 = vld [vmem:[#allocation2 + $0xd08] sm:$0xff]
    %v527 = vld [vmem:[#allocation2 + $0xd10] sm:$0xff]
    %v528 = vld [vmem:[#allocation2 + $0xd18] sm:$0xff]
    %v529 = vld [vmem:[#allocation2 + $0xd20] sm:$0xff]
    %v530 = vld [vmem:[#allocation2 + $0xd28] sm:$0xff]
    %v531 = vld [vmem:[#allocation2 + $0xd30] sm:$0xff]
    %v532 = vld [vmem:[#allocation2 + $0xd38] sm:$0xff]
    %v533 = vld [vmem:[#allocation2 + $0xd40] sm:$0xff]
    %v534 = vld [vmem:[#allocation2 + $0xd48] sm:$0xff]
    %v535 = vld [vmem:[#allocation2 + $0xd50] sm:$0xff]
    %v536 = vld [vmem:[#allocation2 + $0xd58] sm:$0xff]
    %v537 = vld [vmem:[#allocation2 + $0xd60] sm:$0xff]
    %v538 = vld [vmem:[#allocation2 + $0xd68] sm:$0xff]
    %v539 = vld [vmem:[#allocation2 + $0xd70] sm:$0xff]
    %v540 = vld [vmem:[#allocation2 + $0xd78] sm:$0xff]
    %v541 = vld [vmem:[#allocation2 + $0xd80] sm:$0xff]
    %v542 = vld [vmem:[#allocation2 + $0xd88] sm:$0xff]
    %v543 = vld [vmem:[#allocation2 + $0xd90] sm:$0xff]
    %v544 = vld [vmem:[#allocation2 + $0xd98] sm:$0xff]
    %v545 = vld [vmem:[#allocation2 + $0xda0] sm:$0xff]
    %v546 = vld [vmem:[#allocation2 + $0xda8] sm:$0xff]
    %v547 = vld [vmem:[#allocation2 + $0xdb0] sm:$0xff]
    %v548 = vld [vmem:[#allocation2 + $0xdb8] sm:$0xff]
    %v549 = vld [vmem:[#allocation2 + $0xdc0] sm:$0xff]
    %v550 = vld [vmem:[#allocation2 + $0xdc8] sm:$0xff]
    %v551 = vld [vmem:[#allocation2 + $0xdd0] sm:$0xff]
    %v552 = vld [vmem:[#allocation2 + $0xdd8] sm:$0xff]
    %v553 = vld [vmem:[#allocation2 + $0xde0] sm:$0xff]
    %v554 = vld [vmem:[#allocation2 + $0xde8] sm:$0xff]
    %v555 = vld [vmem:[#allocation2 + $0xdf0] sm:$0xff]
    %v556 = vld [vmem:[#allocation2 + $0xdf8] sm:$0xff]
    %v557 = vld [vmem:[#allocation2 + $0xe00] sm:$0xff]
    %v558 = vld [vmem:[#allocation2 + $0xe08] sm:$0xff]
    %v559 = vld [vmem:[#allocation2 + $0xe10] sm:$0xff]
    %v560 = vld [vmem:[#allocation2 + $0xe18] sm:$0xff]
    %v561 = vld [vmem:[#allocation2 + $0xe20] sm:$0xff]
    %v562 = vld [vmem:[#allocation2 + $0xe28] sm:$0xff]
    %v563 = vld [vmem:[#allocation2 + $0xe30] sm:$0xff]
    %v564 = vld [vmem:[#allocation2 + $0xe38] sm:$0xff]
    %v565 = vld [vmem:[#allocation2 + $0xe40] sm:$0xff]
    %v566 = vld [vmem:[#allocation2 + $0xe48] sm:$0xff]
    %v567 = vld [vmem:[#allocation2 + $0xe50] sm:$0xff]
    %v568 = vld [vmem:[#allocation2 + $0xe58] sm:$0xff]
    %v569 = vld [vmem:[#allocation2 + $0xe60] sm:$0xff]
    %v570 = vld [vmem:[#allocation2 + $0xe68] sm:$0xff]
    %v571 = vld [vmem:[#allocation2 + $0xe70] sm:$0xff]
    %v572 = vld [vmem:[#allocation2 + $0xe78] sm:$0xff]
    %v573 = vld [vmem:[#allocation2 + $0xe80] sm:$0xff]
    %v574 = vld [vmem:[#allocation2 + $0xe88] sm:$0xff]
    %v575 = vld [vmem:[#allocation2 + $0xe90] sm:$0xff]
    %v576 = vld [vmem:[#allocation2 + $0xe98] sm:$0xff]
    %v577 = vld [vmem:[#allocation2 + $0xea0] sm:$0xff]
    %v578 = vld [vmem:[#allocation2 + $0xea8] sm:$0xff]
    %v579 = vld [vmem:[#allocation2 + $0xeb0] sm:$0xff]
    %v580 = vld [vmem:[#allocation2 + $0xeb8] sm:$0xff]
    %v581 = vld [vmem:[#allocation2 + $0xec0] sm:$0xff]
    %v582 = vld [vmem:[#allocation2 + $0xec8] sm:$0xff]
    %v583 = vld [vmem:[#allocation2 + $0xed0] sm:$0xff]
    %v584 = vld [vmem:[#allocation2 + $0xed8] sm:$0xff]
    %v585 = vld [vmem:[#allocation2 + $0xee0] sm:$0xff]
    %v586 = vld [vmem:[#allocation2 + $0xee8] sm:$0xff]
    %v587 = vld [vmem:[#allocation2 + $0xef0] sm:$0xff]
    %v588 = vld [vmem:[#allocation2 + $0xef8] sm:$0xff]
    %v589 = vld [vmem:[#allocation2 + $0xf00] sm:$0xff]
    %v590 = vld [vmem:[#allocation2 + $0xf08] sm:$0xff]
    %v591 = vld [vmem:[#allocation2 + $0xf10] sm:$0xff]
    %v592 = vld [vmem:[#allocation2 + $0xf18] sm:$0xff]
    %v593 = vld [vmem:[#allocation2 + $0xf20] sm:$0xff]
    %v594 = vld [vmem:[#allocation2 + $0xf28] sm:$0xff]
    %v595 = vld [vmem:[#allocation2 + $0xf30] sm:$0xff]
    %v596 = vld [vmem:[#allocation2 + $0xf38] sm:$0xff]
    %v597 = vld [vmem:[#allocation2 + $0xf40] sm:$0xff]
    %v598 = vld [vmem:[#allocation2 + $0xf48] sm:$0xff]
    %v599 = vld [vmem:[#allocation2 + $0xf50] sm:$0xff]
    %v600 = vld [vmem:[#allocation2 + $0xf58] sm:$0xff]
    %v601 = vld [vmem:[#allocation2 + $0xf60] sm:$0xff]
    %v602 = vld [vmem:[#allocation2 + $0xf68] sm:$0xff]
    %v603 = vld [vmem:[#allocation2 + $0xf70] sm:$0xff]
    %v604 = vld [vmem:[#allocation2 + $0xf78] sm:$0xff]
    %v605 = vld [vmem:[#allocation2 + $0xf80] sm:$0xff]
    %v606 = vld [vmem:[#allocation2 + $0xf88] sm:$0xff]
    %v607 = vld [vmem:[#allocation2 + $0xf90] sm:$0xff]
    %v608 = vld [vmem:[#allocation2 + $0xf98] sm:$0xff]
    %v609 = vld [vmem:[#allocation2 + $0xfa0] sm:$0xff]
    %v610 = vld [vmem:[#allocation2 + $0xfa8] sm:$0xff]
    %v611 = vld [vmem:[#allocation2 + $0xfb0] sm:$0xff]
    %v612 = vld [vmem:[#allocation2 + $0xfb8] sm:$0xff]
    %v613 = vld [vmem:[#allocation2 + $0xfc0] sm:$0xff]
    %v614 = vld [vmem:[#allocation2 + $0xfc8] sm:$0xff]
    %v615 = vld [vmem:[#allocation2 + $0xfd0] sm:$0xff]
    %v616 = vld [vmem:[#allocation2 + $0xfd8] sm:$0xff]
    %v617 = vld [vmem:[#allocation2 + $0xfe0] sm:$0xff]
    %v618 = vld [vmem:[#allocation2 + $0xfe8] sm:$0xff]
    %v619 = vld [vmem:[#allocation2 + $0xff0] sm:$0xff]
    %v620 = vld [vmem:[#allocation2 + $0xff8] sm:$0xff]
    %v621 = vld [vmem:[#allocation5] sm:$0xf]
    %v623 = vlaneseq
    %v624 = vshrl.u32 %v623, 7
    %v625 = vsub.s32 0, %v624
    %v626 = vrot.slane %v621, %v625
    %v627 = vlaneseq
    %v628 = vshrl.u32 %v627, 7
    %v629 = vsub.s32 1, %v628
    %v630 = vrot.slane %v621, %v629
    %v631 = vlaneseq
    %v632 = vshrl.u32 %v631, 7
    %v633 = vsub.s32 2, %v632
    %v634 = vrot.slane %v621, %v633
    %v635 = vlaneseq
    %v636 = vshrl.u32 %v635, 7
    %v637 = vsub.s32 3, %v636
    %v638 = vrot.slane %v621, %v637
    %v675 = vunpack.c.l.b16 %v77
    %v676 = vunpack.c.h.b16 %v77
    %v677 = vunpack.c.l.b16 %v78
    %v678 = vunpack.c.h.b16 %v78
    %v679 = vunpack.c.l.b16 %v79
    %v680 = vunpack.c.h.b16 %v79
    %v681 = vunpack.c.l.b16 %v80
    %v682 = vunpack.c.h.b16 %v80
    %v683 = vunpack.c.l.b16 %v81
    %v684 = vunpack.c.h.b16 %v81
    %v685 = vunpack.c.l.b16 %v82
    %v686 = vunpack.c.h.b16 %v82
    %v687 = vunpack.c.l.b16 %v83
    %v688 = vunpack.c.h.b16 %v83
    %v689 = vunpack.c.l.b16 %v84
    %v690 = vunpack.c.h.b16 %v84
    %v691 = vunpack.c.l.b16 %v85
    %v692 = vunpack.c.h.b16 %v85
    %v693 = vunpack.c.l.b16 %v86
    %v694 = vunpack.c.h.b16 %v86
    %v695 = vunpack.c.l.b16 %v87
    %v696 = vunpack.c.h.b16 %v87
    %v697 = vunpack.c.l.b16 %v88
    %v698 = vunpack.c.h.b16 %v88
    %v699 = vunpack.c.l.b16 %v89
    %v700 = vunpack.c.h.b16 %v89
    %v701 = vunpack.c.l.b16 %v90
    %v702 = vunpack.c.h.b16 %v90
    %v703 = vunpack.c.l.b16 %v91
    %v704 = vunpack.c.h.b16 %v91
    %v705 = vunpack.c.l.b16 %v92
    %v706 = vunpack.c.h.b16 %v92
    %v707 = vunpack.c.l.b16 %v93
    %v708 = vunpack.c.h.b16 %v93
    %v709 = vunpack.c.l.b16 %v94
    %v710 = vunpack.c.h.b16 %v94
    %v711 = vunpack.c.l.b16 %v95
    %v712 = vunpack.c.h.b16 %v95
    %v713 = vunpack.c.l.b16 %v96
    %v714 = vunpack.c.h.b16 %v96
    %v715 = vunpack.c.l.b16 %v97
    %v716 = vunpack.c.h.b16 %v97
    %v717 = vunpack.c.l.b16 %v98
    %v718 = vunpack.c.h.b16 %v98
    %v719 = vunpack.c.l.b16 %v99
    %v720 = vunpack.c.h.b16 %v99
    %v721 = vunpack.c.l.b16 %v100
    %v722 = vunpack.c.h.b16 %v100
    %v723 = vunpack.c.l.b16 %v101
    %v724 = vunpack.c.h.b16 %v101
    %v725 = vunpack.c.l.b16 %v102
    %v726 = vunpack.c.h.b16 %v102
    %v727 = vunpack.c.l.b16 %v103
    %v728 = vunpack.c.h.b16 %v103
    %v729 = vunpack.c.l.b16 %v104
    %v730 = vunpack.c.h.b16 %v104
    %v731 = vunpack.c.l.b16 %v105
    %v732 = vunpack.c.h.b16 %v105
    %v733 = vunpack.c.l.b16 %v106
    %v734 = vunpack.c.h.b16 %v106
    %v735 = vunpack.c.l.b16 %v107
    %v736 = vunpack.c.h.b16 %v107
    %v737 = vunpack.c.l.b16 %v108
    %v738 = vunpack.c.h.b16 %v108
    %v739 = vpack.c.b16 %v691, %v675
    %v740 = vpack.c.b16 %v692, %v676
    %v741 = vpack.c.b16 %v693, %v677
    %v742 = vpack.c.b16 %v694, %v678
    %v743 = vpack.c.b16 %v695, %v679
    %v744 = vpack.c.b16 %v696, %v680
    %v745 = vpack.c.b16 %v697, %v681
    %v746 = vpack.c.b16 %v698, %v682
    %v747 = vpack.c.b16 %v699, %v683
    %v748 = vpack.c.b16 %v700, %v684
    %v749 = vpack.c.b16 %v701, %v685
    %v750 = vpack.c.b16 %v702, %v686
    %v751 = vpack.c.b16 %v703, %v687
    %v752 = vpack.c.b16 %v704, %v688
    %v753 = vpack.c.b16 %v705, %v689
    %v754 = vpack.c.b16 %v706, %v690
    %v755 = vpack.c.b16 %v723, %v707
    %v756 = vpack.c.b16 %v724, %v708
    %v757 = vpack.c.b16 %v725, %v709
    %v758 = vpack.c.b16 %v726, %v710
    %v759 = vpack.c.b16 %v727, %v711
    %v760 = vpack.c.b16 %v728, %v712
    %v761 = vpack.c.b16 %v729, %v713
    %v762 = vpack.c.b16 %v730, %v714
    %v763 = vpack.c.b16 %v731, %v715
    %v764 = vpack.c.b16 %v732, %v716
    %v765 = vpack.c.b16 %v733, %v717
    %v766 = vpack.c.b16 %v734, %v718
    %v767 = vpack.c.b16 %v735, %v719
    %v768 = vpack.c.b16 %v736, %v720
    %v769 = vpack.c.b16 %v737, %v721
    %v770 = vpack.c.b16 %v738, %v722
    %v1315 = vunpack.c.l.b16 %v109
    %v1316 = vunpack.c.h.b16 %v109
    %v1317 = vunpack.c.l.b16 %v110
    %v1318 = vunpack.c.h.b16 %v110
    %v1319 = vunpack.c.l.b16 %v111
    %v1320 = vunpack.c.h.b16 %v111
    %v1321 = vunpack.c.l.b16 %v112
    %v1322 = vunpack.c.h.b16 %v112
    %v1323 = vunpack.c.l.b16 %v113
    %v1324 = vunpack.c.h.b16 %v113
    %v1325 = vunpack.c.l.b16 %v114
    %v1326 = vunpack.c.h.b16 %v114
    %v1327 = vunpack.c.l.b16 %v115
    %v1328 = vunpack.c.h.b16 %v115
    %v1329 = vunpack.c.l.b16 %v116
    %v1330 = vunpack.c.h.b16 %v116
    %v1331 = vunpack.c.l.b16 %v117
    %v1332 = vunpack.c.h.b16 %v117
    %v1333 = vunpack.c.l.b16 %v118
    %v1334 = vunpack.c.h.b16 %v118
    %v1335 = vunpack.c.l.b16 %v119
    %v1336 = vunpack.c.h.b16 %v119
    %v1337 = vunpack.c.l.b16 %v120
    %v1338 = vunpack.c.h.b16 %v120
    %v1339 = vunpack.c.l.b16 %v121
    %v1340 = vunpack.c.h.b16 %v121
    %v1341 = vunpack.c.l.b16 %v122
    %v1342 = vunpack.c.h.b16 %v122
    %v1343 = vunpack.c.l.b16 %v123
    %v1344 = vunpack.c.h.b16 %v123
    %v1345 = vunpack.c.l.b16 %v124
    %v1346 = vunpack.c.h.b16 %v124
    %v1347 = vunpack.c.l.b16 %v125
    %v1348 = vunpack.c.h.b16 %v125
    %v1349 = vunpack.c.l.b16 %v126
    %v1350 = vunpack.c.h.b16 %v126
    %v1351 = vunpack.c.l.b16 %v127
    %v1352 = vunpack.c.h.b16 %v127
    %v1353 = vunpack.c.l.b16 %v128
    %v1354 = vunpack.c.h.b16 %v128
    %v1355 = vunpack.c.l.b16 %v129
    %v1356 = vunpack.c.h.b16 %v129
    %v1357 = vunpack.c.l.b16 %v130
    %v1358 = vunpack.c.h.b16 %v130
    %v1359 = vunpack.c.l.b16 %v131
    %v1360 = vunpack.c.h.b16 %v131
    %v1361 = vunpack.c.l.b16 %v132
    %v1362 = vunpack.c.h.b16 %v132
    %v1363 = vunpack.c.l.b16 %v133
    %v1364 = vunpack.c.h.b16 %v133
    %v1365 = vunpack.c.l.b16 %v134
    %v1366 = vunpack.c.h.b16 %v134
    %v1367 = vunpack.c.l.b16 %v135
    %v1368 = vunpack.c.h.b16 %v135
    %v1369 = vunpack.c.l.b16 %v136
    %v1370 = vunpack.c.h.b16 %v136
    %v1371 = vunpack.c.l.b16 %v137
    %v1372 = vunpack.c.h.b16 %v137
    %v1373 = vunpack.c.l.b16 %v138
    %v1374 = vunpack.c.h.b16 %v138
    %v1375 = vunpack.c.l.b16 %v139
    %v1376 = vunpack.c.h.b16 %v139
    %v1377 = vunpack.c.l.b16 %v140
    %v1378 = vunpack.c.h.b16 %v140
    %v1379 = vunpack.c.l.b16 %v141
    %v1380 = vunpack.c.h.b16 %v141
    %v1381 = vunpack.c.l.b16 %v142
    %v1382 = vunpack.c.h.b16 %v142
    %v1383 = vunpack.c.l.b16 %v143
    %v1384 = vunpack.c.h.b16 %v143
    %v1385 = vunpack.c.l.b16 %v144
    %v1386 = vunpack.c.h.b16 %v144
    %v1387 = vunpack.c.l.b16 %v145
    %v1388 = vunpack.c.h.b16 %v145
    %v1389 = vunpack.c.l.b16 %v146
    %v1390 = vunpack.c.h.b16 %v146
    %v1391 = vunpack.c.l.b16 %v147
    %v1392 = vunpack.c.h.b16 %v147
    %v1393 = vunpack.c.l.b16 %v148
    %v1394 = vunpack.c.h.b16 %v148
    %v1395 = vunpack.c.l.b16 %v149
    %v1396 = vunpack.c.h.b16 %v149
    %v1397 = vunpack.c.l.b16 %v150
    %v1398 = vunpack.c.h.b16 %v150
    %v1399 = vunpack.c.l.b16 %v151
    %v1400 = vunpack.c.h.b16 %v151
    %v1401 = vunpack.c.l.b16 %v152
    %v1402 = vunpack.c.h.b16 %v152
    %v1403 = vunpack.c.l.b16 %v153
    %v1404 = vunpack.c.h.b16 %v153
    %v1405 = vunpack.c.l.b16 %v154
    %v1406 = vunpack.c.h.b16 %v154
    %v1407 = vunpack.c.l.b16 %v155
    %v1408 = vunpack.c.h.b16 %v155
    %v1409 = vunpack.c.l.b16 %v156
    %v1410 = vunpack.c.h.b16 %v156
    %v1411 = vunpack.c.l.b16 %v157
    %v1412 = vunpack.c.h.b16 %v157
    %v1413 = vunpack.c.l.b16 %v158
    %v1414 = vunpack.c.h.b16 %v158
    %v1415 = vunpack.c.l.b16 %v159
    %v1416 = vunpack.c.h.b16 %v159
    %v1417 = vunpack.c.l.b16 %v160
    %v1418 = vunpack.c.h.b16 %v160
    %v1419 = vunpack.c.l.b16 %v161
    %v1420 = vunpack.c.h.b16 %v161
    %v1421 = vunpack.c.l.b16 %v162
    %v1422 = vunpack.c.h.b16 %v162
    %v1423 = vunpack.c.l.b16 %v163
    %v1424 = vunpack.c.h.b16 %v163
    %v1425 = vunpack.c.l.b16 %v164
    %v1426 = vunpack.c.h.b16 %v164
    %v1427 = vunpack.c.l.b16 %v165
    %v1428 = vunpack.c.h.b16 %v165
    %v1429 = vunpack.c.l.b16 %v166
    %v1430 = vunpack.c.h.b16 %v166
    %v1431 = vunpack.c.l.b16 %v167
    %v1432 = vunpack.c.h.b16 %v167
    %v1433 = vunpack.c.l.b16 %v168
    %v1434 = vunpack.c.h.b16 %v168
    %v1435 = vunpack.c.l.b16 %v169
    %v1436 = vunpack.c.h.b16 %v169
    %v1437 = vunpack.c.l.b16 %v170
    %v1438 = vunpack.c.h.b16 %v170
    %v1439 = vunpack.c.l.b16 %v171
    %v1440 = vunpack.c.h.b16 %v171
    %v1441 = vunpack.c.l.b16 %v172
    %v1442 = vunpack.c.h.b16 %v172
    %v1443 = vunpack.c.l.b16 %v173
    %v1444 = vunpack.c.h.b16 %v173
    %v1445 = vunpack.c.l.b16 %v174
    %v1446 = vunpack.c.h.b16 %v174
    %v1447 = vunpack.c.l.b16 %v175
    %v1448 = vunpack.c.h.b16 %v175
    %v1449 = vunpack.c.l.b16 %v176
    %v1450 = vunpack.c.h.b16 %v176
    %v1451 = vunpack.c.l.b16 %v177
    %v1452 = vunpack.c.h.b16 %v177
    %v1453 = vunpack.c.l.b16 %v178
    %v1454 = vunpack.c.h.b16 %v178
    %v1455 = vunpack.c.l.b16 %v179
    %v1456 = vunpack.c.h.b16 %v179
    %v1457 = vunpack.c.l.b16 %v180
    %v1458 = vunpack.c.h.b16 %v180
    %v1459 = vunpack.c.l.b16 %v181
    %v1460 = vunpack.c.h.b16 %v181
    %v1461 = vunpack.c.l.b16 %v182
    %v1462 = vunpack.c.h.b16 %v182
    %v1463 = vunpack.c.l.b16 %v183
    %v1464 = vunpack.c.h.b16 %v183
    %v1465 = vunpack.c.l.b16 %v184
    %v1466 = vunpack.c.h.b16 %v184
    %v1467 = vunpack.c.l.b16 %v185
    %v1468 = vunpack.c.h.b16 %v185
    %v1469 = vunpack.c.l.b16 %v186
    %v1470 = vunpack.c.h.b16 %v186
    %v1471 = vunpack.c.l.b16 %v187
    %v1472 = vunpack.c.h.b16 %v187
    %v1473 = vunpack.c.l.b16 %v188
    %v1474 = vunpack.c.h.b16 %v188
    %v1475 = vunpack.c.l.b16 %v189
    %v1476 = vunpack.c.h.b16 %v189
    %v1477 = vunpack.c.l.b16 %v190
    %v1478 = vunpack.c.h.b16 %v190
    %v1479 = vunpack.c.l.b16 %v191
    %v1480 = vunpack.c.h.b16 %v191
    %v1481 = vunpack.c.l.b16 %v192
    %v1482 = vunpack.c.h.b16 %v192
    %v1483 = vunpack.c.l.b16 %v193
    %v1484 = vunpack.c.h.b16 %v193
    %v1485 = vunpack.c.l.b16 %v194
    %v1486 = vunpack.c.h.b16 %v194
    %v1487 = vunpack.c.l.b16 %v195
    %v1488 = vunpack.c.h.b16 %v195
    %v1489 = vunpack.c.l.b16 %v196
    %v1490 = vunpack.c.h.b16 %v196
    %v1491 = vunpack.c.l.b16 %v197
    %v1492 = vunpack.c.h.b16 %v197
    %v1493 = vunpack.c.l.b16 %v198
    %v1494 = vunpack.c.h.b16 %v198
    %v1495 = vunpack.c.l.b16 %v199
    %v1496 = vunpack.c.h.b16 %v199
    %v1497 = vunpack.c.l.b16 %v200
    %v1498 = vunpack.c.h.b16 %v200
    %v1499 = vunpack.c.l.b16 %v201
    %v1500 = vunpack.c.h.b16 %v201
    %v1501 = vunpack.c.l.b16 %v202
    %v1502 = vunpack.c.h.b16 %v202
    %v1503 = vunpack.c.l.b16 %v203
    %v1504 = vunpack.c.h.b16 %v203
    %v1505 = vunpack.c.l.b16 %v204
    %v1506 = vunpack.c.h.b16 %v204
    %v1507 = vunpack.c.l.b16 %v205
    %v1508 = vunpack.c.h.b16 %v205
    %v1509 = vunpack.c.l.b16 %v206
    %v1510 = vunpack.c.h.b16 %v206
    %v1511 = vunpack.c.l.b16 %v207
    %v1512 = vunpack.c.h.b16 %v207
    %v1513 = vunpack.c.l.b16 %v208
    %v1514 = vunpack.c.h.b16 %v208
    %v1515 = vunpack.c.l.b16 %v209
    %v1516 = vunpack.c.h.b16 %v209
    %v1517 = vunpack.c.l.b16 %v210
    %v1518 = vunpack.c.h.b16 %v210
    %v1519 = vunpack.c.l.b16 %v211
    %v1520 = vunpack.c.h.b16 %v211
    %v1521 = vunpack.c.l.b16 %v212
    %v1522 = vunpack.c.h.b16 %v212
    %v1523 = vunpack.c.l.b16 %v213
    %v1524 = vunpack.c.h.b16 %v213
    %v1525 = vunpack.c.l.b16 %v214
    %v1526 = vunpack.c.h.b16 %v214
    %v1527 = vunpack.c.l.b16 %v215
    %v1528 = vunpack.c.h.b16 %v215
    %v1529 = vunpack.c.l.b16 %v216
    %v1530 = vunpack.c.h.b16 %v216
    %v1531 = vunpack.c.l.b16 %v217
    %v1532 = vunpack.c.h.b16 %v217
    %v1533 = vunpack.c.l.b16 %v218
    %v1534 = vunpack.c.h.b16 %v218
    %v1535 = vunpack.c.l.b16 %v219
    %v1536 = vunpack.c.h.b16 %v219
    %v1537 = vunpack.c.l.b16 %v220
    %v1538 = vunpack.c.h.b16 %v220
    %v1539 = vunpack.c.l.b16 %v221
    %v1540 = vunpack.c.h.b16 %v221
    %v1541 = vunpack.c.l.b16 %v222
    %v1542 = vunpack.c.h.b16 %v222
    %v1543 = vunpack.c.l.b16 %v223
    %v1544 = vunpack.c.h.b16 %v223
    %v1545 = vunpack.c.l.b16 %v224
    %v1546 = vunpack.c.h.b16 %v224
    %v1547 = vunpack.c.l.b16 %v225
    %v1548 = vunpack.c.h.b16 %v225
    %v1549 = vunpack.c.l.b16 %v226
    %v1550 = vunpack.c.h.b16 %v226
    %v1551 = vunpack.c.l.b16 %v227
    %v1552 = vunpack.c.h.b16 %v227
    %v1553 = vunpack.c.l.b16 %v228
    %v1554 = vunpack.c.h.b16 %v228
    %v1555 = vunpack.c.l.b16 %v229
    %v1556 = vunpack.c.h.b16 %v229
    %v1557 = vunpack.c.l.b16 %v230
    %v1558 = vunpack.c.h.b16 %v230
    %v1559 = vunpack.c.l.b16 %v231
    %v1560 = vunpack.c.h.b16 %v231
    %v1561 = vunpack.c.l.b16 %v232
    %v1562 = vunpack.c.h.b16 %v232
    %v1563 = vunpack.c.l.b16 %v233
    %v1564 = vunpack.c.h.b16 %v233
    %v1565 = vunpack.c.l.b16 %v234
    %v1566 = vunpack.c.h.b16 %v234
    %v1567 = vunpack.c.l.b16 %v235
    %v1568 = vunpack.c.h.b16 %v235
    %v1569 = vunpack.c.l.b16 %v236
    %v1570 = vunpack.c.h.b16 %v236
    %v1571 = vunpack.c.l.b16 %v237
    %v1572 = vunpack.c.h.b16 %v237
    %v1573 = vunpack.c.l.b16 %v238
    %v1574 = vunpack.c.h.b16 %v238
    %v1575 = vunpack.c.l.b16 %v239
    %v1576 = vunpack.c.h.b16 %v239
    %v1577 = vunpack.c.l.b16 %v240
    %v1578 = vunpack.c.h.b16 %v240
    %v1579 = vunpack.c.l.b16 %v241
    %v1580 = vunpack.c.h.b16 %v241
    %v1581 = vunpack.c.l.b16 %v242
    %v1582 = vunpack.c.h.b16 %v242
    %v1583 = vunpack.c.l.b16 %v243
    %v1584 = vunpack.c.h.b16 %v243
    %v1585 = vunpack.c.l.b16 %v244
    %v1586 = vunpack.c.h.b16 %v244
    %v1587 = vunpack.c.l.b16 %v245
    %v1588 = vunpack.c.h.b16 %v245
    %v1589 = vunpack.c.l.b16 %v246
    %v1590 = vunpack.c.h.b16 %v246
    %v1591 = vunpack.c.l.b16 %v247
    %v1592 = vunpack.c.h.b16 %v247
    %v1593 = vunpack.c.l.b16 %v248
    %v1594 = vunpack.c.h.b16 %v248
    %v1595 = vunpack.c.l.b16 %v249
    %v1596 = vunpack.c.h.b16 %v249
    %v1597 = vunpack.c.l.b16 %v250
    %v1598 = vunpack.c.h.b16 %v250
    %v1599 = vunpack.c.l.b16 %v251
    %v1600 = vunpack.c.h.b16 %v251
    %v1601 = vunpack.c.l.b16 %v252
    %v1602 = vunpack.c.h.b16 %v252
    %v1603 = vunpack.c.l.b16 %v253
    %v1604 = vunpack.c.h.b16 %v253
    %v1605 = vunpack.c.l.b16 %v254
    %v1606 = vunpack.c.h.b16 %v254
    %v1607 = vunpack.c.l.b16 %v255
    %v1608 = vunpack.c.h.b16 %v255
    %v1609 = vunpack.c.l.b16 %v256
    %v1610 = vunpack.c.h.b16 %v256
    %v1611 = vunpack.c.l.b16 %v257
    %v1612 = vunpack.c.h.b16 %v257
    %v1613 = vunpack.c.l.b16 %v258
    %v1614 = vunpack.c.h.b16 %v258
    %v1615 = vunpack.c.l.b16 %v259
    %v1616 = vunpack.c.h.b16 %v259
    %v1617 = vunpack.c.l.b16 %v260
    %v1618 = vunpack.c.h.b16 %v260
    %v1619 = vunpack.c.l.b16 %v261
    %v1620 = vunpack.c.h.b16 %v261
    %v1621 = vunpack.c.l.b16 %v262
    %v1622 = vunpack.c.h.b16 %v262
    %v1623 = vunpack.c.l.b16 %v263
    %v1624 = vunpack.c.h.b16 %v263
    %v1625 = vunpack.c.l.b16 %v264
    %v1626 = vunpack.c.h.b16 %v264
    %v1627 = vunpack.c.l.b16 %v265
    %v1628 = vunpack.c.h.b16 %v265
    %v1629 = vunpack.c.l.b16 %v266
    %v1630 = vunpack.c.h.b16 %v266
    %v1631 = vunpack.c.l.b16 %v267
    %v1632 = vunpack.c.h.b16 %v267
    %v1633 = vunpack.c.l.b16 %v268
    %v1634 = vunpack.c.h.b16 %v268
    %v1635 = vunpack.c.l.b16 %v269
    %v1636 = vunpack.c.h.b16 %v269
    %v1637 = vunpack.c.l.b16 %v270
    %v1638 = vunpack.c.h.b16 %v270
    %v1639 = vunpack.c.l.b16 %v271
    %v1640 = vunpack.c.h.b16 %v271
    %v1641 = vunpack.c.l.b16 %v272
    %v1642 = vunpack.c.h.b16 %v272
    %v1643 = vunpack.c.l.b16 %v273
    %v1644 = vunpack.c.h.b16 %v273
    %v1645 = vunpack.c.l.b16 %v274
    %v1646 = vunpack.c.h.b16 %v274
    %v1647 = vunpack.c.l.b16 %v275
    %v1648 = vunpack.c.h.b16 %v275
    %v1649 = vunpack.c.l.b16 %v276
    %v1650 = vunpack.c.h.b16 %v276
    %v1651 = vunpack.c.l.b16 %v277
    %v1652 = vunpack.c.h.b16 %v277
    %v1653 = vunpack.c.l.b16 %v278
    %v1654 = vunpack.c.h.b16 %v278
    %v1655 = vunpack.c.l.b16 %v279
    %v1656 = vunpack.c.h.b16 %v279
    %v1657 = vunpack.c.l.b16 %v280
    %v1658 = vunpack.c.h.b16 %v280
    %v1659 = vunpack.c.l.b16 %v281
    %v1660 = vunpack.c.h.b16 %v281
    %v1661 = vunpack.c.l.b16 %v282
    %v1662 = vunpack.c.h.b16 %v282
    %v1663 = vunpack.c.l.b16 %v283
    %v1664 = vunpack.c.h.b16 %v283
    %v1665 = vunpack.c.l.b16 %v284
    %v1666 = vunpack.c.h.b16 %v284
    %v1667 = vunpack.c.l.b16 %v285
    %v1668 = vunpack.c.h.b16 %v285
    %v1669 = vunpack.c.l.b16 %v286
    %v1670 = vunpack.c.h.b16 %v286
    %v1671 = vunpack.c.l.b16 %v287
    %v1672 = vunpack.c.h.b16 %v287
    %v1673 = vunpack.c.l.b16 %v288
    %v1674 = vunpack.c.h.b16 %v288
    %v1675 = vunpack.c.l.b16 %v289
    %v1676 = vunpack.c.h.b16 %v289
    %v1677 = vunpack.c.l.b16 %v290
    %v1678 = vunpack.c.h.b16 %v290
    %v1679 = vunpack.c.l.b16 %v291
    %v1680 = vunpack.c.h.b16 %v291
    %v1681 = vunpack.c.l.b16 %v292
    %v1682 = vunpack.c.h.b16 %v292
    %v1683 = vunpack.c.l.b16 %v293
    %v1684 = vunpack.c.h.b16 %v293
    %v1685 = vunpack.c.l.b16 %v294
    %v1686 = vunpack.c.h.b16 %v294
    %v1687 = vunpack.c.l.b16 %v295
    %v1688 = vunpack.c.h.b16 %v295
    %v1689 = vunpack.c.l.b16 %v296
    %v1690 = vunpack.c.h.b16 %v296
    %v1691 = vunpack.c.l.b16 %v297
    %v1692 = vunpack.c.h.b16 %v297
    %v1693 = vunpack.c.l.b16 %v298
    %v1694 = vunpack.c.h.b16 %v298
    %v1695 = vunpack.c.l.b16 %v299
    %v1696 = vunpack.c.h.b16 %v299
    %v1697 = vunpack.c.l.b16 %v300
    %v1698 = vunpack.c.h.b16 %v300
    %v1699 = vunpack.c.l.b16 %v301
    %v1700 = vunpack.c.h.b16 %v301
    %v1701 = vunpack.c.l.b16 %v302
    %v1702 = vunpack.c.h.b16 %v302
    %v1703 = vunpack.c.l.b16 %v303
    %v1704 = vunpack.c.h.b16 %v303
    %v1705 = vunpack.c.l.b16 %v304
    %v1706 = vunpack.c.h.b16 %v304
    %v1707 = vunpack.c.l.b16 %v305
    %v1708 = vunpack.c.h.b16 %v305
    %v1709 = vunpack.c.l.b16 %v306
    %v1710 = vunpack.c.h.b16 %v306
    %v1711 = vunpack.c.l.b16 %v307
    %v1712 = vunpack.c.h.b16 %v307
    %v1713 = vunpack.c.l.b16 %v308
    %v1714 = vunpack.c.h.b16 %v308
    %v1715 = vunpack.c.l.b16 %v309
    %v1716 = vunpack.c.h.b16 %v309
    %v1717 = vunpack.c.l.b16 %v310
    %v1718 = vunpack.c.h.b16 %v310
    %v1719 = vunpack.c.l.b16 %v311
    %v1720 = vunpack.c.h.b16 %v311
    %v1721 = vunpack.c.l.b16 %v312
    %v1722 = vunpack.c.h.b16 %v312
    %v1723 = vunpack.c.l.b16 %v313
    %v1724 = vunpack.c.h.b16 %v313
    %v1725 = vunpack.c.l.b16 %v314
    %v1726 = vunpack.c.h.b16 %v314
    %v1727 = vunpack.c.l.b16 %v315
    %v1728 = vunpack.c.h.b16 %v315
    %v1729 = vunpack.c.l.b16 %v316
    %v1730 = vunpack.c.h.b16 %v316
    %v1731 = vunpack.c.l.b16 %v317
    %v1732 = vunpack.c.h.b16 %v317
    %v1733 = vunpack.c.l.b16 %v318
    %v1734 = vunpack.c.h.b16 %v318
    %v1735 = vunpack.c.l.b16 %v319
    %v1736 = vunpack.c.h.b16 %v319
    %v1737 = vunpack.c.l.b16 %v320
    %v1738 = vunpack.c.h.b16 %v320
    %v1739 = vunpack.c.l.b16 %v321
    %v1740 = vunpack.c.h.b16 %v321
    %v1741 = vunpack.c.l.b16 %v322
    %v1742 = vunpack.c.h.b16 %v322
    %v1743 = vunpack.c.l.b16 %v323
    %v1744 = vunpack.c.h.b16 %v323
    %v1745 = vunpack.c.l.b16 %v324
    %v1746 = vunpack.c.h.b16 %v324
    %v1747 = vunpack.c.l.b16 %v325
    %v1748 = vunpack.c.h.b16 %v325
    %v1749 = vunpack.c.l.b16 %v326
    %v1750 = vunpack.c.h.b16 %v326
    %v1751 = vunpack.c.l.b16 %v327
    %v1752 = vunpack.c.h.b16 %v327
    %v1753 = vunpack.c.l.b16 %v328
    %v1754 = vunpack.c.h.b16 %v328
    %v1755 = vunpack.c.l.b16 %v329
    %v1756 = vunpack.c.h.b16 %v329
    %v1757 = vunpack.c.l.b16 %v330
    %v1758 = vunpack.c.h.b16 %v330
    %v1759 = vunpack.c.l.b16 %v331
    %v1760 = vunpack.c.h.b16 %v331
    %v1761 = vunpack.c.l.b16 %v332
    %v1762 = vunpack.c.h.b16 %v332
    %v1763 = vunpack.c.l.b16 %v333
    %v1764 = vunpack.c.h.b16 %v333
    %v1765 = vunpack.c.l.b16 %v334
    %v1766 = vunpack.c.h.b16 %v334
    %v1767 = vunpack.c.l.b16 %v335
    %v1768 = vunpack.c.h.b16 %v335
    %v1769 = vunpack.c.l.b16 %v336
    %v1770 = vunpack.c.h.b16 %v336
    %v1771 = vunpack.c.l.b16 %v337
    %v1772 = vunpack.c.h.b16 %v337
    %v1773 = vunpack.c.l.b16 %v338
    %v1774 = vunpack.c.h.b16 %v338
    %v1775 = vunpack.c.l.b16 %v339
    %v1776 = vunpack.c.h.b16 %v339
    %v1777 = vunpack.c.l.b16 %v340
    %v1778 = vunpack.c.h.b16 %v340
    %v1779 = vunpack.c.l.b16 %v341
    %v1780 = vunpack.c.h.b16 %v341
    %v1781 = vunpack.c.l.b16 %v342
    %v1782 = vunpack.c.h.b16 %v342
    %v1783 = vunpack.c.l.b16 %v343
    %v1784 = vunpack.c.h.b16 %v343
    %v1785 = vunpack.c.l.b16 %v344
    %v1786 = vunpack.c.h.b16 %v344
    %v1787 = vunpack.c.l.b16 %v345
    %v1788 = vunpack.c.h.b16 %v345
    %v1789 = vunpack.c.l.b16 %v346
    %v1790 = vunpack.c.h.b16 %v346
    %v1791 = vunpack.c.l.b16 %v347
    %v1792 = vunpack.c.h.b16 %v347
    %v1793 = vunpack.c.l.b16 %v348
    %v1794 = vunpack.c.h.b16 %v348
    %v1795 = vunpack.c.l.b16 %v349
    %v1796 = vunpack.c.h.b16 %v349
    %v1797 = vunpack.c.l.b16 %v350
    %v1798 = vunpack.c.h.b16 %v350
    %v1799 = vunpack.c.l.b16 %v351
    %v1800 = vunpack.c.h.b16 %v351
    %v1801 = vunpack.c.l.b16 %v352
    %v1802 = vunpack.c.h.b16 %v352
    %v1803 = vunpack.c.l.b16 %v353
    %v1804 = vunpack.c.h.b16 %v353
    %v1805 = vunpack.c.l.b16 %v354
    %v1806 = vunpack.c.h.b16 %v354
    %v1807 = vunpack.c.l.b16 %v355
    %v1808 = vunpack.c.h.b16 %v355
    %v1809 = vunpack.c.l.b16 %v356
    %v1810 = vunpack.c.h.b16 %v356
    %v1811 = vunpack.c.l.b16 %v357
    %v1812 = vunpack.c.h.b16 %v357
    %v1813 = vunpack.c.l.b16 %v358
    %v1814 = vunpack.c.h.b16 %v358
    %v1815 = vunpack.c.l.b16 %v359
    %v1816 = vunpack.c.h.b16 %v359
    %v1817 = vunpack.c.l.b16 %v360
    %v1818 = vunpack.c.h.b16 %v360
    %v1819 = vunpack.c.l.b16 %v361
    %v1820 = vunpack.c.h.b16 %v361
    %v1821 = vunpack.c.l.b16 %v362
    %v1822 = vunpack.c.h.b16 %v362
    %v1823 = vunpack.c.l.b16 %v363
    %v1824 = vunpack.c.h.b16 %v363
    %v1825 = vunpack.c.l.b16 %v364
    %v1826 = vunpack.c.h.b16 %v364
    %v1827 = vunpack.c.l.b16 %v365
    %v1828 = vunpack.c.h.b16 %v365
    %v1829 = vunpack.c.l.b16 %v366
    %v1830 = vunpack.c.h.b16 %v366
    %v1831 = vunpack.c.l.b16 %v367
    %v1832 = vunpack.c.h.b16 %v367
    %v1833 = vunpack.c.l.b16 %v368
    %v1834 = vunpack.c.h.b16 %v368
    %v1835 = vunpack.c.l.b16 %v369
    %v1836 = vunpack.c.h.b16 %v369
    %v1837 = vunpack.c.l.b16 %v370
    %v1838 = vunpack.c.h.b16 %v370
    %v1839 = vunpack.c.l.b16 %v371
    %v1840 = vunpack.c.h.b16 %v371
    %v1841 = vunpack.c.l.b16 %v372
    %v1842 = vunpack.c.h.b16 %v372
    %v1843 = vunpack.c.l.b16 %v373
    %v1844 = vunpack.c.h.b16 %v373
    %v1845 = vunpack.c.l.b16 %v374
    %v1846 = vunpack.c.h.b16 %v374
    %v1847 = vunpack.c.l.b16 %v375
    %v1848 = vunpack.c.h.b16 %v375
    %v1849 = vunpack.c.l.b16 %v376
    %v1850 = vunpack.c.h.b16 %v376
    %v1851 = vunpack.c.l.b16 %v377
    %v1852 = vunpack.c.h.b16 %v377
    %v1853 = vunpack.c.l.b16 %v378
    %v1854 = vunpack.c.h.b16 %v378
    %v1855 = vunpack.c.l.b16 %v379
    %v1856 = vunpack.c.h.b16 %v379
    %v1857 = vunpack.c.l.b16 %v380
    %v1858 = vunpack.c.h.b16 %v380
    %v1859 = vunpack.c.l.b16 %v381
    %v1860 = vunpack.c.h.b16 %v381
    %v1861 = vunpack.c.l.b16 %v382
    %v1862 = vunpack.c.h.b16 %v382
    %v1863 = vunpack.c.l.b16 %v383
    %v1864 = vunpack.c.h.b16 %v383
    %v1865 = vunpack.c.l.b16 %v384
    %v1866 = vunpack.c.h.b16 %v384
    %v1867 = vunpack.c.l.b16 %v385
    %v1868 = vunpack.c.h.b16 %v385
    %v1869 = vunpack.c.l.b16 %v386
    %v1870 = vunpack.c.h.b16 %v386
    %v1871 = vunpack.c.l.b16 %v387
    %v1872 = vunpack.c.h.b16 %v387
    %v1873 = vunpack.c.l.b16 %v388
    %v1874 = vunpack.c.h.b16 %v388
    %v1875 = vunpack.c.l.b16 %v389
    %v1876 = vunpack.c.h.b16 %v389
    %v1877 = vunpack.c.l.b16 %v390
    %v1878 = vunpack.c.h.b16 %v390
    %v1879 = vunpack.c.l.b16 %v391
    %v1880 = vunpack.c.h.b16 %v391
    %v1881 = vunpack.c.l.b16 %v392
    %v1882 = vunpack.c.h.b16 %v392
    %v1883 = vunpack.c.l.b16 %v393
    %v1884 = vunpack.c.h.b16 %v393
    %v1885 = vunpack.c.l.b16 %v394
    %v1886 = vunpack.c.h.b16 %v394
    %v1887 = vunpack.c.l.b16 %v395
    %v1888 = vunpack.c.h.b16 %v395
    %v1889 = vunpack.c.l.b16 %v396
    %v1890 = vunpack.c.h.b16 %v396
    %v1891 = vunpack.c.l.b16 %v397
    %v1892 = vunpack.c.h.b16 %v397
    %v1893 = vunpack.c.l.b16 %v398
    %v1894 = vunpack.c.h.b16 %v398
    %v1895 = vunpack.c.l.b16 %v399
    %v1896 = vunpack.c.h.b16 %v399
    %v1897 = vunpack.c.l.b16 %v400
    %v1898 = vunpack.c.h.b16 %v400
    %v1899 = vunpack.c.l.b16 %v401
    %v1900 = vunpack.c.h.b16 %v401
    %v1901 = vunpack.c.l.b16 %v402
    %v1902 = vunpack.c.h.b16 %v402
    %v1903 = vunpack.c.l.b16 %v403
    %v1904 = vunpack.c.h.b16 %v403
    %v1905 = vunpack.c.l.b16 %v404
    %v1906 = vunpack.c.h.b16 %v404
    %v1907 = vunpack.c.l.b16 %v405
    %v1908 = vunpack.c.h.b16 %v405
    %v1909 = vunpack.c.l.b16 %v406
    %v1910 = vunpack.c.h.b16 %v406
    %v1911 = vunpack.c.l.b16 %v407
    %v1912 = vunpack.c.h.b16 %v407
    %v1913 = vunpack.c.l.b16 %v408
    %v1914 = vunpack.c.h.b16 %v408
    %v1915 = vunpack.c.l.b16 %v409
    %v1916 = vunpack.c.h.b16 %v409
    %v1917 = vunpack.c.l.b16 %v410
    %v1918 = vunpack.c.h.b16 %v410
    %v1919 = vunpack.c.l.b16 %v411
    %v1920 = vunpack.c.h.b16 %v411
    %v1921 = vunpack.c.l.b16 %v412
    %v1922 = vunpack.c.h.b16 %v412
    %v1923 = vunpack.c.l.b16 %v413
    %v1924 = vunpack.c.h.b16 %v413
    %v1925 = vunpack.c.l.b16 %v414
    %v1926 = vunpack.c.h.b16 %v414
    %v1927 = vunpack.c.l.b16 %v415
    %v1928 = vunpack.c.h.b16 %v415
    %v1929 = vunpack.c.l.b16 %v416
    %v1930 = vunpack.c.h.b16 %v416
    %v1931 = vunpack.c.l.b16 %v417
    %v1932 = vunpack.c.h.b16 %v417
    %v1933 = vunpack.c.l.b16 %v418
    %v1934 = vunpack.c.h.b16 %v418
    %v1935 = vunpack.c.l.b16 %v419
    %v1936 = vunpack.c.h.b16 %v419
    %v1937 = vunpack.c.l.b16 %v420
    %v1938 = vunpack.c.h.b16 %v420
    %v1939 = vunpack.c.l.b16 %v421
    %v1940 = vunpack.c.h.b16 %v421
    %v1941 = vunpack.c.l.b16 %v422
    %v1942 = vunpack.c.h.b16 %v422
    %v1943 = vunpack.c.l.b16 %v423
    %v1944 = vunpack.c.h.b16 %v423
    %v1945 = vunpack.c.l.b16 %v424
    %v1946 = vunpack.c.h.b16 %v424
    %v1947 = vunpack.c.l.b16 %v425
    %v1948 = vunpack.c.h.b16 %v425
    %v1949 = vunpack.c.l.b16 %v426
    %v1950 = vunpack.c.h.b16 %v426
    %v1951 = vunpack.c.l.b16 %v427
    %v1952 = vunpack.c.h.b16 %v427
    %v1953 = vunpack.c.l.b16 %v428
    %v1954 = vunpack.c.h.b16 %v428
    %v1955 = vunpack.c.l.b16 %v429
    %v1956 = vunpack.c.h.b16 %v429
    %v1957 = vunpack.c.l.b16 %v430
    %v1958 = vunpack.c.h.b16 %v430
    %v1959 = vunpack.c.l.b16 %v431
    %v1960 = vunpack.c.h.b16 %v431
    %v1961 = vunpack.c.l.b16 %v432
    %v1962 = vunpack.c.h.b16 %v432
    %v1963 = vunpack.c.l.b16 %v433
    %v1964 = vunpack.c.h.b16 %v433
    %v1965 = vunpack.c.l.b16 %v434
    %v1966 = vunpack.c.h.b16 %v434
    %v1967 = vunpack.c.l.b16 %v435
    %v1968 = vunpack.c.h.b16 %v435
    %v1969 = vunpack.c.l.b16 %v436
    %v1970 = vunpack.c.h.b16 %v436
    %v1971 = vunpack.c.l.b16 %v437
    %v1972 = vunpack.c.h.b16 %v437
    %v1973 = vunpack.c.l.b16 %v438
    %v1974 = vunpack.c.h.b16 %v438
    %v1975 = vunpack.c.l.b16 %v439
    %v1976 = vunpack.c.h.b16 %v439
    %v1977 = vunpack.c.l.b16 %v440
    %v1978 = vunpack.c.h.b16 %v440
    %v1979 = vunpack.c.l.b16 %v441
    %v1980 = vunpack.c.h.b16 %v441
    %v1981 = vunpack.c.l.b16 %v442
    %v1982 = vunpack.c.h.b16 %v442
    %v1983 = vunpack.c.l.b16 %v443
    %v1984 = vunpack.c.h.b16 %v443
    %v1985 = vunpack.c.l.b16 %v444
    %v1986 = vunpack.c.h.b16 %v444
    %v1987 = vunpack.c.l.b16 %v445
    %v1988 = vunpack.c.h.b16 %v445
    %v1989 = vunpack.c.l.b16 %v446
    %v1990 = vunpack.c.h.b16 %v446
    %v1991 = vunpack.c.l.b16 %v447
    %v1992 = vunpack.c.h.b16 %v447
    %v1993 = vunpack.c.l.b16 %v448
    %v1994 = vunpack.c.h.b16 %v448
    %v1995 = vunpack.c.l.b16 %v449
    %v1996 = vunpack.c.h.b16 %v449
    %v1997 = vunpack.c.l.b16 %v450
    %v1998 = vunpack.c.h.b16 %v450
    %v1999 = vunpack.c.l.b16 %v451
    %v2000 = vunpack.c.h.b16 %v451
    %v2001 = vunpack.c.l.b16 %v452
    %v2002 = vunpack.c.h.b16 %v452
    %v2003 = vunpack.c.l.b16 %v453
    %v2004 = vunpack.c.h.b16 %v453
    %v2005 = vunpack.c.l.b16 %v454
    %v2006 = vunpack.c.h.b16 %v454
    %v2007 = vunpack.c.l.b16 %v455
    %v2008 = vunpack.c.h.b16 %v455
    %v2009 = vunpack.c.l.b16 %v456
    %v2010 = vunpack.c.h.b16 %v456
    %v2011 = vunpack.c.l.b16 %v457
    %v2012 = vunpack.c.h.b16 %v457
    %v2013 = vunpack.c.l.b16 %v458
    %v2014 = vunpack.c.h.b16 %v458
    %v2015 = vunpack.c.l.b16 %v459
    %v2016 = vunpack.c.h.b16 %v459
    %v2017 = vunpack.c.l.b16 %v460
    %v2018 = vunpack.c.h.b16 %v460
    %v2019 = vunpack.c.l.b16 %v461
    %v2020 = vunpack.c.h.b16 %v461
    %v2021 = vunpack.c.l.b16 %v462
    %v2022 = vunpack.c.h.b16 %v462
    %v2023 = vunpack.c.l.b16 %v463
    %v2024 = vunpack.c.h.b16 %v463
    %v2025 = vunpack.c.l.b16 %v464
    %v2026 = vunpack.c.h.b16 %v464
    %v2027 = vunpack.c.l.b16 %v465
    %v2028 = vunpack.c.h.b16 %v465
    %v2029 = vunpack.c.l.b16 %v466
    %v2030 = vunpack.c.h.b16 %v466
    %v2031 = vunpack.c.l.b16 %v467
    %v2032 = vunpack.c.h.b16 %v467
    %v2033 = vunpack.c.l.b16 %v468
    %v2034 = vunpack.c.h.b16 %v468
    %v2035 = vunpack.c.l.b16 %v469
    %v2036 = vunpack.c.h.b16 %v469
    %v2037 = vunpack.c.l.b16 %v470
    %v2038 = vunpack.c.h.b16 %v470
    %v2039 = vunpack.c.l.b16 %v471
    %v2040 = vunpack.c.h.b16 %v471
    %v2041 = vunpack.c.l.b16 %v472
    %v2042 = vunpack.c.h.b16 %v472
    %v2043 = vunpack.c.l.b16 %v473
    %v2044 = vunpack.c.h.b16 %v473
    %v2045 = vunpack.c.l.b16 %v474
    %v2046 = vunpack.c.h.b16 %v474
    %v2047 = vunpack.c.l.b16 %v475
    %v2048 = vunpack.c.h.b16 %v475
    %v2049 = vunpack.c.l.b16 %v476
    %v2050 = vunpack.c.h.b16 %v476
    %v2051 = vunpack.c.l.b16 %v477
    %v2052 = vunpack.c.h.b16 %v477
    %v2053 = vunpack.c.l.b16 %v478
    %v2054 = vunpack.c.h.b16 %v478
    %v2055 = vunpack.c.l.b16 %v479
    %v2056 = vunpack.c.h.b16 %v479
    %v2057 = vunpack.c.l.b16 %v480
    %v2058 = vunpack.c.h.b16 %v480
    %v2059 = vunpack.c.l.b16 %v481
    %v2060 = vunpack.c.h.b16 %v481
    %v2061 = vunpack.c.l.b16 %v482
    %v2062 = vunpack.c.h.b16 %v482
    %v2063 = vunpack.c.l.b16 %v483
    %v2064 = vunpack.c.h.b16 %v483
    %v2065 = vunpack.c.l.b16 %v484
    %v2066 = vunpack.c.h.b16 %v484
    %v2067 = vunpack.c.l.b16 %v485
    %v2068 = vunpack.c.h.b16 %v485
    %v2069 = vunpack.c.l.b16 %v486
    %v2070 = vunpack.c.h.b16 %v486
    %v2071 = vunpack.c.l.b16 %v487
    %v2072 = vunpack.c.h.b16 %v487
    %v2073 = vunpack.c.l.b16 %v488
    %v2074 = vunpack.c.h.b16 %v488
    %v2075 = vunpack.c.l.b16 %v489
    %v2076 = vunpack.c.h.b16 %v489
    %v2077 = vunpack.c.l.b16 %v490
    %v2078 = vunpack.c.h.b16 %v490
    %v2079 = vunpack.c.l.b16 %v491
    %v2080 = vunpack.c.h.b16 %v491
    %v2081 = vunpack.c.l.b16 %v492
    %v2082 = vunpack.c.h.b16 %v492
    %v2083 = vunpack.c.l.b16 %v493
    %v2084 = vunpack.c.h.b16 %v493
    %v2085 = vunpack.c.l.b16 %v494
    %v2086 = vunpack.c.h.b16 %v494
    %v2087 = vunpack.c.l.b16 %v495
    %v2088 = vunpack.c.h.b16 %v495
    %v2089 = vunpack.c.l.b16 %v496
    %v2090 = vunpack.c.h.b16 %v496
    %v2091 = vunpack.c.l.b16 %v497
    %v2092 = vunpack.c.h.b16 %v497
    %v2093 = vunpack.c.l.b16 %v498
    %v2094 = vunpack.c.h.b16 %v498
    %v2095 = vunpack.c.l.b16 %v499
    %v2096 = vunpack.c.h.b16 %v499
    %v2097 = vunpack.c.l.b16 %v500
    %v2098 = vunpack.c.h.b16 %v500
    %v2099 = vunpack.c.l.b16 %v501
    %v2100 = vunpack.c.h.b16 %v501
    %v2101 = vunpack.c.l.b16 %v502
    %v2102 = vunpack.c.h.b16 %v502
    %v2103 = vunpack.c.l.b16 %v503
    %v2104 = vunpack.c.h.b16 %v503
    %v2105 = vunpack.c.l.b16 %v504
    %v2106 = vunpack.c.h.b16 %v504
    %v2107 = vunpack.c.l.b16 %v505
    %v2108 = vunpack.c.h.b16 %v505
    %v2109 = vunpack.c.l.b16 %v506
    %v2110 = vunpack.c.h.b16 %v506
    %v2111 = vunpack.c.l.b16 %v507
    %v2112 = vunpack.c.h.b16 %v507
    %v2113 = vunpack.c.l.b16 %v508
    %v2114 = vunpack.c.h.b16 %v508
    %v2115 = vunpack.c.l.b16 %v509
    %v2116 = vunpack.c.h.b16 %v509
    %v2117 = vunpack.c.l.b16 %v510
    %v2118 = vunpack.c.h.b16 %v510
    %v2119 = vunpack.c.l.b16 %v511
    %v2120 = vunpack.c.h.b16 %v511
    %v2121 = vunpack.c.l.b16 %v512
    %v2122 = vunpack.c.h.b16 %v512
    %v2123 = vunpack.c.l.b16 %v513
    %v2124 = vunpack.c.h.b16 %v513
    %v2125 = vunpack.c.l.b16 %v514
    %v2126 = vunpack.c.h.b16 %v514
    %v2127 = vunpack.c.l.b16 %v515
    %v2128 = vunpack.c.h.b16 %v515
    %v2129 = vunpack.c.l.b16 %v516
    %v2130 = vunpack.c.h.b16 %v516
    %v2131 = vunpack.c.l.b16 %v517
    %v2132 = vunpack.c.h.b16 %v517
    %v2133 = vunpack.c.l.b16 %v518
    %v2134 = vunpack.c.h.b16 %v518
    %v2135 = vunpack.c.l.b16 %v519
    %v2136 = vunpack.c.h.b16 %v519
    %v2137 = vunpack.c.l.b16 %v520
    %v2138 = vunpack.c.h.b16 %v520
    %v2139 = vunpack.c.l.b16 %v521
    %v2140 = vunpack.c.h.b16 %v521
    %v2141 = vunpack.c.l.b16 %v522
    %v2142 = vunpack.c.h.b16 %v522
    %v2143 = vunpack.c.l.b16 %v523
    %v2144 = vunpack.c.h.b16 %v523
    %v2145 = vunpack.c.l.b16 %v524
    %v2146 = vunpack.c.h.b16 %v524
    %v2147 = vunpack.c.l.b16 %v525
    %v2148 = vunpack.c.h.b16 %v525
    %v2149 = vunpack.c.l.b16 %v526
    %v2150 = vunpack.c.h.b16 %v526
    %v2151 = vunpack.c.l.b16 %v527
    %v2152 = vunpack.c.h.b16 %v527
    %v2153 = vunpack.c.l.b16 %v528
    %v2154 = vunpack.c.h.b16 %v528
    %v2155 = vunpack.c.l.b16 %v529
    %v2156 = vunpack.c.h.b16 %v529
    %v2157 = vunpack.c.l.b16 %v530
    %v2158 = vunpack.c.h.b16 %v530
    %v2159 = vunpack.c.l.b16 %v531
    %v2160 = vunpack.c.h.b16 %v531
    %v2161 = vunpack.c.l.b16 %v532
    %v2162 = vunpack.c.h.b16 %v532
    %v2163 = vunpack.c.l.b16 %v533
    %v2164 = vunpack.c.h.b16 %v533
    %v2165 = vunpack.c.l.b16 %v534
    %v2166 = vunpack.c.h.b16 %v534
    %v2167 = vunpack.c.l.b16 %v535
    %v2168 = vunpack.c.h.b16 %v535
    %v2169 = vunpack.c.l.b16 %v536
    %v2170 = vunpack.c.h.b16 %v536
    %v2171 = vunpack.c.l.b16 %v537
    %v2172 = vunpack.c.h.b16 %v537
    %v2173 = vunpack.c.l.b16 %v538
    %v2174 = vunpack.c.h.b16 %v538
    %v2175 = vunpack.c.l.b16 %v539
    %v2176 = vunpack.c.h.b16 %v539
    %v2177 = vunpack.c.l.b16 %v540
    %v2178 = vunpack.c.h.b16 %v540
    %v2179 = vunpack.c.l.b16 %v541
    %v2180 = vunpack.c.h.b16 %v541
    %v2181 = vunpack.c.l.b16 %v542
    %v2182 = vunpack.c.h.b16 %v542
    %v2183 = vunpack.c.l.b16 %v543
    %v2184 = vunpack.c.h.b16 %v543
    %v2185 = vunpack.c.l.b16 %v544
    %v2186 = vunpack.c.h.b16 %v544
    %v2187 = vunpack.c.l.b16 %v545
    %v2188 = vunpack.c.h.b16 %v545
    %v2189 = vunpack.c.l.b16 %v546
    %v2190 = vunpack.c.h.b16 %v546
    %v2191 = vunpack.c.l.b16 %v547
    %v2192 = vunpack.c.h.b16 %v547
    %v2193 = vunpack.c.l.b16 %v548
    %v2194 = vunpack.c.h.b16 %v548
    %v2195 = vunpack.c.l.b16 %v549
    %v2196 = vunpack.c.h.b16 %v549
    %v2197 = vunpack.c.l.b16 %v550
    %v2198 = vunpack.c.h.b16 %v550
    %v2199 = vunpack.c.l.b16 %v551
    %v2200 = vunpack.c.h.b16 %v551
    %v2201 = vunpack.c.l.b16 %v552
    %v2202 = vunpack.c.h.b16 %v552
    %v2203 = vunpack.c.l.b16 %v553
    %v2204 = vunpack.c.h.b16 %v553
    %v2205 = vunpack.c.l.b16 %v554
    %v2206 = vunpack.c.h.b16 %v554
    %v2207 = vunpack.c.l.b16 %v555
    %v2208 = vunpack.c.h.b16 %v555
    %v2209 = vunpack.c.l.b16 %v556
    %v2210 = vunpack.c.h.b16 %v556
    %v2211 = vunpack.c.l.b16 %v557
    %v2212 = vunpack.c.h.b16 %v557
    %v2213 = vunpack.c.l.b16 %v558
    %v2214 = vunpack.c.h.b16 %v558
    %v2215 = vunpack.c.l.b16 %v559
    %v2216 = vunpack.c.h.b16 %v559
    %v2217 = vunpack.c.l.b16 %v560
    %v2218 = vunpack.c.h.b16 %v560
    %v2219 = vunpack.c.l.b16 %v561
    %v2220 = vunpack.c.h.b16 %v561
    %v2221 = vunpack.c.l.b16 %v562
    %v2222 = vunpack.c.h.b16 %v562
    %v2223 = vunpack.c.l.b16 %v563
    %v2224 = vunpack.c.h.b16 %v563
    %v2225 = vunpack.c.l.b16 %v564
    %v2226 = vunpack.c.h.b16 %v564
    %v2227 = vunpack.c.l.b16 %v565
    %v2228 = vunpack.c.h.b16 %v565
    %v2229 = vunpack.c.l.b16 %v566
    %v2230 = vunpack.c.h.b16 %v566
    %v2231 = vunpack.c.l.b16 %v567
    %v2232 = vunpack.c.h.b16 %v567
    %v2233 = vunpack.c.l.b16 %v568
    %v2234 = vunpack.c.h.b16 %v568
    %v2235 = vunpack.c.l.b16 %v569
    %v2236 = vunpack.c.h.b16 %v569
    %v2237 = vunpack.c.l.b16 %v570
    %v2238 = vunpack.c.h.b16 %v570
    %v2239 = vunpack.c.l.b16 %v571
    %v2240 = vunpack.c.h.b16 %v571
    %v2241 = vunpack.c.l.b16 %v572
    %v2242 = vunpack.c.h.b16 %v572
    %v2243 = vunpack.c.l.b16 %v573
    %v2244 = vunpack.c.h.b16 %v573
    %v2245 = vunpack.c.l.b16 %v574
    %v2246 = vunpack.c.h.b16 %v574
    %v2247 = vunpack.c.l.b16 %v575
    %v2248 = vunpack.c.h.b16 %v575
    %v2249 = vunpack.c.l.b16 %v576
    %v2250 = vunpack.c.h.b16 %v576
    %v2251 = vunpack.c.l.b16 %v577
    %v2252 = vunpack.c.h.b16 %v577
    %v2253 = vunpack.c.l.b16 %v578
    %v2254 = vunpack.c.h.b16 %v578
    %v2255 = vunpack.c.l.b16 %v579
    %v2256 = vunpack.c.h.b16 %v579
    %v2257 = vunpack.c.l.b16 %v580
    %v2258 = vunpack.c.h.b16 %v580
    %v2259 = vunpack.c.l.b16 %v581
    %v2260 = vunpack.c.h.b16 %v581
    %v2261 = vunpack.c.l.b16 %v582
    %v2262 = vunpack.c.h.b16 %v582
    %v2263 = vunpack.c.l.b16 %v583
    %v2264 = vunpack.c.h.b16 %v583
    %v2265 = vunpack.c.l.b16 %v584
    %v2266 = vunpack.c.h.b16 %v584
    %v2267 = vunpack.c.l.b16 %v585
    %v2268 = vunpack.c.h.b16 %v585
    %v2269 = vunpack.c.l.b16 %v586
    %v2270 = vunpack.c.h.b16 %v586
    %v2271 = vunpack.c.l.b16 %v587
    %v2272 = vunpack.c.h.b16 %v587
    %v2273 = vunpack.c.l.b16 %v588
    %v2274 = vunpack.c.h.b16 %v588
    %v2275 = vunpack.c.l.b16 %v589
    %v2276 = vunpack.c.h.b16 %v589
    %v2277 = vunpack.c.l.b16 %v590
    %v2278 = vunpack.c.h.b16 %v590
    %v2279 = vunpack.c.l.b16 %v591
    %v2280 = vunpack.c.h.b16 %v591
    %v2281 = vunpack.c.l.b16 %v592
    %v2282 = vunpack.c.h.b16 %v592
    %v2283 = vunpack.c.l.b16 %v593
    %v2284 = vunpack.c.h.b16 %v593
    %v2285 = vunpack.c.l.b16 %v594
    %v2286 = vunpack.c.h.b16 %v594
    %v2287 = vunpack.c.l.b16 %v595
    %v2288 = vunpack.c.h.b16 %v595
    %v2289 = vunpack.c.l.b16 %v596
    %v2290 = vunpack.c.h.b16 %v596
    %v2291 = vunpack.c.l.b16 %v597
    %v2292 = vunpack.c.h.b16 %v597
    %v2293 = vunpack.c.l.b16 %v598
    %v2294 = vunpack.c.h.b16 %v598
    %v2295 = vunpack.c.l.b16 %v599
    %v2296 = vunpack.c.h.b16 %v599
    %v2297 = vunpack.c.l.b16 %v600
    %v2298 = vunpack.c.h.b16 %v600
    %v2299 = vunpack.c.l.b16 %v601
    %v2300 = vunpack.c.h.b16 %v601
    %v2301 = vunpack.c.l.b16 %v602
    %v2302 = vunpack.c.h.b16 %v602
    %v2303 = vunpack.c.l.b16 %v603
    %v2304 = vunpack.c.h.b16 %v603
    %v2305 = vunpack.c.l.b16 %v604
    %v2306 = vunpack.c.h.b16 %v604
    %v2307 = vunpack.c.l.b16 %v605
    %v2308 = vunpack.c.h.b16 %v605
    %v2309 = vunpack.c.l.b16 %v606
    %v2310 = vunpack.c.h.b16 %v606
    %v2311 = vunpack.c.l.b16 %v607
    %v2312 = vunpack.c.h.b16 %v607
    %v2313 = vunpack.c.l.b16 %v608
    %v2314 = vunpack.c.h.b16 %v608
    %v2315 = vunpack.c.l.b16 %v609
    %v2316 = vunpack.c.h.b16 %v609
    %v2317 = vunpack.c.l.b16 %v610
    %v2318 = vunpack.c.h.b16 %v610
    %v2319 = vunpack.c.l.b16 %v611
    %v2320 = vunpack.c.h.b16 %v611
    %v2321 = vunpack.c.l.b16 %v612
    %v2322 = vunpack.c.h.b16 %v612
    %v2323 = vunpack.c.l.b16 %v613
    %v2324 = vunpack.c.h.b16 %v613
    %v2325 = vunpack.c.l.b16 %v614
    %v2326 = vunpack.c.h.b16 %v614
    %v2327 = vunpack.c.l.b16 %v615
    %v2328 = vunpack.c.h.b16 %v615
    %v2329 = vunpack.c.l.b16 %v616
    %v2330 = vunpack.c.h.b16 %v616
    %v2331 = vunpack.c.l.b16 %v617
    %v2332 = vunpack.c.h.b16 %v617
    %v2333 = vunpack.c.l.b16 %v618
    %v2334 = vunpack.c.h.b16 %v618
    %v2335 = vunpack.c.l.b16 %v619
    %v2336 = vunpack.c.h.b16 %v619
    %v2337 = vunpack.c.l.b16 %v620
    %v2338 = vunpack.c.h.b16 %v620
    %v2339 = vpack.c.b16 %v1319, %v1315
    %v2340 = vpack.c.b16 %v1320, %v1316
    %v2341 = vpack.c.b16 %v1321, %v1317
    %v2342 = vpack.c.b16 %v1322, %v1318
    %v2343 = vpack.c.b16 %v1327, %v1323
    %v2344 = vpack.c.b16 %v1328, %v1324
    %v2345 = vpack.c.b16 %v1329, %v1325
    %v2346 = vpack.c.b16 %v1330, %v1326
    %v2347 = vpack.c.b16 %v1335, %v1331
    %v2348 = vpack.c.b16 %v1336, %v1332
    %v2349 = vpack.c.b16 %v1337, %v1333
    %v2350 = vpack.c.b16 %v1338, %v1334
    %v2351 = vpack.c.b16 %v1343, %v1339
    %v2352 = vpack.c.b16 %v1344, %v1340
    %v2353 = vpack.c.b16 %v1345, %v1341
    %v2354 = vpack.c.b16 %v1346, %v1342
    %v2355 = vpack.c.b16 %v1351, %v1347
    %v2356 = vpack.c.b16 %v1352, %v1348
    %v2357 = vpack.c.b16 %v1353, %v1349
    %v2358 = vpack.c.b16 %v1354, %v1350
    %v2359 = vpack.c.b16 %v1359, %v1355
    %v2360 = vpack.c.b16 %v1360, %v1356
    %v2361 = vpack.c.b16 %v1361, %v1357
    %v2362 = vpack.c.b16 %v1362, %v1358
    %v2363 = vpack.c.b16 %v1367, %v1363
    %v2364 = vpack.c.b16 %v1368, %v1364
    %v2365 = vpack.c.b16 %v1369, %v1365
    %v2366 = vpack.c.b16 %v1370, %v1366
    %v2367 = vpack.c.b16 %v1375, %v1371
    %v2368 = vpack.c.b16 %v1376, %v1372
    %v2369 = vpack.c.b16 %v1377, %v1373
    %v2370 = vpack.c.b16 %v1378, %v1374
    %v2371 = vpack.c.b16 %v1383, %v1379
    %v2372 = vpack.c.b16 %v1384, %v1380
    %v2373 = vpack.c.b16 %v1385, %v1381
    %v2374 = vpack.c.b16 %v1386, %v1382
    %v2375 = vpack.c.b16 %v1391, %v1387
    %v2376 = vpack.c.b16 %v1392, %v1388
    %v2377 = vpack.c.b16 %v1393, %v1389
    %v2378 = vpack.c.b16 %v1394, %v1390
    %v2379 = vpack.c.b16 %v1399, %v1395
    %v2380 = vpack.c.b16 %v1400, %v1396
    %v2381 = vpack.c.b16 %v1401, %v1397
    %v2382 = vpack.c.b16 %v1402, %v1398
    %v2383 = vpack.c.b16 %v1407, %v1403
    %v2384 = vpack.c.b16 %v1408, %v1404
    %v2385 = vpack.c.b16 %v1409, %v1405
    %v2386 = vpack.c.b16 %v1410, %v1406
    %v2387 = vpack.c.b16 %v1415, %v1411
    %v2388 = vpack.c.b16 %v1416, %v1412
    %v2389 = vpack.c.b16 %v1417, %v1413
    %v2390 = vpack.c.b16 %v1418, %v1414
    %v2391 = vpack.c.b16 %v1423, %v1419
    %v2392 = vpack.c.b16 %v1424, %v1420
    %v2393 = vpack.c.b16 %v1425, %v1421
    %v2394 = vpack.c.b16 %v1426, %v1422
    %v2395 = vpack.c.b16 %v1431, %v1427
    %v2396 = vpack.c.b16 %v1432, %v1428
    %v2397 = vpack.c.b16 %v1433, %v1429
    %v2398 = vpack.c.b16 %v1434, %v1430
    %v2399 = vpack.c.b16 %v1439, %v1435
    %v2400 = vpack.c.b16 %v1440, %v1436
    %v2401 = vpack.c.b16 %v1441, %v1437
    %v2402 = vpack.c.b16 %v1442, %v1438
    %v2403 = vpack.c.b16 %v1447, %v1443
    %v2404 = vpack.c.b16 %v1448, %v1444
    %v2405 = vpack.c.b16 %v1449, %v1445
    %v2406 = vpack.c.b16 %v1450, %v1446
    %v2407 = vpack.c.b16 %v1455, %v1451
    %v2408 = vpack.c.b16 %v1456, %v1452
    %v2409 = vpack.c.b16 %v1457, %v1453
    %v2410 = vpack.c.b16 %v1458, %v1454
    %v2411 = vpack.c.b16 %v1463, %v1459
    %v2412 = vpack.c.b16 %v1464, %v1460
    %v2413 = vpack.c.b16 %v1465, %v1461
    %v2414 = vpack.c.b16 %v1466, %v1462
    %v2415 = vpack.c.b16 %v1471, %v1467
    %v2416 = vpack.c.b16 %v1472, %v1468
    %v2417 = vpack.c.b16 %v1473, %v1469
    %v2418 = vpack.c.b16 %v1474, %v1470
    %v2419 = vpack.c.b16 %v1479, %v1475
    %v2420 = vpack.c.b16 %v1480, %v1476
    %v2421 = vpack.c.b16 %v1481, %v1477
    %v2422 = vpack.c.b16 %v1482, %v1478
    %v2423 = vpack.c.b16 %v1487, %v1483
    %v2424 = vpack.c.b16 %v1488, %v1484
    %v2425 = vpack.c.b16 %v1489, %v1485
    %v2426 = vpack.c.b16 %v1490, %v1486
    %v2427 = vpack.c.b16 %v1495, %v1491
    %v2428 = vpack.c.b16 %v1496, %v1492
    %v2429 = vpack.c.b16 %v1497, %v1493
    %v2430 = vpack.c.b16 %v1498, %v1494
    %v2431 = vpack.c.b16 %v1503, %v1499
    %v2432 = vpack.c.b16 %v1504, %v1500
    %v2433 = vpack.c.b16 %v1505, %v1501
    %v2434 = vpack.c.b16 %v1506, %v1502
    %v2435 = vpack.c.b16 %v1511, %v1507
    %v2436 = vpack.c.b16 %v1512, %v1508
    %v2437 = vpack.c.b16 %v1513, %v1509
    %v2438 = vpack.c.b16 %v1514, %v1510
    %v2439 = vpack.c.b16 %v1519, %v1515
    %v2440 = vpack.c.b16 %v1520, %v1516
    %v2441 = vpack.c.b16 %v1521, %v1517
    %v2442 = vpack.c.b16 %v1522, %v1518
    %v2443 = vpack.c.b16 %v1527, %v1523
    %v2444 = vpack.c.b16 %v1528, %v1524
    %v2445 = vpack.c.b16 %v1529, %v1525
    %v2446 = vpack.c.b16 %v1530, %v1526
    %v2447 = vpack.c.b16 %v1535, %v1531
    %v2448 = vpack.c.b16 %v1536, %v1532
    %v2449 = vpack.c.b16 %v1537, %v1533
    %v2450 = vpack.c.b16 %v1538, %v1534
    %v2451 = vpack.c.b16 %v1543, %v1539
    %v2452 = vpack.c.b16 %v1544, %v1540
    %v2453 = vpack.c.b16 %v1545, %v1541
    %v2454 = vpack.c.b16 %v1546, %v1542
    %v2455 = vpack.c.b16 %v1551, %v1547
    %v2456 = vpack.c.b16 %v1552, %v1548
    %v2457 = vpack.c.b16 %v1553, %v1549
    %v2458 = vpack.c.b16 %v1554, %v1550
    %v2459 = vpack.c.b16 %v1559, %v1555
    %v2460 = vpack.c.b16 %v1560, %v1556
    %v2461 = vpack.c.b16 %v1561, %v1557
    %v2462 = vpack.c.b16 %v1562, %v1558
    %v2463 = vpack.c.b16 %v1567, %v1563
    %v2464 = vpack.c.b16 %v1568, %v1564
    %v2465 = vpack.c.b16 %v1569, %v1565
    %v2466 = vpack.c.b16 %v1570, %v1566
    %v2467 = vpack.c.b16 %v1575, %v1571
    %v2468 = vpack.c.b16 %v1576, %v1572
    %v2469 = vpack.c.b16 %v1577, %v1573
    %v2470 = vpack.c.b16 %v1578, %v1574
    %v2471 = vpack.c.b16 %v1583, %v1579
    %v2472 = vpack.c.b16 %v1584, %v1580
    %v2473 = vpack.c.b16 %v1585, %v1581
    %v2474 = vpack.c.b16 %v1586, %v1582
    %v2475 = vpack.c.b16 %v1591, %v1587
    %v2476 = vpack.c.b16 %v1592, %v1588
    %v2477 = vpack.c.b16 %v1593, %v1589
    %v2478 = vpack.c.b16 %v1594, %v1590
    %v2479 = vpack.c.b16 %v1599, %v1595
    %v2480 = vpack.c.b16 %v1600, %v1596
    %v2481 = vpack.c.b16 %v1601, %v1597
    %v2482 = vpack.c.b16 %v1602, %v1598
    %v2483 = vpack.c.b16 %v1607, %v1603
    %v2484 = vpack.c.b16 %v1608, %v1604
    %v2485 = vpack.c.b16 %v1609, %v1605
    %v2486 = vpack.c.b16 %v1610, %v1606
    %v2487 = vpack.c.b16 %v1615, %v1611
    %v2488 = vpack.c.b16 %v1616, %v1612
    %v2489 = vpack.c.b16 %v1617, %v1613
    %v2490 = vpack.c.b16 %v1618, %v1614
    %v2491 = vpack.c.b16 %v1623, %v1619
    %v2492 = vpack.c.b16 %v1624, %v1620
    %v2493 = vpack.c.b16 %v1625, %v1621
    %v2494 = vpack.c.b16 %v1626, %v1622
    %v2495 = vpack.c.b16 %v1631, %v1627
    %v2496 = vpack.c.b16 %v1632, %v1628
    %v2497 = vpack.c.b16 %v1633, %v1629
    %v2498 = vpack.c.b16 %v1634, %v1630
    %v2499 = vpack.c.b16 %v1639, %v1635
    %v2500 = vpack.c.b16 %v1640, %v1636
    %v2501 = vpack.c.b16 %v1641, %v1637
    %v2502 = vpack.c.b16 %v1642, %v1638
    %v2503 = vpack.c.b16 %v1647, %v1643
    %v2504 = vpack.c.b16 %v1648, %v1644
    %v2505 = vpack.c.b16 %v1649, %v1645
    %v2506 = vpack.c.b16 %v1650, %v1646
    %v2507 = vpack.c.b16 %v1655, %v1651
    %v2508 = vpack.c.b16 %v1656, %v1652
    %v2509 = vpack.c.b16 %v1657, %v1653
    %v2510 = vpack.c.b16 %v1658, %v1654
    %v2511 = vpack.c.b16 %v1663, %v1659
    %v2512 = vpack.c.b16 %v1664, %v1660
    %v2513 = vpack.c.b16 %v1665, %v1661
    %v2514 = vpack.c.b16 %v1666, %v1662
    %v2515 = vpack.c.b16 %v1671, %v1667
    %v2516 = vpack.c.b16 %v1672, %v1668
    %v2517 = vpack.c.b16 %v1673, %v1669
    %v2518 = vpack.c.b16 %v1674, %v1670
    %v2519 = vpack.c.b16 %v1679, %v1675
    %v2520 = vpack.c.b16 %v1680, %v1676
    %v2521 = vpack.c.b16 %v1681, %v1677
    %v2522 = vpack.c.b16 %v1682, %v1678
    %v2523 = vpack.c.b16 %v1687, %v1683
    %v2524 = vpack.c.b16 %v1688, %v1684
    %v2525 = vpack.c.b16 %v1689, %v1685
    %v2526 = vpack.c.b16 %v1690, %v1686
    %v2527 = vpack.c.b16 %v1695, %v1691
    %v2528 = vpack.c.b16 %v1696, %v1692
    %v2529 = vpack.c.b16 %v1697, %v1693
    %v2530 = vpack.c.b16 %v1698, %v1694
    %v2531 = vpack.c.b16 %v1703, %v1699
    %v2532 = vpack.c.b16 %v1704, %v1700
    %v2533 = vpack.c.b16 %v1705, %v1701
    %v2534 = vpack.c.b16 %v1706, %v1702
    %v2535 = vpack.c.b16 %v1711, %v1707
    %v2536 = vpack.c.b16 %v1712, %v1708
    %v2537 = vpack.c.b16 %v1713, %v1709
    %v2538 = vpack.c.b16 %v1714, %v1710
    %v2539 = vpack.c.b16 %v1719, %v1715
    %v2540 = vpack.c.b16 %v1720, %v1716
    %v2541 = vpack.c.b16 %v1721, %v1717
    %v2542 = vpack.c.b16 %v1722, %v1718
    %v2543 = vpack.c.b16 %v1727, %v1723
    %v2544 = vpack.c.b16 %v1728, %v1724
    %v2545 = vpack.c.b16 %v1729, %v1725
    %v2546 = vpack.c.b16 %v1730, %v1726
    %v2547 = vpack.c.b16 %v1735, %v1731
    %v2548 = vpack.c.b16 %v1736, %v1732
    %v2549 = vpack.c.b16 %v1737, %v1733
    %v2550 = vpack.c.b16 %v1738, %v1734
    %v2551 = vpack.c.b16 %v1743, %v1739
    %v2552 = vpack.c.b16 %v1744, %v1740
    %v2553 = vpack.c.b16 %v1745, %v1741
    %v2554 = vpack.c.b16 %v1746, %v1742
    %v2555 = vpack.c.b16 %v1751, %v1747
    %v2556 = vpack.c.b16 %v1752, %v1748
    %v2557 = vpack.c.b16 %v1753, %v1749
    %v2558 = vpack.c.b16 %v1754, %v1750
    %v2559 = vpack.c.b16 %v1759, %v1755
    %v2560 = vpack.c.b16 %v1760, %v1756
    %v2561 = vpack.c.b16 %v1761, %v1757
    %v2562 = vpack.c.b16 %v1762, %v1758
    %v2563 = vpack.c.b16 %v1767, %v1763
    %v2564 = vpack.c.b16 %v1768, %v1764
    %v2565 = vpack.c.b16 %v1769, %v1765
    %v2566 = vpack.c.b16 %v1770, %v1766
    %v2567 = vpack.c.b16 %v1775, %v1771
    %v2568 = vpack.c.b16 %v1776, %v1772
    %v2569 = vpack.c.b16 %v1777, %v1773
    %v2570 = vpack.c.b16 %v1778, %v1774
    %v2571 = vpack.c.b16 %v1783, %v1779
    %v2572 = vpack.c.b16 %v1784, %v1780
    %v2573 = vpack.c.b16 %v1785, %v1781
    %v2574 = vpack.c.b16 %v1786, %v1782
    %v2575 = vpack.c.b16 %v1791, %v1787
    %v2576 = vpack.c.b16 %v1792, %v1788
    %v2577 = vpack.c.b16 %v1793, %v1789
    %v2578 = vpack.c.b16 %v1794, %v1790
    %v2579 = vpack.c.b16 %v1799, %v1795
    %v2580 = vpack.c.b16 %v1800, %v1796
    %v2581 = vpack.c.b16 %v1801, %v1797
    %v2582 = vpack.c.b16 %v1802, %v1798
    %v2583 = vpack.c.b16 %v1807, %v1803
    %v2584 = vpack.c.b16 %v1808, %v1804
    %v2585 = vpack.c.b16 %v1809, %v1805
    %v2586 = vpack.c.b16 %v1810, %v1806
    %v2587 = vpack.c.b16 %v1815, %v1811
    %v2588 = vpack.c.b16 %v1816, %v1812
    %v2589 = vpack.c.b16 %v1817, %v1813
    %v2590 = vpack.c.b16 %v1818, %v1814
    %v2591 = vpack.c.b16 %v1823, %v1819
    %v2592 = vpack.c.b16 %v1824, %v1820
    %v2593 = vpack.c.b16 %v1825, %v1821
    %v2594 = vpack.c.b16 %v1826, %v1822
    %v2595 = vpack.c.b16 %v1831, %v1827
    %v2596 = vpack.c.b16 %v1832, %v1828
    %v2597 = vpack.c.b16 %v1833, %v1829
    %v2598 = vpack.c.b16 %v1834, %v1830
    %v2599 = vpack.c.b16 %v1839, %v1835
    %v2600 = vpack.c.b16 %v1840, %v1836
    %v2601 = vpack.c.b16 %v1841, %v1837
    %v2602 = vpack.c.b16 %v1842, %v1838
    %v2603 = vpack.c.b16 %v1847, %v1843
    %v2604 = vpack.c.b16 %v1848, %v1844
    %v2605 = vpack.c.b16 %v1849, %v1845
    %v2606 = vpack.c.b16 %v1850, %v1846
    %v2607 = vpack.c.b16 %v1855, %v1851
    %v2608 = vpack.c.b16 %v1856, %v1852
    %v2609 = vpack.c.b16 %v1857, %v1853
    %v2610 = vpack.c.b16 %v1858, %v1854
    %v2611 = vpack.c.b16 %v1863, %v1859
    %v2612 = vpack.c.b16 %v1864, %v1860
    %v2613 = vpack.c.b16 %v1865, %v1861
    %v2614 = vpack.c.b16 %v1866, %v1862
    %v2615 = vpack.c.b16 %v1871, %v1867
    %v2616 = vpack.c.b16 %v1872, %v1868
    %v2617 = vpack.c.b16 %v1873, %v1869
    %v2618 = vpack.c.b16 %v1874, %v1870
    %v2619 = vpack.c.b16 %v1879, %v1875
    %v2620 = vpack.c.b16 %v1880, %v1876
    %v2621 = vpack.c.b16 %v1881, %v1877
    %v2622 = vpack.c.b16 %v1882, %v1878
    %v2623 = vpack.c.b16 %v1887, %v1883
    %v2624 = vpack.c.b16 %v1888, %v1884
    %v2625 = vpack.c.b16 %v1889, %v1885
    %v2626 = vpack.c.b16 %v1890, %v1886
    %v2627 = vpack.c.b16 %v1895, %v1891
    %v2628 = vpack.c.b16 %v1896, %v1892
    %v2629 = vpack.c.b16 %v1897, %v1893
    %v2630 = vpack.c.b16 %v1898, %v1894
    %v2631 = vpack.c.b16 %v1903, %v1899
    %v2632 = vpack.c.b16 %v1904, %v1900
    %v2633 = vpack.c.b16 %v1905, %v1901
    %v2634 = vpack.c.b16 %v1906, %v1902
    %v2635 = vpack.c.b16 %v1911, %v1907
    %v2636 = vpack.c.b16 %v1912, %v1908
    %v2637 = vpack.c.b16 %v1913, %v1909
    %v2638 = vpack.c.b16 %v1914, %v1910
    %v2639 = vpack.c.b16 %v1919, %v1915
    %v2640 = vpack.c.b16 %v1920, %v1916
    %v2641 = vpack.c.b16 %v1921, %v1917
    %v2642 = vpack.c.b16 %v1922, %v1918
    %v2643 = vpack.c.b16 %v1927, %v1923
    %v2644 = vpack.c.b16 %v1928, %v1924
    %v2645 = vpack.c.b16 %v1929, %v1925
    %v2646 = vpack.c.b16 %v1930, %v1926
    %v2647 = vpack.c.b16 %v1935, %v1931
    %v2648 = vpack.c.b16 %v1936, %v1932
    %v2649 = vpack.c.b16 %v1937, %v1933
    %v2650 = vpack.c.b16 %v1938, %v1934
    %v2651 = vpack.c.b16 %v1943, %v1939
    %v2652 = vpack.c.b16 %v1944, %v1940
    %v2653 = vpack.c.b16 %v1945, %v1941
    %v2654 = vpack.c.b16 %v1946, %v1942
    %v2655 = vpack.c.b16 %v1951, %v1947
    %v2656 = vpack.c.b16 %v1952, %v1948
    %v2657 = vpack.c.b16 %v1953, %v1949
    %v2658 = vpack.c.b16 %v1954, %v1950
    %v2659 = vpack.c.b16 %v1959, %v1955
    %v2660 = vpack.c.b16 %v1960, %v1956
    %v2661 = vpack.c.b16 %v1961, %v1957
    %v2662 = vpack.c.b16 %v1962, %v1958
    %v2663 = vpack.c.b16 %v1967, %v1963
    %v2664 = vpack.c.b16 %v1968, %v1964
    %v2665 = vpack.c.b16 %v1969, %v1965
    %v2666 = vpack.c.b16 %v1970, %v1966
    %v2667 = vpack.c.b16 %v1975, %v1971
    %v2668 = vpack.c.b16 %v1976, %v1972
    %v2669 = vpack.c.b16 %v1977, %v1973
    %v2670 = vpack.c.b16 %v1978, %v1974
    %v2671 = vpack.c.b16 %v1983, %v1979
    %v2672 = vpack.c.b16 %v1984, %v1980
    %v2673 = vpack.c.b16 %v1985, %v1981
    %v2674 = vpack.c.b16 %v1986, %v1982
    %v2675 = vpack.c.b16 %v1991, %v1987
    %v2676 = vpack.c.b16 %v1992, %v1988
    %v2677 = vpack.c.b16 %v1993, %v1989
    %v2678 = vpack.c.b16 %v1994, %v1990
    %v2679 = vpack.c.b16 %v1999, %v1995
    %v2680 = vpack.c.b16 %v2000, %v1996
    %v2681 = vpack.c.b16 %v2001, %v1997
    %v2682 = vpack.c.b16 %v2002, %v1998
    %v2683 = vpack.c.b16 %v2007, %v2003
    %v2684 = vpack.c.b16 %v2008, %v2004
    %v2685 = vpack.c.b16 %v2009, %v2005
    %v2686 = vpack.c.b16 %v2010, %v2006
    %v2687 = vpack.c.b16 %v2015, %v2011
    %v2688 = vpack.c.b16 %v2016, %v2012
    %v2689 = vpack.c.b16 %v2017, %v2013
    %v2690 = vpack.c.b16 %v2018, %v2014
    %v2691 = vpack.c.b16 %v2023, %v2019
    %v2692 = vpack.c.b16 %v2024, %v2020
    %v2693 = vpack.c.b16 %v2025, %v2021
    %v2694 = vpack.c.b16 %v2026, %v2022
    %v2695 = vpack.c.b16 %v2031, %v2027
    %v2696 = vpack.c.b16 %v2032, %v2028
    %v2697 = vpack.c.b16 %v2033, %v2029
    %v2698 = vpack.c.b16 %v2034, %v2030
    %v2699 = vpack.c.b16 %v2039, %v2035
    %v2700 = vpack.c.b16 %v2040, %v2036
    %v2701 = vpack.c.b16 %v2041, %v2037
    %v2702 = vpack.c.b16 %v2042, %v2038
    %v2703 = vpack.c.b16 %v2047, %v2043
    %v2704 = vpack.c.b16 %v2048, %v2044
    %v2705 = vpack.c.b16 %v2049, %v2045
    %v2706 = vpack.c.b16 %v2050, %v2046
    %v2707 = vpack.c.b16 %v2055, %v2051
    %v2708 = vpack.c.b16 %v2056, %v2052
    %v2709 = vpack.c.b16 %v2057, %v2053
    %v2710 = vpack.c.b16 %v2058, %v2054
    %v2711 = vpack.c.b16 %v2063, %v2059
    %v2712 = vpack.c.b16 %v2064, %v2060
    %v2713 = vpack.c.b16 %v2065, %v2061
    %v2714 = vpack.c.b16 %v2066, %v2062
    %v2715 = vpack.c.b16 %v2071, %v2067
    %v2716 = vpack.c.b16 %v2072, %v2068
    %v2717 = vpack.c.b16 %v2073, %v2069
    %v2718 = vpack.c.b16 %v2074, %v2070
    %v2719 = vpack.c.b16 %v2079, %v2075
    %v2720 = vpack.c.b16 %v2080, %v2076
    %v2721 = vpack.c.b16 %v2081, %v2077
    %v2722 = vpack.c.b16 %v2082, %v2078
    %v2723 = vpack.c.b16 %v2087, %v2083
    %v2724 = vpack.c.b16 %v2088, %v2084
    %v2725 = vpack.c.b16 %v2089, %v2085
    %v2726 = vpack.c.b16 %v2090, %v2086
    %v2727 = vpack.c.b16 %v2095, %v2091
    %v2728 = vpack.c.b16 %v2096, %v2092
    %v2729 = vpack.c.b16 %v2097, %v2093
    %v2730 = vpack.c.b16 %v2098, %v2094
    %v2731 = vpack.c.b16 %v2103, %v2099
    %v2732 = vpack.c.b16 %v2104, %v2100
    %v2733 = vpack.c.b16 %v2105, %v2101
    %v2734 = vpack.c.b16 %v2106, %v2102
    %v2735 = vpack.c.b16 %v2111, %v2107
    %v2736 = vpack.c.b16 %v2112, %v2108
    %v2737 = vpack.c.b16 %v2113, %v2109
    %v2738 = vpack.c.b16 %v2114, %v2110
    %v2739 = vpack.c.b16 %v2119, %v2115
    %v2740 = vpack.c.b16 %v2120, %v2116
    %v2741 = vpack.c.b16 %v2121, %v2117
    %v2742 = vpack.c.b16 %v2122, %v2118
    %v2743 = vpack.c.b16 %v2127, %v2123
    %v2744 = vpack.c.b16 %v2128, %v2124
    %v2745 = vpack.c.b16 %v2129, %v2125
    %v2746 = vpack.c.b16 %v2130, %v2126
    %v2747 = vpack.c.b16 %v2135, %v2131
    %v2748 = vpack.c.b16 %v2136, %v2132
    %v2749 = vpack.c.b16 %v2137, %v2133
    %v2750 = vpack.c.b16 %v2138, %v2134
    %v2751 = vpack.c.b16 %v2143, %v2139
    %v2752 = vpack.c.b16 %v2144, %v2140
    %v2753 = vpack.c.b16 %v2145, %v2141
    %v2754 = vpack.c.b16 %v2146, %v2142
    %v2755 = vpack.c.b16 %v2151, %v2147
    %v2756 = vpack.c.b16 %v2152, %v2148
    %v2757 = vpack.c.b16 %v2153, %v2149
    %v2758 = vpack.c.b16 %v2154, %v2150
    %v2759 = vpack.c.b16 %v2159, %v2155
    %v2760 = vpack.c.b16 %v2160, %v2156
    %v2761 = vpack.c.b16 %v2161, %v2157
    %v2762 = vpack.c.b16 %v2162, %v2158
    %v2763 = vpack.c.b16 %v2167, %v2163
    %v2764 = vpack.c.b16 %v2168, %v2164
    %v2765 = vpack.c.b16 %v2169, %v2165
    %v2766 = vpack.c.b16 %v2170, %v2166
    %v2767 = vpack.c.b16 %v2175, %v2171
    %v2768 = vpack.c.b16 %v2176, %v2172
    %v2769 = vpack.c.b16 %v2177, %v2173
    %v2770 = vpack.c.b16 %v2178, %v2174
    %v2771 = vpack.c.b16 %v2183, %v2179
    %v2772 = vpack.c.b16 %v2184, %v2180
    %v2773 = vpack.c.b16 %v2185, %v2181
    %v2774 = vpack.c.b16 %v2186, %v2182
    %v2775 = vpack.c.b16 %v2191, %v2187
    %v2776 = vpack.c.b16 %v2192, %v2188
    %v2777 = vpack.c.b16 %v2193, %v2189
    %v2778 = vpack.c.b16 %v2194, %v2190
    %v2779 = vpack.c.b16 %v2199, %v2195
    %v2780 = vpack.c.b16 %v2200, %v2196
    %v2781 = vpack.c.b16 %v2201, %v2197
    %v2782 = vpack.c.b16 %v2202, %v2198
    %v2783 = vpack.c.b16 %v2207, %v2203
    %v2784 = vpack.c.b16 %v2208, %v2204
    %v2785 = vpack.c.b16 %v2209, %v2205
    %v2786 = vpack.c.b16 %v2210, %v2206
    %v2787 = vpack.c.b16 %v2215, %v2211
    %v2788 = vpack.c.b16 %v2216, %v2212
    %v2789 = vpack.c.b16 %v2217, %v2213
    %v2790 = vpack.c.b16 %v2218, %v2214
    %v2791 = vpack.c.b16 %v2223, %v2219
    %v2792 = vpack.c.b16 %v2224, %v2220
    %v2793 = vpack.c.b16 %v2225, %v2221
    %v2794 = vpack.c.b16 %v2226, %v2222
    %v2795 = vpack.c.b16 %v2231, %v2227
    %v2796 = vpack.c.b16 %v2232, %v2228
    %v2797 = vpack.c.b16 %v2233, %v2229
    %v2798 = vpack.c.b16 %v2234, %v2230
    %v2799 = vpack.c.b16 %v2239, %v2235
    %v2800 = vpack.c.b16 %v2240, %v2236
    %v2801 = vpack.c.b16 %v2241, %v2237
    %v2802 = vpack.c.b16 %v2242, %v2238
    %v2803 = vpack.c.b16 %v2247, %v2243
    %v2804 = vpack.c.b16 %v2248, %v2244
    %v2805 = vpack.c.b16 %v2249, %v2245
    %v2806 = vpack.c.b16 %v2250, %v2246
    %v2807 = vpack.c.b16 %v2255, %v2251
    %v2808 = vpack.c.b16 %v2256, %v2252
    %v2809 = vpack.c.b16 %v2257, %v2253
    %v2810 = vpack.c.b16 %v2258, %v2254
    %v2811 = vpack.c.b16 %v2263, %v2259
    %v2812 = vpack.c.b16 %v2264, %v2260
    %v2813 = vpack.c.b16 %v2265, %v2261
    %v2814 = vpack.c.b16 %v2266, %v2262
    %v2815 = vpack.c.b16 %v2271, %v2267
    %v2816 = vpack.c.b16 %v2272, %v2268
    %v2817 = vpack.c.b16 %v2273, %v2269
    %v2818 = vpack.c.b16 %v2274, %v2270
    %v2819 = vpack.c.b16 %v2279, %v2275
    %v2820 = vpack.c.b16 %v2280, %v2276
    %v2821 = vpack.c.b16 %v2281, %v2277
    %v2822 = vpack.c.b16 %v2282, %v2278
    %v2823 = vpack.c.b16 %v2287, %v2283
    %v2824 = vpack.c.b16 %v2288, %v2284
    %v2825 = vpack.c.b16 %v2289, %v2285
    %v2826 = vpack.c.b16 %v2290, %v2286
    %v2827 = vpack.c.b16 %v2295, %v2291
    %v2828 = vpack.c.b16 %v2296, %v2292
    %v2829 = vpack.c.b16 %v2297, %v2293
    %v2830 = vpack.c.b16 %v2298, %v2294
    %v2831 = vpack.c.b16 %v2303, %v2299
    %v2832 = vpack.c.b16 %v2304, %v2300
    %v2833 = vpack.c.b16 %v2305, %v2301
    %v2834 = vpack.c.b16 %v2306, %v2302
    %v2835 = vpack.c.b16 %v2311, %v2307
    %v2836 = vpack.c.b16 %v2312, %v2308
    %v2837 = vpack.c.b16 %v2313, %v2309
    %v2838 = vpack.c.b16 %v2314, %v2310
    %v2839 = vpack.c.b16 %v2319, %v2315
    %v2840 = vpack.c.b16 %v2320, %v2316
    %v2841 = vpack.c.b16 %v2321, %v2317
    %v2842 = vpack.c.b16 %v2322, %v2318
    %v2843 = vpack.c.b16 %v2327, %v2323
    %v2844 = vpack.c.b16 %v2328, %v2324
    %v2845 = vpack.c.b16 %v2329, %v2325
    %v2846 = vpack.c.b16 %v2330, %v2326
    %v2847 = vpack.c.b16 %v2335, %v2331
    %v2848 = vpack.c.b16 %v2336, %v2332
    %v2849 = vpack.c.b16 %v2337, %v2333
    %v2850 = vpack.c.b16 %v2338, %v2334
    %3363 = vmatprep.subr.bf16.mxu0 %v2340
    %3364 = vmatpush1.bf16.msra.mxu0 %v2339
    %3365 = vmatprep.subr.bf16.mxu0 %v2344
    %3366 = vmatpush1.bf16.msra.mxu0 %v2343
    %3367 = vmatprep.subr.bf16.mxu0 %v2348
    %3368 = vmatpush1.bf16.msra.mxu0 %v2347
    %3369 = vmatprep.subr.bf16.mxu0 %v2352
    %3370 = vmatpush1.bf16.msra.mxu0 %v2351
    %3371 = vmatprep.subr.bf16.mxu0 %v2356
    %3372 = vmatpush1.bf16.msra.mxu0 %v2355
    %3373 = vmatprep.subr.bf16.mxu0 %v2360
    %3374 = vmatpush1.bf16.msra.mxu0 %v2359
    %3375 = vmatprep.subr.bf16.mxu0 %v2364
    %3376 = vmatpush1.bf16.msra.mxu0 %v2363
    %3377 = vmatprep.subr.bf16.mxu0 %v2368
    %3378 = vmatpush1.bf16.msra.mxu0 %v2367
    %3379 = vmatprep.subr.bf16.mxu0 %v2372
    %3380 = vmatpush1.bf16.msra.mxu0 %v2371
    %3381 = vmatprep.subr.bf16.mxu0 %v2376
    %3382 = vmatpush1.bf16.msra.mxu0 %v2375
    %3383 = vmatprep.subr.bf16.mxu0 %v2380
    %3384 = vmatpush1.bf16.msra.mxu0 %v2379
    %3385 = vmatprep.subr.bf16.mxu0 %v2384
    %3386 = vmatpush1.bf16.msra.mxu0 %v2383
    %3387 = vmatprep.subr.bf16.mxu0 %v2388
    %3388 = vmatpush1.bf16.msra.mxu0 %v2387
    %3389 = vmatprep.subr.bf16.mxu0 %v2392
    %3390 = vmatpush1.bf16.msra.mxu0 %v2391
    %3391 = vmatprep.subr.bf16.mxu0 %v2396
    %3392 = vmatpush1.bf16.msra.mxu0 %v2395
    %3393 = vmatprep.subr.bf16.mxu0 %v2400
    %3394 = vmatpush1.bf16.msra.mxu0 %v2399
    %3395 = vmatprep.mubr.bf16.mxu0 %v740
    %3396 = vmatmul.mubr.bf16.gmra.mrb[0].mxu0 %v739
    %v3397 = vpop.f32.mrb[0].mxu0
    %v3398 = vadd.f32 %v626, %v3397
    %v3399 = vpop.f32.mrb[0].mxu0
    %v3400 = vadd.f32 %v630, %v3399
    %v3401 = vpop.f32.mrb[0].mxu0
    %v3402 = vadd.f32 %v626, %v3401
    %v3403 = vpop.f32.mrb[0].mxu0
    %v3404 = vadd.f32 %v630, %v3403
    %3405 = vmatprep.mubr.bf16.mxu0 %v756
    %3406 = vmatmul.mubr.bf16.gmra.mrb[0].mxu0 %v755
    %v3407 = vpop.f32.mrb[0].mxu0
    %v3408 = vadd.f32 %v626, %v3407
    %v3409 = vpop.f32.mrb[0].mxu0
    %v3410 = vadd.f32 %v630, %v3409
    %v3411 = vpop.f32.mrb[0].mxu0
    %v3412 = vadd.f32 %v626, %v3411
    %v3413 = vpop.f32.mrb[0].mxu0
    %v3414 = vadd.f32 %v630, %v3413
    %3415 = vdwg.mxu0
    %3416 = vmatprep.subr.bf16.mxu0 %v2404
    %3417 = vmatpush1.bf16.msra.mxu0 %v2403
    %3418 = vmatprep.subr.bf16.mxu0 %v2408
    %3419 = vmatpush1.bf16.msra.mxu0 %v2407
    %3420 = vmatprep.subr.bf16.mxu0 %v2412
    %3421 = vmatpush1.bf16.msra.mxu0 %v2411
    %3422 = vmatprep.subr.bf16.mxu0 %v2416
    %3423 = vmatpush1.bf16.msra.mxu0 %v2415
    %3424 = vmatprep.subr.bf16.mxu0 %v2420
    %3425 = vmatpush1.bf16.msra.mxu0 %v2419
    %3426 = vmatprep.subr.bf16.mxu0 %v2424
    %3427 = vmatpush1.bf16.msra.mxu0 %v2423
    %3428 = vmatprep.subr.bf16.mxu0 %v2428
    %3429 = vmatpush1.bf16.msra.mxu0 %v2427
    %3430 = vmatprep.subr.bf16.mxu0 %v2432
    %3431 = vmatpush1.bf16.msra.mxu0 %v2431
    %3432 = vmatprep.subr.bf16.mxu0 %v2436
    %3433 = vmatpush1.bf16.msra.mxu0 %v2435
    %3434 = vmatprep.subr.bf16.mxu0 %v2440
    %3435 = vmatpush1.bf16.msra.mxu0 %v2439
    %3436 = vmatprep.subr.bf16.mxu0 %v2444
    %3437 = vmatpush1.bf16.msra.mxu0 %v2443
    %3438 = vmatprep.subr.bf16.mxu0 %v2448
    %3439 = vmatpush1.bf16.msra.mxu0 %v2447
    %3440 = vmatprep.subr.bf16.mxu0 %v2452
    %3441 = vmatpush1.bf16.msra.mxu0 %v2451
    %3442 = vmatprep.subr.bf16.mxu0 %v2456
    %3443 = vmatpush1.bf16.msra.mxu0 %v2455
    %3444 = vmatprep.subr.bf16.mxu0 %v2460
    %3445 = vmatpush1.bf16.msra.mxu0 %v2459
    %3446 = vmatprep.subr.bf16.mxu0 %v2464
    %3447 = vmatpush1.bf16.msra.mxu0 %v2463
    %3448 = vmatprep.mubr.bf16.mxu0 %v742
    %3449 = vmatmul.mubr.bf16.gmra.mrb[0].mxu0 %v741
    %v3450 = vpop.f32.mrb[0].mxu0
    %v3451 = vadd.f32 %v3398, %v3450
    %v3452 = vpop.f32.mrb[0].mxu0
    %v3453 = vadd.f32 %v3400, %v3452
    %v3454 = vpop.f32.mrb[0].mxu0
    %v3455 = vadd.f32 %v3402, %v3454
    %v3456 = vpop.f32.mrb[0].mxu0
    %v3457 = vadd.f32 %v3404, %v3456
    %3458 = vmatprep.mubr.bf16.mxu0 %v758
    %3459 = vmatmul.mubr.bf16.gmra.mrb[0].mxu0 %v757
    %v3460 = vpop.f32.mrb[0].mxu0
    %v3461 = vadd.f32 %v3408, %v3460
    %v3462 = vpop.f32.mrb[0].mxu0
    %v3463 = vadd.f32 %v3410, %v3462
    %v3464 = vpop.f32.mrb[0].mxu0
    %v3465 = vadd.f32 %v3412, %v3464
    %v3466 = vpop.f32.mrb[0].mxu0
    %v3467 = vadd.f32 %v3414, %v3466
    %3468 = vdwg.mxu0
    %3469 = vmatprep.subr.bf16.mxu0 %v2468
    %3470 = vmatpush1.bf16.msra.mxu0 %v2467
    %3471 = vmatprep.subr.bf16.mxu0 %v2472
    %3472 = vmatpush1.bf16.msra.mxu0 %v2471
    %3473 = vmatprep.subr.bf16.mxu0 %v2476
    %3474 = vmatpush1.bf16.msra.mxu0 %v2475
    %3475 = vmatprep.subr.bf16.mxu0 %v2480
    %3476 = vmatpush1.bf16.msra.mxu0 %v2479
    %3477 = vmatprep.subr.bf16.mxu0 %v2484
    %3478 = vmatpush1.bf16.msra.mxu0 %v2483
    %3479 = vmatprep.subr.bf16.mxu0 %v2488
    %3480 = vmatpush1.bf16.msra.mxu0 %v2487
    %3481 = vmatprep.subr.bf16.mxu0 %v2492
    %3482 = vmatpush1.bf16.msra.mxu0 %v2491
    %3483 = vmatprep.subr.bf16.mxu0 %v2496
    %3484 = vmatpush1.bf16.msra.mxu0 %v2495
    %3485 = vmatprep.subr.bf16.mxu0 %v2500
    %3486 = vmatpush1.bf16.msra.mxu0 %v2499
    %3487 = vmatprep.subr.bf16.mxu0 %v2504
    %3488 = vmatpush1.bf16.msra.mxu0 %v2503
    %3489 = vmatprep.subr.bf16.mxu0 %v2508
    %3490 = vmatpush1.bf16.msra.mxu0 %v2507
    %3491 = vmatprep.subr.bf16.mxu0 %v2512
    %3492 = vmatpush1.bf16.msra.mxu0 %v2511
    %3493 = vmatprep.subr.bf16.mxu0 %v2516
    %3494 = vmatpush1.bf16.msra.mxu0 %v2515
    %3495 = vmatprep.subr.bf16.mxu0 %v2520
    %3496 = vmatpush1.bf16.msra.mxu0 %v2519
    %3497 = vmatprep.subr.bf16.mxu0 %v2524
    %3498 = vmatpush1.bf16.msra.mxu0 %v2523
    %3499 = vmatprep.subr.bf16.mxu0 %v2528
    %3500 = vmatpush1.bf16.msra.mxu0 %v2527
    %3501 = vmatprep.mubr.bf16.mxu0 %v744
    %3502 = vmatmul.mubr.bf16.gmra.mrb[0].mxu0 %v743
    %v3503 = vpop.f32.mrb[0].mxu0
    %v3504 = vadd.f32 %v3451, %v3503
    %v3505 = vpop.f32.mrb[0].mxu0
    %v3506 = vadd.f32 %v3453, %v3505
    %v3507 = vpop.f32.mrb[0].mxu0
    %v3508 = vadd.f32 %v3455, %v3507
    %v3509 = vpop.f32.mrb[0].mxu0
    %v3510 = vadd.f32 %v3457, %v3509
    %3511 = vmatprep.mubr.bf16.mxu0 %v760
    %3512 = vmatmul.mubr.bf16.gmra.mrb[0].mxu0 %v759
    %v3513 = vpop.f32.mrb[0].mxu0
    %v3514 = vadd.f32 %v3461, %v3513
    %v3515 = vpop.f32.mrb[0].mxu0
    %v3516 = vadd.f32 %v3463, %v3515
    %v3517 = vpop.f32.mrb[0].mxu0
    %v3518 = vadd.f32 %v3465, %v3517
    %v3519 = vpop.f32.mrb[0].mxu0
    %v3520 = vadd.f32 %v3467, %v3519
    %3521 = vdwg.mxu0
    %3522 = vmatprep.subr.bf16.mxu0 %v2532
    %3523 = vmatpush1.bf16.msra.mxu0 %v2531
    %3524 = vmatprep.subr.bf16.mxu0 %v2536
    %3525 = vmatpush1.bf16.msra.mxu0 %v2535
    %3526 = vmatprep.subr.bf16.mxu0 %v2540
    %3527 = vmatpush1.bf16.msra.mxu0 %v2539
    %3528 = vmatprep.subr.bf16.mxu0 %v2544
    %3529 = vmatpush1.bf16.msra.mxu0 %v2543
    %3530 = vmatprep.subr.bf16.mxu0 %v2548
    %3531 = vmatpush1.bf16.msra.mxu0 %v2547
    %3532 = vmatprep.subr.bf16.mxu0 %v2552
    %3533 = vmatpush1.bf16.msra.mxu0 %v2551
    %3534 = vmatprep.subr.bf16.mxu0 %v2556
    %3535 = vmatpush1.bf16.msra.mxu0 %v2555
    %3536 = vmatprep.subr.bf16.mxu0 %v2560
    %3537 = vmatpush1.bf16.msra.mxu0 %v2559
    %3538 = vmatprep.subr.bf16.mxu0 %v2564
    %3539 = vmatpush1.bf16.msra.mxu0 %v2563
    %3540 = vmatprep.subr.bf16.mxu0 %v2568
    %3541 = vmatpush1.bf16.msra.mxu0 %v2567
    %3542 = vmatprep.subr.bf16.mxu0 %v2572
    %3543 = vmatpush1.bf16.msra.mxu0 %v2571
    %3544 = vmatprep.subr.bf16.mxu0 %v2576
    %3545 = vmatpush1.bf16.msra.mxu0 %v2575
    %3546 = vmatprep.subr.bf16.mxu0 %v2580
    %3547 = vmatpush1.bf16.msra.mxu0 %v2579
    %3548 = vmatprep.subr.bf16.mxu0 %v2584
    %3549 = vmatpush1.bf16.msra.mxu0 %v2583
    %3550 = vmatprep.subr.bf16.mxu0 %v2588
    %3551 = vmatpush1.bf16.msra.mxu0 %v2587
    %3552 = vmatprep.subr.bf16.mxu0 %v2592
    %3553 = vmatpush1.bf16.msra.mxu0 %v2591
    %3554 = vmatprep.mubr.bf16.mxu0 %v746
    %3555 = vmatmul.mubr.bf16.gmra.mrb[0].mxu0 %v745
    %v3556 = vpop.f32.mrb[0].mxu0
    %v3557 = vadd.f32 %v3504, %v3556
    %v3558 = vpop.f32.mrb[0].mxu0
    %v3559 = vadd.f32 %v3506, %v3558
    %v3560 = vpop.f32.mrb[0].mxu0
    %v3561 = vadd.f32 %v3508, %v3560
    %v3562 = vpop.f32.mrb[0].mxu0
    %v3563 = vadd.f32 %v3510, %v3562
    %3564 = vmatprep.mubr.bf16.mxu0 %v762
    %3565 = vmatmul.mubr.bf16.gmra.mrb[0].mxu0 %v761
    %v3566 = vpop.f32.mrb[0].mxu0
    %v3567 = vadd.f32 %v3514, %v3566
    %v3568 = vpop.f32.mrb[0].mxu0
    %v3569 = vadd.f32 %v3516, %v3568
    %v3570 = vpop.f32.mrb[0].mxu0
    %v3571 = vadd.f32 %v3518, %v3570
    %v3572 = vpop.f32.mrb[0].mxu0
    %v3573 = vadd.f32 %v3520, %v3572
    %3574 = vdwg.mxu0
    %3575 = vmatprep.subr.bf16.mxu0 %v2596
    %3576 = vmatpush1.bf16.msra.mxu0 %v2595
    %3577 = vmatprep.subr.bf16.mxu0 %v2600
    %3578 = vmatpush1.bf16.msra.mxu0 %v2599
    %3579 = vmatprep.subr.bf16.mxu0 %v2604
    %3580 = vmatpush1.bf16.msra.mxu0 %v2603
    %3581 = vmatprep.subr.bf16.mxu0 %v2608
    %3582 = vmatpush1.bf16.msra.mxu0 %v2607
    %3583 = vmatprep.subr.bf16.mxu0 %v2612
    %3584 = vmatpush1.bf16.msra.mxu0 %v2611
    %3585 = vmatprep.subr.bf16.mxu0 %v2616
    %3586 = vmatpush1.bf16.msra.mxu0 %v2615
    %3587 = vmatprep.subr.bf16.mxu0 %v2620
    %3588 = vmatpush1.bf16.msra.mxu0 %v2619
    %3589 = vmatprep.subr.bf16.mxu0 %v2624
    %3590 = vmatpush1.bf16.msra.mxu0 %v2623
    %3591 = vmatprep.subr.bf16.mxu0 %v2628
    %3592 = vmatpush1.bf16.msra.mxu0 %v2627
    %3593 = vmatprep.subr.bf16.mxu0 %v2632
    %3594 = vmatpush1.bf16.msra.mxu0 %v2631
    %3595 = vmatprep.subr.bf16.mxu0 %v2636
    %3596 = vmatpush1.bf16.msra.mxu0 %v2635
    %3597 = vmatprep.subr.bf16.mxu0 %v2640
    %3598 = vmatpush1.bf16.msra.mxu0 %v2639
    %3599 = vmatprep.subr.bf16.mxu0 %v2644
    %3600 = vmatpush1.bf16.msra.mxu0 %v2643
    %3601 = vmatprep.subr.bf16.mxu0 %v2648
    %3602 = vmatpush1.bf16.msra.mxu0 %v2647
    %3603 = vmatprep.subr.bf16.mxu0 %v2652
    %3604 = vmatpush1.bf16.msra.mxu0 %v2651
    %3605 = vmatprep.subr.bf16.mxu0 %v2656
    %3606 = vmatpush1.bf16.msra.mxu0 %v2655
    %3607 = vmatprep.mubr.bf16.mxu0 %v748
    %3608 = vmatmul.mubr.bf16.gmra.mrb[0].mxu0 %v747
    %v3609 = vpop.f32.mrb[0].mxu0
    %v3610 = vadd.f32 %v3557, %v3609
    %v3611 = vpop.f32.mrb[0].mxu0
    %v3612 = vadd.f32 %v3559, %v3611
    %v3613 = vpop.f32.mrb[0].mxu0
    %v3614 = vadd.f32 %v3561, %v3613
    %v3615 = vpop.f32.mrb[0].mxu0
    %v3616 = vadd.f32 %v3563, %v3615
    %3617 = vmatprep.mubr.bf16.mxu0 %v764
    %3618 = vmatmul.mubr.bf16.gmra.mrb[0].mxu0 %v763
    %v3619 = vpop.f32.mrb[0].mxu0
    %v3620 = vadd.f32 %v3567, %v3619
    %v3621 = vpop.f32.mrb[0].mxu0
    %v3622 = vadd.f32 %v3569, %v3621
    %v3623 = vpop.f32.mrb[0].mxu0
    %v3624 = vadd.f32 %v3571, %v3623
    %v3625 = vpop.f32.mrb[0].mxu0
    %v3626 = vadd.f32 %v3573, %v3625
    %3627 = vdwg.mxu0
    %3628 = vmatprep.subr.bf16.mxu0 %v2660
    %3629 = vmatpush1.bf16.msra.mxu0 %v2659
    %3630 = vmatprep.subr.bf16.mxu0 %v2664
    %3631 = vmatpush1.bf16.msra.mxu0 %v2663
    %3632 = vmatprep.subr.bf16.mxu0 %v2668
    %3633 = vmatpush1.bf16.msra.mxu0 %v2667
    %3634 = vmatprep.subr.bf16.mxu0 %v2672
    %3635 = vmatpush1.bf16.msra.mxu0 %v2671
    %3636 = vmatprep.subr.bf16.mxu0 %v2676
    %3637 = vmatpush1.bf16.msra.mxu0 %v2675
    %3638 = vmatprep.subr.bf16.mxu0 %v2680
    %3639 = vmatpush1.bf16.msra.mxu0 %v2679
    %3640 = vmatprep.subr.bf16.mxu0 %v2684
    %3641 = vmatpush1.bf16.msra.mxu0 %v2683
    %3642 = vmatprep.subr.bf16.mxu0 %v2688
    %3643 = vmatpush1.bf16.msra.mxu0 %v2687
    %3644 = vmatprep.subr.bf16.mxu0 %v2692
    %3645 = vmatpush1.bf16.msra.mxu0 %v2691
    %3646 = vmatprep.subr.bf16.mxu0 %v2696
    %3647 = vmatpush1.bf16.msra.mxu0 %v2695
    %3648 = vmatprep.subr.bf16.mxu0 %v2700
    %3649 = vmatpush1.bf16.msra.mxu0 %v2699
    %3650 = vmatprep.subr.bf16.mxu0 %v2704
    %3651 = vmatpush1.bf16.msra.mxu0 %v2703
    %3652 = vmatprep.subr.bf16.mxu0 %v2708
    %3653 = vmatpush1.bf16.msra.mxu0 %v2707
    %3654 = vmatprep.subr.bf16.mxu0 %v2712
    %3655 = vmatpush1.bf16.msra.mxu0 %v2711
    %3656 = vmatprep.subr.bf16.mxu0 %v2716
    %3657 = vmatpush1.bf16.msra.mxu0 %v2715
    %3658 = vmatprep.subr.bf16.mxu0 %v2720
    %3659 = vmatpush1.bf16.msra.mxu0 %v2719
    %3660 = vmatprep.mubr.bf16.mxu0 %v750
    %3661 = vmatmul.mubr.bf16.gmra.mrb[0].mxu0 %v749
    %v3662 = vpop.f32.mrb[0].mxu0
    %v3663 = vadd.f32 %v3610, %v3662
    %v3664 = vpop.f32.mrb[0].mxu0
    %v3665 = vadd.f32 %v3612, %v3664
    %v3666 = vpop.f32.mrb[0].mxu0
    %v3667 = vadd.f32 %v3614, %v3666
    %v3668 = vpop.f32.mrb[0].mxu0
    %v3669 = vadd.f32 %v3616, %v3668
    %3670 = vmatprep.mubr.bf16.mxu0 %v766
    %3671 = vmatmul.mubr.bf16.gmra.mrb[0].mxu0 %v765
    %v3672 = vpop.f32.mrb[0].mxu0
    %v3673 = vadd.f32 %v3620, %v3672
    %v3674 = vpop.f32.mrb[0].mxu0
    %v3675 = vadd.f32 %v3622, %v3674
    %v3676 = vpop.f32.mrb[0].mxu0
    %v3677 = vadd.f32 %v3624, %v3676
    %v3678 = vpop.f32.mrb[0].mxu0
    %v3679 = vadd.f32 %v3626, %v3678
    %3680 = vdwg.mxu0
    %3681 = vmatprep.subr.bf16.mxu0 %v2724
    %3682 = vmatpush1.bf16.msra.mxu0 %v2723
    %3683 = vmatprep.subr.bf16.mxu0 %v2728
    %3684 = vmatpush1.bf16.msra.mxu0 %v2727
    %3685 = vmatprep.subr.bf16.mxu0 %v2732
    %3686 = vmatpush1.bf16.msra.mxu0 %v2731
    %3687 = vmatprep.subr.bf16.mxu0 %v2736
    %3688 = vmatpush1.bf16.msra.mxu0 %v2735
    %3689 = vmatprep.subr.bf16.mxu0 %v2740
    %3690 = vmatpush1.bf16.msra.mxu0 %v2739
    %3691 = vmatprep.subr.bf16.mxu0 %v2744
    %3692 = vmatpush1.bf16.msra.mxu0 %v2743
    %3693 = vmatprep.subr.bf16.mxu0 %v2748
    %3694 = vmatpush1.bf16.msra.mxu0 %v2747
    %3695 = vmatprep.subr.bf16.mxu0 %v2752
    %3696 = vmatpush1.bf16.msra.mxu0 %v2751
    %3697 = vmatprep.subr.bf16.mxu0 %v2756
    %3698 = vmatpush1.bf16.msra.mxu0 %v2755
    %3699 = vmatprep.subr.bf16.mxu0 %v2760
    %3700 = vmatpush1.bf16.msra.mxu0 %v2759
    %3701 = vmatprep.subr.bf16.mxu0 %v2764
    %3702 = vmatpush1.bf16.msra.mxu0 %v2763
    %3703 = vmatprep.subr.bf16.mxu0 %v2768
    %3704 = vmatpush1.bf16.msra.mxu0 %v2767
    %3705 = vmatprep.subr.bf16.mxu0 %v2772
    %3706 = vmatpush1.bf16.msra.mxu0 %v2771
    %3707 = vmatprep.subr.bf16.mxu0 %v2776
    %3708 = vmatpush1.bf16.msra.mxu0 %v2775
    %3709 = vmatprep.subr.bf16.mxu0 %v2780
    %3710 = vmatpush1.bf16.msra.mxu0 %v2779
    %3711 = vmatprep.subr.bf16.mxu0 %v2784
    %3712 = vmatpush1.bf16.msra.mxu0 %v2783
    %3713 = vmatprep.mubr.bf16.mxu0 %v752
    %3714 = vmatmul.mubr.bf16.gmra.mrb[0].mxu0 %v751
    %v3715 = vpop.f32.mrb[0].mxu0
    %v3716 = vadd.f32 %v3663, %v3715
    %v3717 = vpop.f32.mrb[0].mxu0
    %v3718 = vadd.f32 %v3665, %v3717
    %v3719 = vpop.f32.mrb[0].mxu0
    %v3720 = vadd.f32 %v3667, %v3719
    %v3721 = vpop.f32.mrb[0].mxu0
    %v3722 = vadd.f32 %v3669, %v3721
    %3723 = vmatprep.mubr.bf16.mxu0 %v768
    %3724 = vmatmul.mubr.bf16.gmra.mrb[0].mxu0 %v767
    %v3725 = vpop.f32.mrb[0].mxu0
    %v3726 = vadd.f32 %v3673, %v3725
    %v3727 = vpop.f32.mrb[0].mxu0
    %v3728 = vadd.f32 %v3675, %v3727
    %v3729 = vpop.f32.mrb[0].mxu0
    %v3730 = vadd.f32 %v3677, %v3729
    %v3731 = vpop.f32.mrb[0].mxu0
    %v3732 = vadd.f32 %v3679, %v3731
    %3733 = vdwg.mxu0
    %3734 = vmatprep.subr.bf16.mxu0 %v2788
    %3735 = vmatpush1.bf16.msra.mxu0 %v2787
    %3736 = vmatprep.subr.bf16.mxu0 %v2792
    %3737 = vmatpush1.bf16.msra.mxu0 %v2791
    %3738 = vmatprep.subr.bf16.mxu0 %v2796
    %3739 = vmatpush1.bf16.msra.mxu0 %v2795
    %3740 = vmatprep.subr.bf16.mxu0 %v2800
    %3741 = vmatpush1.bf16.msra.mxu0 %v2799
    %3742 = vmatprep.subr.bf16.mxu0 %v2804
    %3743 = vmatpush1.bf16.msra.mxu0 %v2803
    %3744 = vmatprep.subr.bf16.mxu0 %v2808
    %3745 = vmatpush1.bf16.msra.mxu0 %v2807
    %3746 = vmatprep.subr.bf16.mxu0 %v2812
    %3747 = vmatpush1.bf16.msra.mxu0 %v2811
    %3748 = vmatprep.subr.bf16.mxu0 %v2816
    %3749 = vmatpush1.bf16.msra.mxu0 %v2815
    %3750 = vmatprep.subr.bf16.mxu0 %v2820
    %3751 = vmatpush1.bf16.msra.mxu0 %v2819
    %3752 = vmatprep.subr.bf16.mxu0 %v2824
    %3753 = vmatpush1.bf16.msra.mxu0 %v2823
    %3754 = vmatprep.subr.bf16.mxu0 %v2828
    %3755 = vmatpush1.bf16.msra.mxu0 %v2827
    %3756 = vmatprep.subr.bf16.mxu0 %v2832
    %3757 = vmatpush1.bf16.msra.mxu0 %v2831
    %3758 = vmatprep.subr.bf16.mxu0 %v2836
    %3759 = vmatpush1.bf16.msra.mxu0 %v2835
    %3760 = vmatprep.subr.bf16.mxu0 %v2840
    %3761 = vmatpush1.bf16.msra.mxu0 %v2839
    %3762 = vmatprep.subr.bf16.mxu0 %v2844
    %3763 = vmatpush1.bf16.msra.mxu0 %v2843
    %3764 = vmatprep.subr.bf16.mxu0 %v2848
    %3765 = vmatpush1.bf16.msra.mxu0 %v2847
    %3766 = vmatprep.mubr.bf16.mxu0 %v754
    %3767 = vmatmul.mubr.bf16.gmra.mrb[0].mxu0 %v753
    %v3768 = vpop.f32.mrb[0].mxu0
    %v3769 = vadd.f32 %v3716, %v3768
    %v3770 = vpop.f32.mrb[0].mxu0
    %v3771 = vadd.f32 %v3718, %v3770
    %v3772 = vpop.f32.mrb[0].mxu0
    %v3773 = vadd.f32 %v3720, %v3772
    %v3774 = vpop.f32.mrb[0].mxu0
    %v3775 = vadd.f32 %v3722, %v3774
    %3776 = vmatprep.mubr.bf16.mxu0 %v770
    %3777 = vmatmul.mubr.bf16.gmra.mrb[0].mxu0 %v769
    %v3778 = vpop.f32.mrb[0].mxu0
    %v3779 = vadd.f32 %v3726, %v3778
    %v3780 = vpop.f32.mrb[0].mxu0
    %v3781 = vadd.f32 %v3728, %v3780
    %v3782 = vpop.f32.mrb[0].mxu0
    %v3783 = vadd.f32 %v3730, %v3782
    %v3784 = vpop.f32.mrb[0].mxu0
    %v3785 = vadd.f32 %v3732, %v3784
    %3786 = vdwg.mxu0
    %3787 = vmatprep.subr.bf16.mxu0 %v2342
    %3788 = vmatpush1.bf16.msra.mxu0 %v2341
    %3789 = vmatprep.subr.bf16.mxu0 %v2346
    %3790 = vmatpush1.bf16.msra.mxu0 %v2345
    %3791 = vmatprep.subr.bf16.mxu0 %v2350
    %3792 = vmatpush1.bf16.msra.mxu0 %v2349
    %3793 = vmatprep.subr.bf16.mxu0 %v2354
    %3794 = vmatpush1.bf16.msra.mxu0 %v2353
    %3795 = vmatprep.subr.bf16.mxu0 %v2358
    %3796 = vmatpush1.bf16.msra.mxu0 %v2357
    %3797 = vmatprep.subr.bf16.mxu0 %v2362
    %3798 = vmatpush1.bf16.msra.mxu0 %v2361
    %3799 = vmatprep.subr.bf16.mxu0 %v2366
    %3800 = vmatpush1.bf16.msra.mxu0 %v2365
    %3801 = vmatprep.subr.bf16.mxu0 %v2370
    %3802 = vmatpush1.bf16.msra.mxu0 %v2369
    %3803 = vmatprep.subr.bf16.mxu0 %v2374
    %3804 = vmatpush1.bf16.msra.mxu0 %v2373
    %3805 = vmatprep.subr.bf16.mxu0 %v2378
    %3806 = vmatpush1.bf16.msra.mxu0 %v2377
    %3807 = vmatprep.subr.bf16.mxu0 %v2382
    %3808 = vmatpush1.bf16.msra.mxu0 %v2381
    %3809 = vmatprep.subr.bf16.mxu0 %v2386
    %3810 = vmatpush1.bf16.msra.mxu0 %v2385
    %3811 = vmatprep.subr.bf16.mxu0 %v2390
    %3812 = vmatpush1.bf16.msra.mxu0 %v2389
    %3813 = vmatprep.subr.bf16.mxu0 %v2394
    %3814 = vmatpush1.bf16.msra.mxu0 %v2393
    %3815 = vmatprep.subr.bf16.mxu0 %v2398
    %3816 = vmatpush1.bf16.msra.mxu0 %v2397
    %3817 = vmatprep.subr.bf16.mxu0 %v2402
    %3818 = vmatpush1.bf16.msra.mxu0 %v2401
    %3819 = vmatprep.mubr.bf16.mxu0 %v740
    %3820 = vmatmul.mubr.bf16.gmra.mrb[0].mxu0 %v739
    %v3821 = vpop.f32.mrb[0].mxu0
    %v3822 = vadd.f32 %v634, %v3821
    %v3823 = vpop.f32.mrb[0].mxu0
    %v3824 = vadd.f32 %v638, %v3823
    %v3825 = vpop.f32.mrb[0].mxu0
    %v3826 = vadd.f32 %v634, %v3825
    %v3827 = vpop.f32.mrb[0].mxu0
    %v3828 = vadd.f32 %v638, %v3827
    %3829 = vmatprep.mubr.bf16.mxu0 %v756
    %3830 = vmatmul.mubr.bf16.gmra.mrb[0].mxu0 %v755
    %v3831 = vpop.f32.mrb[0].mxu0
    %v3832 = vadd.f32 %v634, %v3831
    %v3833 = vpop.f32.mrb[0].mxu0
    %v3834 = vadd.f32 %v638, %v3833
    %v3835 = vpop.f32.mrb[0].mxu0
    %v3836 = vadd.f32 %v634, %v3835
    %v3837 = vpop.f32.mrb[0].mxu0
    %v3838 = vadd.f32 %v638, %v3837
    %3839 = vdwg.mxu0
    %3840 = vmatprep.subr.bf16.mxu0 %v2406
    %3841 = vmatpush1.bf16.msra.mxu0 %v2405
    %3842 = vmatprep.subr.bf16.mxu0 %v2410
    %3843 = vmatpush1.bf16.msra.mxu0 %v2409
    %3844 = vmatprep.subr.bf16.mxu0 %v2414
    %3845 = vmatpush1.bf16.msra.mxu0 %v2413
    %3846 = vmatprep.subr.bf16.mxu0 %v2418
    %3847 = vmatpush1.bf16.msra.mxu0 %v2417
    %3848 = vmatprep.subr.bf16.mxu0 %v2422
    %3849 = vmatpush1.bf16.msra.mxu0 %v2421
    %3850 = vmatprep.subr.bf16.mxu0 %v2426
    %3851 = vmatpush1.bf16.msra.mxu0 %v2425
    %3852 = vmatprep.subr.bf16.mxu0 %v2430
    %3853 = vmatpush1.bf16.msra.mxu0 %v2429
    %3854 = vmatprep.subr.bf16.mxu0 %v2434
    %3855 = vmatpush1.bf16.msra.mxu0 %v2433
    %3856 = vmatprep.subr.bf16.mxu0 %v2438
    %3857 = vmatpush1.bf16.msra.mxu0 %v2437
    %3858 = vmatprep.subr.bf16.mxu0 %v2442
    %3859 = vmatpush1.bf16.msra.mxu0 %v2441
    %3860 = vmatprep.subr.bf16.mxu0 %v2446
    %3861 = vmatpush1.bf16.msra.mxu0 %v2445
    %3862 = vmatprep.subr.bf16.mxu0 %v2450
    %3863 = vmatpush1.bf16.msra.mxu0 %v2449
    %3864 = vmatprep.subr.bf16.mxu0 %v2454
    %3865 = vmatpush1.bf16.msra.mxu0 %v2453
    %3866 = vmatprep.subr.bf16.mxu0 %v2458
    %3867 = vmatpush1.bf16.msra.mxu0 %v2457
    %3868 = vmatprep.subr.bf16.mxu0 %v2462
    %3869 = vmatpush1.bf16.msra.mxu0 %v2461
    %3870 = vmatprep.subr.bf16.mxu0 %v2466
    %3871 = vmatpush1.bf16.msra.mxu0 %v2465
    %3872 = vmatprep.mubr.bf16.mxu0 %v742
    %3873 = vmatmul.mubr.bf16.gmra.mrb[0].mxu0 %v741
    %v3874 = vpop.f32.mrb[0].mxu0
    %v3875 = vadd.f32 %v3822, %v3874
    %v3876 = vpop.f32.mrb[0].mxu0
    %v3877 = vadd.f32 %v3824, %v3876
    %v3878 = vpop.f32.mrb[0].mxu0
    %v3879 = vadd.f32 %v3826, %v3878
    %v3880 = vpop.f32.mrb[0].mxu0
    %v3881 = vadd.f32 %v3828, %v3880
    %3882 = vmatprep.mubr.bf16.mxu0 %v758
    %3883 = vmatmul.mubr.bf16.gmra.mrb[0].mxu0 %v757
    %v3884 = vpop.f32.mrb[0].mxu0
    %v3885 = vadd.f32 %v3832, %v3884
    %v3886 = vpop.f32.mrb[0].mxu0
    %v3887 = vadd.f32 %v3834, %v3886
    %v3888 = vpop.f32.mrb[0].mxu0
    %v3889 = vadd.f32 %v3836, %v3888
    %v3890 = vpop.f32.mrb[0].mxu0
    %v3891 = vadd.f32 %v3838, %v3890
    %3892 = vdwg.mxu0
    %3893 = vmatprep.subr.bf16.mxu0 %v2470
    %3894 = vmatpush1.bf16.msra.mxu0 %v2469
    %3895 = vmatprep.subr.bf16.mxu0 %v2474
    %3896 = vmatpush1.bf16.msra.mxu0 %v2473
    %3897 = vmatprep.subr.bf16.mxu0 %v2478
    %3898 = vmatpush1.bf16.msra.mxu0 %v2477
    %3899 = vmatprep.subr.bf16.mxu0 %v2482
    %3900 = vmatpush1.bf16.msra.mxu0 %v2481
    %3901 = vmatprep.subr.bf16.mxu0 %v2486
    %3902 = vmatpush1.bf16.msra.mxu0 %v2485
    %3903 = vmatprep.subr.bf16.mxu0 %v2490
    %3904 = vmatpush1.bf16.msra.mxu0 %v2489
    %3905 = vmatprep.subr.bf16.mxu0 %v2494
    %3906 = vmatpush1.bf16.msra.mxu0 %v2493
    %3907 = vmatprep.subr.bf16.mxu0 %v2498
    %3908 = vmatpush1.bf16.msra.mxu0 %v2497
    %3909 = vmatprep.subr.bf16.mxu0 %v2502
    %3910 = vmatpush1.bf16.msra.mxu0 %v2501
    %3911 = vmatprep.subr.bf16.mxu0 %v2506
    %3912 = vmatpush1.bf16.msra.mxu0 %v2505
    %3913 = vmatprep.subr.bf16.mxu0 %v2510
    %3914 = vmatpush1.bf16.msra.mxu0 %v2509
    %3915 = vmatprep.subr.bf16.mxu0 %v2514
    %3916 = vmatpush1.bf16.msra.mxu0 %v2513
    %3917 = vmatprep.subr.bf16.mxu0 %v2518
    %3918 = vmatpush1.bf16.msra.mxu0 %v2517
    %3919 = vmatprep.subr.bf16.mxu0 %v2522
    %3920 = vmatpush1.bf16.msra.mxu0 %v2521
    %3921 = vmatprep.subr.bf16.mxu0 %v2526
    %3922 = vmatpush1.bf16.msra.mxu0 %v2525
    %3923 = vmatprep.subr.bf16.mxu0 %v2530
    %3924 = vmatpush1.bf16.msra.mxu0 %v2529
    %3925 = vmatprep.mubr.bf16.mxu0 %v744
    %3926 = vmatmul.mubr.bf16.gmra.mrb[0].mxu0 %v743
    %v3927 = vpop.f32.mrb[0].mxu0
    %v3928 = vadd.f32 %v3875, %v3927
    %v3929 = vpop.f32.mrb[0].mxu0
    %v3930 = vadd.f32 %v3877, %v3929
    %v3931 = vpop.f32.mrb[0].mxu0
    %v3932 = vadd.f32 %v3879, %v3931
    %v3933 = vpop.f32.mrb[0].mxu0
    %v3934 = vadd.f32 %v3881, %v3933
    %3935 = vmatprep.mubr.bf16.mxu0 %v760
    %3936 = vmatmul.mubr.bf16.gmra.mrb[0].mxu0 %v759
    %v3937 = vpop.f32.mrb[0].mxu0
    %v3938 = vadd.f32 %v3885, %v3937
    %v3939 = vpop.f32.mrb[0].mxu0
    %v3940 = vadd.f32 %v3887, %v3939
    %v3941 = vpop.f32.mrb[0].mxu0
    %v3942 = vadd.f32 %v3889, %v3941
    %v3943 = vpop.f32.mrb[0].mxu0
    %v3944 = vadd.f32 %v3891, %v3943
    %3945 = vdwg.mxu0
    %3946 = vmatprep.subr.bf16.mxu0 %v2534
    %3947 = vmatpush1.bf16.msra.mxu0 %v2533
    %3948 = vmatprep.subr.bf16.mxu0 %v2538
    %3949 = vmatpush1.bf16.msra.mxu0 %v2537
    %3950 = vmatprep.subr.bf16.mxu0 %v2542
    %3951 = vmatpush1.bf16.msra.mxu0 %v2541
    %3952 = vmatprep.subr.bf16.mxu0 %v2546
    %3953 = vmatpush1.bf16.msra.mxu0 %v2545
    %3954 = vmatprep.subr.bf16.mxu0 %v2550
    %3955 = vmatpush1.bf16.msra.mxu0 %v2549
    %3956 = vmatprep.subr.bf16.mxu0 %v2554
    %3957 = vmatpush1.bf16.msra.mxu0 %v2553
    %3958 = vmatprep.subr.bf16.mxu0 %v2558
    %3959 = vmatpush1.bf16.msra.mxu0 %v2557
    %3960 = vmatprep.subr.bf16.mxu0 %v2562
    %3961 = vmatpush1.bf16.msra.mxu0 %v2561
    %3962 = vmatprep.subr.bf16.mxu0 %v2566
    %3963 = vmatpush1.bf16.msra.mxu0 %v2565
    %3964 = vmatprep.subr.bf16.mxu0 %v2570
    %3965 = vmatpush1.bf16.msra.mxu0 %v2569
    %3966 = vmatprep.subr.bf16.mxu0 %v2574
    %3967 = vmatpush1.bf16.msra.mxu0 %v2573
    %3968 = vmatprep.subr.bf16.mxu0 %v2578
    %3969 = vmatpush1.bf16.msra.mxu0 %v2577
    %3970 = vmatprep.subr.bf16.mxu0 %v2582
    %3971 = vmatpush1.bf16.msra.mxu0 %v2581
    %3972 = vmatprep.subr.bf16.mxu0 %v2586
    %3973 = vmatpush1.bf16.msra.mxu0 %v2585
    %3974 = vmatprep.subr.bf16.mxu0 %v2590
    %3975 = vmatpush1.bf16.msra.mxu0 %v2589
    %3976 = vmatprep.subr.bf16.mxu0 %v2594
    %3977 = vmatpush1.bf16.msra.mxu0 %v2593
    %3978 = vmatprep.mubr.bf16.mxu0 %v746
    %3979 = vmatmul.mubr.bf16.gmra.mrb[0].mxu0 %v745
    %v3980 = vpop.f32.mrb[0].mxu0
    %v3981 = vadd.f32 %v3928, %v3980
    %v3982 = vpop.f32.mrb[0].mxu0
    %v3983 = vadd.f32 %v3930, %v3982
    %v3984 = vpop.f32.mrb[0].mxu0
    %v3985 = vadd.f32 %v3932, %v3984
    %v3986 = vpop.f32.mrb[0].mxu0
    %v3987 = vadd.f32 %v3934, %v3986
    %3988 = vmatprep.mubr.bf16.mxu0 %v762
    %3989 = vmatmul.mubr.bf16.gmra.mrb[0].mxu0 %v761
    %v3990 = vpop.f32.mrb[0].mxu0
    %v3991 = vadd.f32 %v3938, %v3990
    %v3992 = vpop.f32.mrb[0].mxu0
    %v3993 = vadd.f32 %v3940, %v3992
    %v3994 = vpop.f32.mrb[0].mxu0
    %v3995 = vadd.f32 %v3942, %v3994
    %v3996 = vpop.f32.mrb[0].mxu0
    %v3997 = vadd.f32 %v3944, %v3996
    %3998 = vdwg.mxu0
    %3999 = vmatprep.subr.bf16.mxu0 %v2598
    %4000 = vmatpush1.bf16.msra.mxu0 %v2597
    %4001 = vmatprep.subr.bf16.mxu0 %v2602
    %4002 = vmatpush1.bf16.msra.mxu0 %v2601
    %4003 = vmatprep.subr.bf16.mxu0 %v2606
    %4004 = vmatpush1.bf16.msra.mxu0 %v2605
    %4005 = vmatprep.subr.bf16.mxu0 %v2610
    %4006 = vmatpush1.bf16.msra.mxu0 %v2609
    %4007 = vmatprep.subr.bf16.mxu0 %v2614
    %4008 = vmatpush1.bf16.msra.mxu0 %v2613
    %4009 = vmatprep.subr.bf16.mxu0 %v2618
    %4010 = vmatpush1.bf16.msra.mxu0 %v2617
    %4011 = vmatprep.subr.bf16.mxu0 %v2622
    %4012 = vmatpush1.bf16.msra.mxu0 %v2621
    %4013 = vmatprep.subr.bf16.mxu0 %v2626
    %4014 = vmatpush1.bf16.msra.mxu0 %v2625
    %4015 = vmatprep.subr.bf16.mxu0 %v2630
    %4016 = vmatpush1.bf16.msra.mxu0 %v2629
    %4017 = vmatprep.subr.bf16.mxu0 %v2634
    %4018 = vmatpush1.bf16.msra.mxu0 %v2633
    %4019 = vmatprep.subr.bf16.mxu0 %v2638
    %4020 = vmatpush1.bf16.msra.mxu0 %v2637
    %4021 = vmatprep.subr.bf16.mxu0 %v2642
    %4022 = vmatpush1.bf16.msra.mxu0 %v2641
    %4023 = vmatprep.subr.bf16.mxu0 %v2646
    %4024 = vmatpush1.bf16.msra.mxu0 %v2645
    %4025 = vmatprep.subr.bf16.mxu0 %v2650
    %4026 = vmatpush1.bf16.msra.mxu0 %v2649
    %4027 = vmatprep.subr.bf16.mxu0 %v2654
    %4028 = vmatpush1.bf16.msra.mxu0 %v2653
    %4029 = vmatprep.subr.bf16.mxu0 %v2658
    %4030 = vmatpush1.bf16.msra.mxu0 %v2657
    %4031 = vmatprep.mubr.bf16.mxu0 %v748
    %4032 = vmatmul.mubr.bf16.gmra.mrb[0].mxu0 %v747
    %v4033 = vpop.f32.mrb[0].mxu0
    %v4034 = vadd.f32 %v3981, %v4033
    %v4035 = vpop.f32.mrb[0].mxu0
    %v4036 = vadd.f32 %v3983, %v4035
    %v4037 = vpop.f32.mrb[0].mxu0
    %v4038 = vadd.f32 %v3985, %v4037
    %v4039 = vpop.f32.mrb[0].mxu0
    %v4040 = vadd.f32 %v3987, %v4039
    %4041 = vmatprep.mubr.bf16.mxu0 %v764
    %4042 = vmatmul.mubr.bf16.gmra.mrb[0].mxu0 %v763
    %v4043 = vpop.f32.mrb[0].mxu0
    %v4044 = vadd.f32 %v3991, %v4043
    %v4045 = vpop.f32.mrb[0].mxu0
    %v4046 = vadd.f32 %v3993, %v4045
    %v4047 = vpop.f32.mrb[0].mxu0
    %v4048 = vadd.f32 %v3995, %v4047
    %v4049 = vpop.f32.mrb[0].mxu0
    %v4050 = vadd.f32 %v3997, %v4049
    %4051 = vdwg.mxu0
    %4052 = vmatprep.subr.bf16.mxu0 %v2662
    %4053 = vmatpush1.bf16.msra.mxu0 %v2661
    %4054 = vmatprep.subr.bf16.mxu0 %v2666
    %4055 = vmatpush1.bf16.msra.mxu0 %v2665
    %4056 = vmatprep.subr.bf16.mxu0 %v2670
    %4057 = vmatpush1.bf16.msra.mxu0 %v2669
    %4058 = vmatprep.subr.bf16.mxu0 %v2674
    %4059 = vmatpush1.bf16.msra.mxu0 %v2673
    %4060 = vmatprep.subr.bf16.mxu0 %v2678
    %4061 = vmatpush1.bf16.msra.mxu0 %v2677
    %4062 = vmatprep.subr.bf16.mxu0 %v2682
    %4063 = vmatpush1.bf16.msra.mxu0 %v2681
    %4064 = vmatprep.subr.bf16.mxu0 %v2686
    %4065 = vmatpush1.bf16.msra.mxu0 %v2685
    %4066 = vmatprep.subr.bf16.mxu0 %v2690
    %4067 = vmatpush1.bf16.msra.mxu0 %v2689
    %4068 = vmatprep.subr.bf16.mxu0 %v2694
    %4069 = vmatpush1.bf16.msra.mxu0 %v2693
    %4070 = vmatprep.subr.bf16.mxu0 %v2698
    %4071 = vmatpush1.bf16.msra.mxu0 %v2697
    %4072 = vmatprep.subr.bf16.mxu0 %v2702
    %4073 = vmatpush1.bf16.msra.mxu0 %v2701
    %4074 = vmatprep.subr.bf16.mxu0 %v2706
    %4075 = vmatpush1.bf16.msra.mxu0 %v2705
    %4076 = vmatprep.subr.bf16.mxu0 %v2710
    %4077 = vmatpush1.bf16.msra.mxu0 %v2709
    %4078 = vmatprep.subr.bf16.mxu0 %v2714
    %4079 = vmatpush1.bf16.msra.mxu0 %v2713
    %4080 = vmatprep.subr.bf16.mxu0 %v2718
    %4081 = vmatpush1.bf16.msra.mxu0 %v2717
    %4082 = vmatprep.subr.bf16.mxu0 %v2722
    %4083 = vmatpush1.bf16.msra.mxu0 %v2721
    %4084 = vmatprep.mubr.bf16.mxu0 %v750
    %4085 = vmatmul.mubr.bf16.gmra.mrb[0].mxu0 %v749
    %v4086 = vpop.f32.mrb[0].mxu0
    %v4087 = vadd.f32 %v4034, %v4086
    %v4088 = vpop.f32.mrb[0].mxu0
    %v4089 = vadd.f32 %v4036, %v4088
    %v4090 = vpop.f32.mrb[0].mxu0
    %v4091 = vadd.f32 %v4038, %v4090
    %v4092 = vpop.f32.mrb[0].mxu0
    %v4093 = vadd.f32 %v4040, %v4092
    %4094 = vmatprep.mubr.bf16.mxu0 %v766
    %4095 = vmatmul.mubr.bf16.gmra.mrb[0].mxu0 %v765
    %v4096 = vpop.f32.mrb[0].mxu0
    %v4097 = vadd.f32 %v4044, %v4096
    %v4098 = vpop.f32.mrb[0].mxu0
    %v4099 = vadd.f32 %v4046, %v4098
    %v4100 = vpop.f32.mrb[0].mxu0
    %v4101 = vadd.f32 %v4048, %v4100
    %v4102 = vpop.f32.mrb[0].mxu0
    %v4103 = vadd.f32 %v4050, %v4102
    %4104 = vdwg.mxu0
    %4105 = vmatprep.subr.bf16.mxu0 %v2726
    %4106 = vmatpush1.bf16.msra.mxu0 %v2725
    %4107 = vmatprep.subr.bf16.mxu0 %v2730
    %4108 = vmatpush1.bf16.msra.mxu0 %v2729
    %4109 = vmatprep.subr.bf16.mxu0 %v2734
    %4110 = vmatpush1.bf16.msra.mxu0 %v2733
    %4111 = vmatprep.subr.bf16.mxu0 %v2738
    %4112 = vmatpush1.bf16.msra.mxu0 %v2737
    %4113 = vmatprep.subr.bf16.mxu0 %v2742
    %4114 = vmatpush1.bf16.msra.mxu0 %v2741
    %4115 = vmatprep.subr.bf16.mxu0 %v2746
    %4116 = vmatpush1.bf16.msra.mxu0 %v2745
    %4117 = vmatprep.subr.bf16.mxu0 %v2750
    %4118 = vmatpush1.bf16.msra.mxu0 %v2749
    %4119 = vmatprep.subr.bf16.mxu0 %v2754
    %4120 = vmatpush1.bf16.msra.mxu0 %v2753
    %4121 = vmatprep.subr.bf16.mxu0 %v2758
    %4122 = vmatpush1.bf16.msra.mxu0 %v2757
    %4123 = vmatprep.subr.bf16.mxu0 %v2762
    %4124 = vmatpush1.bf16.msra.mxu0 %v2761
    %4125 = vmatprep.subr.bf16.mxu0 %v2766
    %4126 = vmatpush1.bf16.msra.mxu0 %v2765
    %4127 = vmatprep.subr.bf16.mxu0 %v2770
    %4128 = vmatpush1.bf16.msra.mxu0 %v2769
    %4129 = vmatprep.subr.bf16.mxu0 %v2774
    %4130 = vmatpush1.bf16.msra.mxu0 %v2773
    %4131 = vmatprep.subr.bf16.mxu0 %v2778
    %4132 = vmatpush1.bf16.msra.mxu0 %v2777
    %4133 = vmatprep.subr.bf16.mxu0 %v2782
    %4134 = vmatpush1.bf16.msra.mxu0 %v2781
    %4135 = vmatprep.subr.bf16.mxu0 %v2786
    %4136 = vmatpush1.bf16.msra.mxu0 %v2785
    %4137 = vmatprep.mubr.bf16.mxu0 %v752
    %4138 = vmatmul.mubr.bf16.gmra.mrb[0].mxu0 %v751
    %v4139 = vpop.f32.mrb[0].mxu0
    %v4140 = vadd.f32 %v4087, %v4139
    %v4141 = vpop.f32.mrb[0].mxu0
    %v4142 = vadd.f32 %v4089, %v4141
    %v4143 = vpop.f32.mrb[0].mxu0
    %v4144 = vadd.f32 %v4091, %v4143
    %v4145 = vpop.f32.mrb[0].mxu0
    %v4146 = vadd.f32 %v4093, %v4145
    %4147 = vmatprep.mubr.bf16.mxu0 %v768
    %4148 = vmatmul.mubr.bf16.gmra.mrb[0].mxu0 %v767
    %v4149 = vpop.f32.mrb[0].mxu0
    %v4150 = vadd.f32 %v4097, %v4149
    %v4151 = vpop.f32.mrb[0].mxu0
    %v4152 = vadd.f32 %v4099, %v4151
    %v4153 = vpop.f32.mrb[0].mxu0
    %v4154 = vadd.f32 %v4101, %v4153
    %v4155 = vpop.f32.mrb[0].mxu0
    %v4156 = vadd.f32 %v4103, %v4155
    %4157 = vdwg.mxu0
    %4158 = vmatprep.subr.bf16.mxu0 %v2790
    %4159 = vmatpush1.bf16.msra.mxu0 %v2789
    %4160 = vmatprep.subr.bf16.mxu0 %v2794
    %4161 = vmatpush1.bf16.msra.mxu0 %v2793
    %4162 = vmatprep.subr.bf16.mxu0 %v2798
    %4163 = vmatpush1.bf16.msra.mxu0 %v2797
    %4164 = vmatprep.subr.bf16.mxu0 %v2802
    %4165 = vmatpush1.bf16.msra.mxu0 %v2801
    %4166 = vmatprep.subr.bf16.mxu0 %v2806
    %4167 = vmatpush1.bf16.msra.mxu0 %v2805
    %4168 = vmatprep.subr.bf16.mxu0 %v2810
    %4169 = vmatpush1.bf16.msra.mxu0 %v2809
    %4170 = vmatprep.subr.bf16.mxu0 %v2814
    %4171 = vmatpush1.bf16.msra.mxu0 %v2813
    %4172 = vmatprep.subr.bf16.mxu0 %v2818
    %4173 = vmatpush1.bf16.msra.mxu0 %v2817
    %4174 = vmatprep.subr.bf16.mxu0 %v2822
    %4175 = vmatpush1.bf16.msra.mxu0 %v2821
    %4176 = vmatprep.subr.bf16.mxu0 %v2826
    %4177 = vmatpush1.bf16.msra.mxu0 %v2825
    %4178 = vmatprep.subr.bf16.mxu0 %v2830
    %4179 = vmatpush1.bf16.msra.mxu0 %v2829
    %4180 = vmatprep.subr.bf16.mxu0 %v2834
    %4181 = vmatpush1.bf16.msra.mxu0 %v2833
    %4182 = vmatprep.subr.bf16.mxu0 %v2838
    %4183 = vmatpush1.bf16.msra.mxu0 %v2837
    %4184 = vmatprep.subr.bf16.mxu0 %v2842
    %4185 = vmatpush1.bf16.msra.mxu0 %v2841
    %4186 = vmatprep.subr.bf16.mxu0 %v2846
    %4187 = vmatpush1.bf16.msra.mxu0 %v2845
    %4188 = vmatprep.subr.bf16.mxu0 %v2850
    %4189 = vmatpush1.bf16.msra.mxu0 %v2849
    %4190 = vmatprep.mubr.bf16.mxu0 %v754
    %4191 = vmatmul.mubr.bf16.gmra.mrb[0].mxu0 %v753
    %v4192 = vpop.f32.mrb[0].mxu0
    %v4193 = vadd.f32 %v4140, %v4192
    %v4194 = vpop.f32.mrb[0].mxu0
    %v4195 = vadd.f32 %v4142, %v4194
    %v4196 = vpop.f32.mrb[0].mxu0
    %v4197 = vadd.f32 %v4144, %v4196
    %v4198 = vpop.f32.mrb[0].mxu0
    %v4199 = vadd.f32 %v4146, %v4198
    %4200 = vmatprep.mubr.bf16.mxu0 %v770
    %4201 = vmatmul.mubr.bf16.gmra.mrb[0].mxu0 %v769
    %v4202 = vpop.f32.mrb[0].mxu0
    %v4203 = vadd.f32 %v4150, %v4202
    %v4204 = vpop.f32.mrb[0].mxu0
    %v4205 = vadd.f32 %v4152, %v4204
    %v4206 = vpop.f32.mrb[0].mxu0
    %v4207 = vadd.f32 %v4154, %v4206
    %v4208 = vpop.f32.mrb[0].mxu0
    %v4209 = vadd.f32 %v4156, %v4208
    %4210 = vdwg.mxu0
    %v4211 = vpack.c.bf16 %v3773, %v3769
    %v4212 = vpack.c.bf16 %v3775, %v3771
    %v4213 = vpack.c.bf16 %v4197, %v4193
    %v4214 = vpack.c.bf16 %v4199, %v4195
    %v4215 = vpack.c.bf16 %v3783, %v3779
    %v4216 = vpack.c.bf16 %v3785, %v3781
    %v4217 = vpack.c.bf16 %v4207, %v4203
    %v4218 = vpack.c.bf16 %v4209, %v4205
    %v4219 = vld [vmem:[%s3] sm:$0xff]
    %v4220 = vld [vmem:[%s3 + $0x8] sm:$0xff]
    %v4221 = vld [vmem:[%s3 + $0x10] sm:$0xff]
    %v4222 = vld [vmem:[%s3 + $0x18] sm:$0xff]
    %v4223 = vld [vmem:[%s3 + $0x20] sm:$0xff]
    %v4224 = vld [vmem:[%s3 + $0x28] sm:$0xff]
    %v4225 = vld [vmem:[%s3 + $0x30] sm:$0xff]
    %v4226 = vld [vmem:[%s3 + $0x38] sm:$0xff]
    %v4227 = vld [vmem:[%s3 + $0x40] sm:$0xff]
    %v4228 = vld [vmem:[%s3 + $0x48] sm:$0xff]
    %v4229 = vld [vmem:[%s3 + $0x50] sm:$0xff]
    %v4230 = vld [vmem:[%s3 + $0x58] sm:$0xff]
    %v4231 = vld [vmem:[%s3 + $0x60] sm:$0xff]
    %v4232 = vld [vmem:[%s3 + $0x68] sm:$0xff]
    %v4233 = vld [vmem:[%s3 + $0x70] sm:$0xff]
    %v4234 = vld [vmem:[%s3 + $0x78] sm:$0xff]
    %v4235 = vld [vmem:[%s3 + $0x80] sm:$0xff]
    %v4236 = vld [vmem:[%s3 + $0x88] sm:$0xff]
    %v4237 = vld [vmem:[%s3 + $0x90] sm:$0xff]
    %v4238 = vld [vmem:[%s3 + $0x98] sm:$0xff]
    %v4239 = vld [vmem:[%s3 + $0xa0] sm:$0xff]
    %v4240 = vld [vmem:[%s3 + $0xa8] sm:$0xff]
    %v4241 = vld [vmem:[%s3 + $0xb0] sm:$0xff]
    %v4242 = vld [vmem:[%s3 + $0xb8] sm:$0xff]
    %v4243 = vld [vmem:[%s3 + $0xc0] sm:$0xff]
    %v4244 = vld [vmem:[%s3 + $0xc8] sm:$0xff]
    %v4245 = vld [vmem:[%s3 + $0xd0] sm:$0xff]
    %v4246 = vld [vmem:[%s3 + $0xd8] sm:$0xff]
    %v4247 = vld [vmem:[%s3 + $0xe0] sm:$0xff]
    %v4248 = vld [vmem:[%s3 + $0xe8] sm:$0xff]
    %v4249 = vld [vmem:[%s3 + $0xf0] sm:$0xff]
    %v4250 = vld [vmem:[%s3 + $0xf8] sm:$0xff]
    %v4251 = vld [vmem:[%s3 + $0x100] sm:$0xff]
    %v4252 = vld [vmem:[%s3 + $0x108] sm:$0xff]
    %v4253 = vld [vmem:[%s3 + $0x110] sm:$0xff]
    %v4254 = vld [vmem:[%s3 + $0x118] sm:$0xff]
    %v4255 = vld [vmem:[%s3 + $0x120] sm:$0xff]
    %v4256 = vld [vmem:[%s3 + $0x128] sm:$0xff]
    %v4257 = vld [vmem:[%s3 + $0x130] sm:$0xff]
    %v4258 = vld [vmem:[%s3 + $0x138] sm:$0xff]
    %v4259 = vld [vmem:[%s3 + $0x140] sm:$0xff]
    %v4260 = vld [vmem:[%s3 + $0x148] sm:$0xff]
    %v4261 = vld [vmem:[%s3 + $0x150] sm:$0xff]
    %v4262 = vld [vmem:[%s3 + $0x158] sm:$0xff]
    %v4263 = vld [vmem:[%s3 + $0x160] sm:$0xff]
    %v4264 = vld [vmem:[%s3 + $0x168] sm:$0xff]
    %v4265 = vld [vmem:[%s3 + $0x170] sm:$0xff]
    %v4266 = vld [vmem:[%s3 + $0x178] sm:$0xff]
    %v4267 = vld [vmem:[%s3 + $0x180] sm:$0xff]
    %v4268 = vld [vmem:[%s3 + $0x188] sm:$0xff]
    %v4269 = vld [vmem:[%s3 + $0x190] sm:$0xff]
    %v4270 = vld [vmem:[%s3 + $0x198] sm:$0xff]
    %v4271 = vld [vmem:[%s3 + $0x1a0] sm:$0xff]
    %v4272 = vld [vmem:[%s3 + $0x1a8] sm:$0xff]
    %v4273 = vld [vmem:[%s3 + $0x1b0] sm:$0xff]
    %v4274 = vld [vmem:[%s3 + $0x1b8] sm:$0xff]
    %v4275 = vld [vmem:[%s3 + $0x1c0] sm:$0xff]
    %v4276 = vld [vmem:[%s3 + $0x1c8] sm:$0xff]
    %v4277 = vld [vmem:[%s3 + $0x1d0] sm:$0xff]
    %v4278 = vld [vmem:[%s3 + $0x1d8] sm:$0xff]
    %v4279 = vld [vmem:[%s3 + $0x1e0] sm:$0xff]
    %v4280 = vld [vmem:[%s3 + $0x1e8] sm:$0xff]
    %v4281 = vld [vmem:[%s3 + $0x1f0] sm:$0xff]
    %v4282 = vld [vmem:[%s3 + $0x1f8] sm:$0xff]
    %v4283 = vld [vmem:[%s3 + $0x200] sm:$0xff]
    %v4284 = vld [vmem:[%s3 + $0x208] sm:$0xff]
    %v4285 = vld [vmem:[%s3 + $0x210] sm:$0xff]
    %v4286 = vld [vmem:[%s3 + $0x218] sm:$0xff]
    %v4287 = vld [vmem:[%s3 + $0x220] sm:$0xff]
    %v4288 = vld [vmem:[%s3 + $0x228] sm:$0xff]
    %v4289 = vld [vmem:[%s3 + $0x230] sm:$0xff]
    %v4290 = vld [vmem:[%s3 + $0x238] sm:$0xff]
    %v4291 = vld [vmem:[%s3 + $0x240] sm:$0xff]
    %v4292 = vld [vmem:[%s3 + $0x248] sm:$0xff]
    %v4293 = vld [vmem:[%s3 + $0x250] sm:$0xff]
    %v4294 = vld [vmem:[%s3 + $0x258] sm:$0xff]
    %v4295 = vld [vmem:[%s3 + $0x260] sm:$0xff]
    %v4296 = vld [vmem:[%s3 + $0x268] sm:$0xff]
    %v4297 = vld [vmem:[%s3 + $0x270] sm:$0xff]
    %v4298 = vld [vmem:[%s3 + $0x278] sm:$0xff]
    %v4299 = vld [vmem:[%s3 + $0x280] sm:$0xff]
    %v4300 = vld [vmem:[%s3 + $0x288] sm:$0xff]
    %v4301 = vld [vmem:[%s3 + $0x290] sm:$0xff]
    %v4302 = vld [vmem:[%s3 + $0x298] sm:$0xff]
    %v4303 = vld [vmem:[%s3 + $0x2a0] sm:$0xff]
    %v4304 = vld [vmem:[%s3 + $0x2a8] sm:$0xff]
    %v4305 = vld [vmem:[%s3 + $0x2b0] sm:$0xff]
    %v4306 = vld [vmem:[%s3 + $0x2b8] sm:$0xff]
    %v4307 = vld [vmem:[%s3 + $0x2c0] sm:$0xff]
    %v4308 = vld [vmem:[%s3 + $0x2c8] sm:$0xff]
    %v4309 = vld [vmem:[%s3 + $0x2d0] sm:$0xff]
    %v4310 = vld [vmem:[%s3 + $0x2d8] sm:$0xff]
    %v4311 = vld [vmem:[%s3 + $0x2e0] sm:$0xff]
    %v4312 = vld [vmem:[%s3 + $0x2e8] sm:$0xff]
    %v4313 = vld [vmem:[%s3 + $0x2f0] sm:$0xff]
    %v4314 = vld [vmem:[%s3 + $0x2f8] sm:$0xff]
    %v4315 = vld [vmem:[%s3 + $0x300] sm:$0xff]
    %v4316 = vld [vmem:[%s3 + $0x308] sm:$0xff]
    %v4317 = vld [vmem:[%s3 + $0x310] sm:$0xff]
    %v4318 = vld [vmem:[%s3 + $0x318] sm:$0xff]
    %v4319 = vld [vmem:[%s3 + $0x320] sm:$0xff]
    %v4320 = vld [vmem:[%s3 + $0x328] sm:$0xff]
    %v4321 = vld [vmem:[%s3 + $0x330] sm:$0xff]
    %v4322 = vld [vmem:[%s3 + $0x338] sm:$0xff]
    %v4323 = vld [vmem:[%s3 + $0x340] sm:$0xff]
    %v4324 = vld [vmem:[%s3 + $0x348] sm:$0xff]
    %v4325 = vld [vmem:[%s3 + $0x350] sm:$0xff]
    %v4326 = vld [vmem:[%s3 + $0x358] sm:$0xff]
    %v4327 = vld [vmem:[%s3 + $0x360] sm:$0xff]
    %v4328 = vld [vmem:[%s3 + $0x368] sm:$0xff]
    %v4329 = vld [vmem:[%s3 + $0x370] sm:$0xff]
    %v4330 = vld [vmem:[%s3 + $0x378] sm:$0xff]
    %v4331 = vld [vmem:[%s3 + $0x380] sm:$0xff]
    %v4332 = vld [vmem:[%s3 + $0x388] sm:$0xff]
    %v4333 = vld [vmem:[%s3 + $0x390] sm:$0xff]
    %v4334 = vld [vmem:[%s3 + $0x398] sm:$0xff]
    %v4335 = vld [vmem:[%s3 + $0x3a0] sm:$0xff]
    %v4336 = vld [vmem:[%s3 + $0x3a8] sm:$0xff]
    %v4337 = vld [vmem:[%s3 + $0x3b0] sm:$0xff]
    %v4338 = vld [vmem:[%s3 + $0x3b8] sm:$0xff]
    %v4339 = vld [vmem:[%s3 + $0x3c0] sm:$0xff]
    %v4340 = vld [vmem:[%s3 + $0x3c8] sm:$0xff]
    %v4341 = vld [vmem:[%s3 + $0x3d0] sm:$0xff]
    %v4342 = vld [vmem:[%s3 + $0x3d8] sm:$0xff]
    %v4343 = vld [vmem:[%s3 + $0x3e0] sm:$0xff]
    %v4344 = vld [vmem:[%s3 + $0x3e8] sm:$0xff]
    %v4345 = vld [vmem:[%s3 + $0x3f0] sm:$0xff]
    %v4346 = vld [vmem:[%s3 + $0x3f8] sm:$0xff]
    %v4347 = vld [vmem:[#allocation7] sm:$0xf]
    %v4349 = vlaneseq
    %v4350 = vshrl.u32 %v4349, 7
    %v4351 = vsub.s32 0, %v4350
    %v4352 = vrot.slane %v4347, %v4351
    %v4353 = vlaneseq
    %v4354 = vshrl.u32 %v4353, 7
    %v4355 = vsub.s32 1, %v4354
    %v4356 = vrot.slane %v4347, %v4355
    %v4357 = vlaneseq
    %v4358 = vshrl.u32 %v4357, 7
    %v4359 = vsub.s32 2, %v4358
    %v4360 = vrot.slane %v4347, %v4359
    %v4361 = vlaneseq
    %v4362 = vshrl.u32 %v4361, 7
    %v4363 = vsub.s32 3, %v4362
    %v4364 = vrot.slane %v4347, %v4363
    %v4497 = vunpack.c.l.b16 %v4219
    %v4498 = vunpack.c.h.b16 %v4219
    %v4499 = vunpack.c.l.b16 %v4220
    %v4500 = vunpack.c.h.b16 %v4220
    %v4501 = vunpack.c.l.b16 %v4221
    %v4502 = vunpack.c.h.b16 %v4221
    %v4503 = vunpack.c.l.b16 %v4222
    %v4504 = vunpack.c.h.b16 %v4222
    %v4505 = vunpack.c.l.b16 %v4223
    %v4506 = vunpack.c.h.b16 %v4223
    %v4507 = vunpack.c.l.b16 %v4224
    %v4508 = vunpack.c.h.b16 %v4224
    %v4509 = vunpack.c.l.b16 %v4225
    %v4510 = vunpack.c.h.b16 %v4225
    %v4511 = vunpack.c.l.b16 %v4226
    %v4512 = vunpack.c.h.b16 %v4226
    %v4513 = vunpack.c.l.b16 %v4227
    %v4514 = vunpack.c.h.b16 %v4227
    %v4515 = vunpack.c.l.b16 %v4228
    %v4516 = vunpack.c.h.b16 %v4228
    %v4517 = vunpack.c.l.b16 %v4229
    %v4518 = vunpack.c.h.b16 %v4229
    %v4519 = vunpack.c.l.b16 %v4230
    %v4520 = vunpack.c.h.b16 %v4230
    %v4521 = vunpack.c.l.b16 %v4231
    %v4522 = vunpack.c.h.b16 %v4231
    %v4523 = vunpack.c.l.b16 %v4232
    %v4524 = vunpack.c.h.b16 %v4232
    %v4525 = vunpack.c.l.b16 %v4233
    %v4526 = vunpack.c.h.b16 %v4233
    %v4527 = vunpack.c.l.b16 %v4234
    %v4528 = vunpack.c.h.b16 %v4234
    %v4529 = vunpack.c.l.b16 %v4235
    %v4530 = vunpack.c.h.b16 %v4235
    %v4531 = vunpack.c.l.b16 %v4236
    %v4532 = vunpack.c.h.b16 %v4236
    %v4533 = vunpack.c.l.b16 %v4237
    %v4534 = vunpack.c.h.b16 %v4237
    %v4535 = vunpack.c.l.b16 %v4238
    %v4536 = vunpack.c.h.b16 %v4238
    %v4537 = vunpack.c.l.b16 %v4239
    %v4538 = vunpack.c.h.b16 %v4239
    %v4539 = vunpack.c.l.b16 %v4240
    %v4540 = vunpack.c.h.b16 %v4240
    %v4541 = vunpack.c.l.b16 %v4241
    %v4542 = vunpack.c.h.b16 %v4241
    %v4543 = vunpack.c.l.b16 %v4242
    %v4544 = vunpack.c.h.b16 %v4242
    %v4545 = vunpack.c.l.b16 %v4243
    %v4546 = vunpack.c.h.b16 %v4243
    %v4547 = vunpack.c.l.b16 %v4244
    %v4548 = vunpack.c.h.b16 %v4244
    %v4549 = vunpack.c.l.b16 %v4245
    %v4550 = vunpack.c.h.b16 %v4245
    %v4551 = vunpack.c.l.b16 %v4246
    %v4552 = vunpack.c.h.b16 %v4246
    %v4553 = vunpack.c.l.b16 %v4247
    %v4554 = vunpack.c.h.b16 %v4247
    %v4555 = vunpack.c.l.b16 %v4248
    %v4556 = vunpack.c.h.b16 %v4248
    %v4557 = vunpack.c.l.b16 %v4249
    %v4558 = vunpack.c.h.b16 %v4249
    %v4559 = vunpack.c.l.b16 %v4250
    %v4560 = vunpack.c.h.b16 %v4250
    %v4561 = vunpack.c.l.b16 %v4251
    %v4562 = vunpack.c.h.b16 %v4251
    %v4563 = vunpack.c.l.b16 %v4252
    %v4564 = vunpack.c.h.b16 %v4252
    %v4565 = vunpack.c.l.b16 %v4253
    %v4566 = vunpack.c.h.b16 %v4253
    %v4567 = vunpack.c.l.b16 %v4254
    %v4568 = vunpack.c.h.b16 %v4254
    %v4569 = vunpack.c.l.b16 %v4255
    %v4570 = vunpack.c.h.b16 %v4255
    %v4571 = vunpack.c.l.b16 %v4256
    %v4572 = vunpack.c.h.b16 %v4256
    %v4573 = vunpack.c.l.b16 %v4257
    %v4574 = vunpack.c.h.b16 %v4257
    %v4575 = vunpack.c.l.b16 %v4258
    %v4576 = vunpack.c.h.b16 %v4258
    %v4577 = vunpack.c.l.b16 %v4259
    %v4578 = vunpack.c.h.b16 %v4259
    %v4579 = vunpack.c.l.b16 %v4260
    %v4580 = vunpack.c.h.b16 %v4260
    %v4581 = vunpack.c.l.b16 %v4261
    %v4582 = vunpack.c.h.b16 %v4261
    %v4583 = vunpack.c.l.b16 %v4262
    %v4584 = vunpack.c.h.b16 %v4262
    %v4585 = vunpack.c.l.b16 %v4263
    %v4586 = vunpack.c.h.b16 %v4263
    %v4587 = vunpack.c.l.b16 %v4264
    %v4588 = vunpack.c.h.b16 %v4264
    %v4589 = vunpack.c.l.b16 %v4265
    %v4590 = vunpack.c.h.b16 %v4265
    %v4591 = vunpack.c.l.b16 %v4266
    %v4592 = vunpack.c.h.b16 %v4266
    %v4593 = vunpack.c.l.b16 %v4267
    %v4594 = vunpack.c.h.b16 %v4267
    %v4595 = vunpack.c.l.b16 %v4268
    %v4596 = vunpack.c.h.b16 %v4268
    %v4597 = vunpack.c.l.b16 %v4269
    %v4598 = vunpack.c.h.b16 %v4269
    %v4599 = vunpack.c.l.b16 %v4270
    %v4600 = vunpack.c.h.b16 %v4270
    %v4601 = vunpack.c.l.b16 %v4271
    %v4602 = vunpack.c.h.b16 %v4271
    %v4603 = vunpack.c.l.b16 %v4272
    %v4604 = vunpack.c.h.b16 %v4272
    %v4605 = vunpack.c.l.b16 %v4273
    %v4606 = vunpack.c.h.b16 %v4273
    %v4607 = vunpack.c.l.b16 %v4274
    %v4608 = vunpack.c.h.b16 %v4274
    %v4609 = vunpack.c.l.b16 %v4275
    %v4610 = vunpack.c.h.b16 %v4275
    %v4611 = vunpack.c.l.b16 %v4276
    %v4612 = vunpack.c.h.b16 %v4276
    %v4613 = vunpack.c.l.b16 %v4277
    %v4614 = vunpack.c.h.b16 %v4277
    %v4615 = vunpack.c.l.b16 %v4278
    %v4616 = vunpack.c.h.b16 %v4278
    %v4617 = vunpack.c.l.b16 %v4279
    %v4618 = vunpack.c.h.b16 %v4279
    %v4619 = vunpack.c.l.b16 %v4280
    %v4620 = vunpack.c.h.b16 %v4280
    %v4621 = vunpack.c.l.b16 %v4281
    %v4622 = vunpack.c.h.b16 %v4281
    %v4623 = vunpack.c.l.b16 %v4282
    %v4624 = vunpack.c.h.b16 %v4282
    %v4625 = vunpack.c.l.b16 %v4283
    %v4626 = vunpack.c.h.b16 %v4283
    %v4627 = vunpack.c.l.b16 %v4284
    %v4628 = vunpack.c.h.b16 %v4284
    %v4629 = vunpack.c.l.b16 %v4285
    %v4630 = vunpack.c.h.b16 %v4285
    %v4631 = vunpack.c.l.b16 %v4286
    %v4632 = vunpack.c.h.b16 %v4286
    %v4633 = vunpack.c.l.b16 %v4287
    %v4634 = vunpack.c.h.b16 %v4287
    %v4635 = vunpack.c.l.b16 %v4288
    %v4636 = vunpack.c.h.b16 %v4288
    %v4637 = vunpack.c.l.b16 %v4289
    %v4638 = vunpack.c.h.b16 %v4289
    %v4639 = vunpack.c.l.b16 %v4290
    %v4640 = vunpack.c.h.b16 %v4290
    %v4641 = vunpack.c.l.b16 %v4291
    %v4642 = vunpack.c.h.b16 %v4291
    %v4643 = vunpack.c.l.b16 %v4292
    %v4644 = vunpack.c.h.b16 %v4292
    %v4645 = vunpack.c.l.b16 %v4293
    %v4646 = vunpack.c.h.b16 %v4293
    %v4647 = vunpack.c.l.b16 %v4294
    %v4648 = vunpack.c.h.b16 %v4294
    %v4649 = vunpack.c.l.b16 %v4295
    %v4650 = vunpack.c.h.b16 %v4295
    %v4651 = vunpack.c.l.b16 %v4296
    %v4652 = vunpack.c.h.b16 %v4296
    %v4653 = vunpack.c.l.b16 %v4297
    %v4654 = vunpack.c.h.b16 %v4297
    %v4655 = vunpack.c.l.b16 %v4298
    %v4656 = vunpack.c.h.b16 %v4298
    %v4657 = vunpack.c.l.b16 %v4299
    %v4658 = vunpack.c.h.b16 %v4299
    %v4659 = vunpack.c.l.b16 %v4300
    %v4660 = vunpack.c.h.b16 %v4300
    %v4661 = vunpack.c.l.b16 %v4301
    %v4662 = vunpack.c.h.b16 %v4301
    %v4663 = vunpack.c.l.b16 %v4302
    %v4664 = vunpack.c.h.b16 %v4302
    %v4665 = vunpack.c.l.b16 %v4303
    %v4666 = vunpack.c.h.b16 %v4303
    %v4667 = vunpack.c.l.b16 %v4304
    %v4668 = vunpack.c.h.b16 %v4304
    %v4669 = vunpack.c.l.b16 %v4305
    %v4670 = vunpack.c.h.b16 %v4305
    %v4671 = vunpack.c.l.b16 %v4306
    %v4672 = vunpack.c.h.b16 %v4306
    %v4673 = vunpack.c.l.b16 %v4307
    %v4674 = vunpack.c.h.b16 %v4307
    %v4675 = vunpack.c.l.b16 %v4308
    %v4676 = vunpack.c.h.b16 %v4308
    %v4677 = vunpack.c.l.b16 %v4309
    %v4678 = vunpack.c.h.b16 %v4309
    %v4679 = vunpack.c.l.b16 %v4310
    %v4680 = vunpack.c.h.b16 %v4310
    %v4681 = vunpack.c.l.b16 %v4311
    %v4682 = vunpack.c.h.b16 %v4311
    %v4683 = vunpack.c.l.b16 %v4312
    %v4684 = vunpack.c.h.b16 %v4312
    %v4685 = vunpack.c.l.b16 %v4313
    %v4686 = vunpack.c.h.b16 %v4313
    %v4687 = vunpack.c.l.b16 %v4314
    %v4688 = vunpack.c.h.b16 %v4314
    %v4689 = vunpack.c.l.b16 %v4315
    %v4690 = vunpack.c.h.b16 %v4315
    %v4691 = vunpack.c.l.b16 %v4316
    %v4692 = vunpack.c.h.b16 %v4316
    %v4693 = vunpack.c.l.b16 %v4317
    %v4694 = vunpack.c.h.b16 %v4317
    %v4695 = vunpack.c.l.b16 %v4318
    %v4696 = vunpack.c.h.b16 %v4318
    %v4697 = vunpack.c.l.b16 %v4319
    %v4698 = vunpack.c.h.b16 %v4319
    %v4699 = vunpack.c.l.b16 %v4320
    %v4700 = vunpack.c.h.b16 %v4320
    %v4701 = vunpack.c.l.b16 %v4321
    %v4702 = vunpack.c.h.b16 %v4321
    %v4703 = vunpack.c.l.b16 %v4322
    %v4704 = vunpack.c.h.b16 %v4322
    %v4705 = vunpack.c.l.b16 %v4323
    %v4706 = vunpack.c.h.b16 %v4323
    %v4707 = vunpack.c.l.b16 %v4324
    %v4708 = vunpack.c.h.b16 %v4324
    %v4709 = vunpack.c.l.b16 %v4325
    %v4710 = vunpack.c.h.b16 %v4325
    %v4711 = vunpack.c.l.b16 %v4326
    %v4712 = vunpack.c.h.b16 %v4326
    %v4713 = vunpack.c.l.b16 %v4327
    %v4714 = vunpack.c.h.b16 %v4327
    %v4715 = vunpack.c.l.b16 %v4328
    %v4716 = vunpack.c.h.b16 %v4328
    %v4717 = vunpack.c.l.b16 %v4329
    %v4718 = vunpack.c.h.b16 %v4329
    %v4719 = vunpack.c.l.b16 %v4330
    %v4720 = vunpack.c.h.b16 %v4330
    %v4721 = vunpack.c.l.b16 %v4331
    %v4722 = vunpack.c.h.b16 %v4331
    %v4723 = vunpack.c.l.b16 %v4332
    %v4724 = vunpack.c.h.b16 %v4332
    %v4725 = vunpack.c.l.b16 %v4333
    %v4726 = vunpack.c.h.b16 %v4333
    %v4727 = vunpack.c.l.b16 %v4334
    %v4728 = vunpack.c.h.b16 %v4334
    %v4729 = vunpack.c.l.b16 %v4335
    %v4730 = vunpack.c.h.b16 %v4335
    %v4731 = vunpack.c.l.b16 %v4336
    %v4732 = vunpack.c.h.b16 %v4336
    %v4733 = vunpack.c.l.b16 %v4337
    %v4734 = vunpack.c.h.b16 %v4337
    %v4735 = vunpack.c.l.b16 %v4338
    %v4736 = vunpack.c.h.b16 %v4338
    %v4737 = vunpack.c.l.b16 %v4339
    %v4738 = vunpack.c.h.b16 %v4339
    %v4739 = vunpack.c.l.b16 %v4340
    %v4740 = vunpack.c.h.b16 %v4340
    %v4741 = vunpack.c.l.b16 %v4341
    %v4742 = vunpack.c.h.b16 %v4341
    %v4743 = vunpack.c.l.b16 %v4342
    %v4744 = vunpack.c.h.b16 %v4342
    %v4745 = vunpack.c.l.b16 %v4343
    %v4746 = vunpack.c.h.b16 %v4343
    %v4747 = vunpack.c.l.b16 %v4344
    %v4748 = vunpack.c.h.b16 %v4344
    %v4749 = vunpack.c.l.b16 %v4345
    %v4750 = vunpack.c.h.b16 %v4345
    %v4751 = vunpack.c.l.b16 %v4346
    %v4752 = vunpack.c.h.b16 %v4346
    %v4753 = vpack.c.b16 %v4501, %v4497
    %v4754 = vpack.c.b16 %v4502, %v4498
    %v4755 = vpack.c.b16 %v4503, %v4499
    %v4756 = vpack.c.b16 %v4504, %v4500
    %v4757 = vpack.c.b16 %v4509, %v4505
    %v4758 = vpack.c.b16 %v4510, %v4506
    %v4759 = vpack.c.b16 %v4511, %v4507
    %v4760 = vpack.c.b16 %v4512, %v4508
    %v4761 = vpack.c.b16 %v4517, %v4513
    %v4762 = vpack.c.b16 %v4518, %v4514
    %v4763 = vpack.c.b16 %v4519, %v4515
    %v4764 = vpack.c.b16 %v4520, %v4516
    %v4765 = vpack.c.b16 %v4525, %v4521
    %v4766 = vpack.c.b16 %v4526, %v4522
    %v4767 = vpack.c.b16 %v4527, %v4523
    %v4768 = vpack.c.b16 %v4528, %v4524
    %v4769 = vpack.c.b16 %v4533, %v4529
    %v4770 = vpack.c.b16 %v4534, %v4530
    %v4771 = vpack.c.b16 %v4535, %v4531
    %v4772 = vpack.c.b16 %v4536, %v4532
    %v4773 = vpack.c.b16 %v4541, %v4537
    %v4774 = vpack.c.b16 %v4542, %v4538
    %v4775 = vpack.c.b16 %v4543, %v4539
    %v4776 = vpack.c.b16 %v4544, %v4540
    %v4777 = vpack.c.b16 %v4549, %v4545
    %v4778 = vpack.c.b16 %v4550, %v4546
    %v4779 = vpack.c.b16 %v4551, %v4547
    %v4780 = vpack.c.b16 %v4552, %v4548
    %v4781 = vpack.c.b16 %v4557, %v4553
    %v4782 = vpack.c.b16 %v4558, %v4554
    %v4783 = vpack.c.b16 %v4559, %v4555
    %v4784 = vpack.c.b16 %v4560, %v4556
    %v4785 = vpack.c.b16 %v4565, %v4561
    %v4786 = vpack.c.b16 %v4566, %v4562
    %v4787 = vpack.c.b16 %v4567, %v4563
    %v4788 = vpack.c.b16 %v4568, %v4564
    %v4789 = vpack.c.b16 %v4573, %v4569
    %v4790 = vpack.c.b16 %v4574, %v4570
    %v4791 = vpack.c.b16 %v4575, %v4571
    %v4792 = vpack.c.b16 %v4576, %v4572
    %v4793 = vpack.c.b16 %v4581, %v4577
    %v4794 = vpack.c.b16 %v4582, %v4578
    %v4795 = vpack.c.b16 %v4583, %v4579
    %v4796 = vpack.c.b16 %v4584, %v4580
    %v4797 = vpack.c.b16 %v4589, %v4585
    %v4798 = vpack.c.b16 %v4590, %v4586
    %v4799 = vpack.c.b16 %v4591, %v4587
    %v4800 = vpack.c.b16 %v4592, %v4588
    %v4801 = vpack.c.b16 %v4597, %v4593
    %v4802 = vpack.c.b16 %v4598, %v4594
    %v4803 = vpack.c.b16 %v4599, %v4595
    %v4804 = vpack.c.b16 %v4600, %v4596
    %v4805 = vpack.c.b16 %v4605, %v4601
    %v4806 = vpack.c.b16 %v4606, %v4602
    %v4807 = vpack.c.b16 %v4607, %v4603
    %v4808 = vpack.c.b16 %v4608, %v4604
    %v4809 = vpack.c.b16 %v4613, %v4609
    %v4810 = vpack.c.b16 %v4614, %v4610
    %v4811 = vpack.c.b16 %v4615, %v4611
    %v4812 = vpack.c.b16 %v4616, %v4612
    %v4813 = vpack.c.b16 %v4621, %v4617
    %v4814 = vpack.c.b16 %v4622, %v4618
    %v4815 = vpack.c.b16 %v4623, %v4619
    %v4816 = vpack.c.b16 %v4624, %v4620
    %v4817 = vpack.c.b16 %v4629, %v4625
    %v4818 = vpack.c.b16 %v4630, %v4626
    %v4819 = vpack.c.b16 %v4631, %v4627
    %v4820 = vpack.c.b16 %v4632, %v4628
    %v4821 = vpack.c.b16 %v4637, %v4633
    %v4822 = vpack.c.b16 %v4638, %v4634
    %v4823 = vpack.c.b16 %v4639, %v4635
    %v4824 = vpack.c.b16 %v4640, %v4636
    %v4825 = vpack.c.b16 %v4645, %v4641
    %v4826 = vpack.c.b16 %v4646, %v4642
    %v4827 = vpack.c.b16 %v4647, %v4643
    %v4828 = vpack.c.b16 %v4648, %v4644
    %v4829 = vpack.c.b16 %v4653, %v4649
    %v4830 = vpack.c.b16 %v4654, %v4650
    %v4831 = vpack.c.b16 %v4655, %v4651
    %v4832 = vpack.c.b16 %v4656, %v4652
    %v4833 = vpack.c.b16 %v4661, %v4657
    %v4834 = vpack.c.b16 %v4662, %v4658
    %v4835 = vpack.c.b16 %v4663, %v4659
    %v4836 = vpack.c.b16 %v4664, %v4660
    %v4837 = vpack.c.b16 %v4669, %v4665
    %v4838 = vpack.c.b16 %v4670, %v4666
    %v4839 = vpack.c.b16 %v4671, %v4667
    %v4840 = vpack.c.b16 %v4672, %v4668
    %v4841 = vpack.c.b16 %v4677, %v4673
    %v4842 = vpack.c.b16 %v4678, %v4674
    %v4843 = vpack.c.b16 %v4679, %v4675
    %v4844 = vpack.c.b16 %v4680, %v4676
    %v4845 = vpack.c.b16 %v4685, %v4681
    %v4846 = vpack.c.b16 %v4686, %v4682
    %v4847 = vpack.c.b16 %v4687, %v4683
    %v4848 = vpack.c.b16 %v4688, %v4684
    %v4849 = vpack.c.b16 %v4693, %v4689
    %v4850 = vpack.c.b16 %v4694, %v4690
    %v4851 = vpack.c.b16 %v4695, %v4691
    %v4852 = vpack.c.b16 %v4696, %v4692
    %v4853 = vpack.c.b16 %v4701, %v4697
    %v4854 = vpack.c.b16 %v4702, %v4698
    %v4855 = vpack.c.b16 %v4703, %v4699
    %v4856 = vpack.c.b16 %v4704, %v4700
    %v4857 = vpack.c.b16 %v4709, %v4705
    %v4858 = vpack.c.b16 %v4710, %v4706
    %v4859 = vpack.c.b16 %v4711, %v4707
    %v4860 = vpack.c.b16 %v4712, %v4708
    %v4861 = vpack.c.b16 %v4717, %v4713
    %v4862 = vpack.c.b16 %v4718, %v4714
    %v4863 = vpack.c.b16 %v4719, %v4715
    %v4864 = vpack.c.b16 %v4720, %v4716
    %v4865 = vpack.c.b16 %v4725, %v4721
    %v4866 = vpack.c.b16 %v4726, %v4722
    %v4867 = vpack.c.b16 %v4727, %v4723
    %v4868 = vpack.c.b16 %v4728, %v4724
    %v4869 = vpack.c.b16 %v4733, %v4729
    %v4870 = vpack.c.b16 %v4734, %v4730
    %v4871 = vpack.c.b16 %v4735, %v4731
    %v4872 = vpack.c.b16 %v4736, %v4732
    %v4873 = vpack.c.b16 %v4741, %v4737
    %v4874 = vpack.c.b16 %v4742, %v4738
    %v4875 = vpack.c.b16 %v4743, %v4739
    %v4876 = vpack.c.b16 %v4744, %v4740
    %v4877 = vpack.c.b16 %v4749, %v4745
    %v4878 = vpack.c.b16 %v4750, %v4746
    %v4879 = vpack.c.b16 %v4751, %v4747
    %v4880 = vpack.c.b16 %v4752, %v4748
    %5009 = vmatprep.subr.bf16.mxu0 %v4754
    %5010 = vmatpush1.bf16.msra.mxu0 %v4753
    %5011 = vmatprep.subr.bf16.mxu0 %v4758
    %5012 = vmatpush1.bf16.msra.mxu0 %v4757
    %5013 = vmatprep.subr.bf16.mxu0 %v4762
    %5014 = vmatpush1.bf16.msra.mxu0 %v4761
    %5015 = vmatprep.subr.bf16.mxu0 %v4766
    %5016 = vmatpush1.bf16.msra.mxu0 %v4765
    %5017 = vmatprep.subr.bf16.mxu0 %v4770
    %5018 = vmatpush1.bf16.msra.mxu0 %v4769
    %5019 = vmatprep.subr.bf16.mxu0 %v4774
    %5020 = vmatpush1.bf16.msra.mxu0 %v4773
    %5021 = vmatprep.subr.bf16.mxu0 %v4778
    %5022 = vmatpush1.bf16.msra.mxu0 %v4777
    %5023 = vmatprep.subr.bf16.mxu0 %v4782
    %5024 = vmatpush1.bf16.msra.mxu0 %v4781
    %5025 = vmatprep.subr.bf16.mxu0 %v4786
    %5026 = vmatpush1.bf16.msra.mxu0 %v4785
    %5027 = vmatprep.subr.bf16.mxu0 %v4790
    %5028 = vmatpush1.bf16.msra.mxu0 %v4789
    %5029 = vmatprep.subr.bf16.mxu0 %v4794
    %5030 = vmatpush1.bf16.msra.mxu0 %v4793
    %5031 = vmatprep.subr.bf16.mxu0 %v4798
    %5032 = vmatpush1.bf16.msra.mxu0 %v4797
    %5033 = vmatprep.subr.bf16.mxu0 %v4802
    %5034 = vmatpush1.bf16.msra.mxu0 %v4801
    %5035 = vmatprep.subr.bf16.mxu0 %v4806
    %5036 = vmatpush1.bf16.msra.mxu0 %v4805
    %5037 = vmatprep.subr.bf16.mxu0 %v4810
    %5038 = vmatpush1.bf16.msra.mxu0 %v4809
    %5039 = vmatprep.subr.bf16.mxu0 %v4814
    %5040 = vmatpush1.bf16.msra.mxu0 %v4813
    %5041 = vmatprep.mubr.bf16.mxu0 %v4212
    %5042 = vmatmul.mubr.bf16.gmra.mrb[0].mxu0 %v4211
    %v5043 = vpop.f32.mrb[0].mxu0
    %v5044 = vadd.f32 %v4352, %v5043
    %v5045 = vpop.f32.mrb[0].mxu0
    %v5046 = vadd.f32 %v4356, %v5045
    %v5047 = vpop.f32.mrb[0].mxu0
    %v5048 = vadd.f32 %v4352, %v5047
    %v5049 = vpop.f32.mrb[0].mxu0
    %v5050 = vadd.f32 %v4356, %v5049
    %5051 = vmatprep.mubr.bf16.mxu0 %v4216
    %5052 = vmatmul.mubr.bf16.gmra.mrb[0].mxu0 %v4215
    %v5053 = vpop.f32.mrb[0].mxu0
    %v5054 = vadd.f32 %v4352, %v5053
    %v5055 = vpop.f32.mrb[0].mxu0
    %v5056 = vadd.f32 %v4356, %v5055
    %v5057 = vpop.f32.mrb[0].mxu0
    %v5058 = vadd.f32 %v4352, %v5057
    %v5059 = vpop.f32.mrb[0].mxu0
    %v5060 = vadd.f32 %v4356, %v5059
    %5061 = vdwg.mxu0
    %5062 = vmatprep.subr.bf16.mxu0 %v4818
    %5063 = vmatpush1.bf16.msra.mxu0 %v4817
    %5064 = vmatprep.subr.bf16.mxu0 %v4822
    %5065 = vmatpush1.bf16.msra.mxu0 %v4821
    %5066 = vmatprep.subr.bf16.mxu0 %v4826
    %5067 = vmatpush1.bf16.msra.mxu0 %v4825
    %5068 = vmatprep.subr.bf16.mxu0 %v4830
    %5069 = vmatpush1.bf16.msra.mxu0 %v4829
    %5070 = vmatprep.subr.bf16.mxu0 %v4834
    %5071 = vmatpush1.bf16.msra.mxu0 %v4833
    %5072 = vmatprep.subr.bf16.mxu0 %v4838
    %5073 = vmatpush1.bf16.msra.mxu0 %v4837
    %5074 = vmatprep.subr.bf16.mxu0 %v4842
    %5075 = vmatpush1.bf16.msra.mxu0 %v4841
    %5076 = vmatprep.subr.bf16.mxu0 %v4846
    %5077 = vmatpush1.bf16.msra.mxu0 %v4845
    %5078 = vmatprep.subr.bf16.mxu0 %v4850
    %5079 = vmatpush1.bf16.msra.mxu0 %v4849
    %5080 = vmatprep.subr.bf16.mxu0 %v4854
    %5081 = vmatpush1.bf16.msra.mxu0 %v4853
    %5082 = vmatprep.subr.bf16.mxu0 %v4858
    %5083 = vmatpush1.bf16.msra.mxu0 %v4857
    %5084 = vmatprep.subr.bf16.mxu0 %v4862
    %5085 = vmatpush1.bf16.msra.mxu0 %v4861
    %5086 = vmatprep.subr.bf16.mxu0 %v4866
    %5087 = vmatpush1.bf16.msra.mxu0 %v4865
    %5088 = vmatprep.subr.bf16.mxu0 %v4870
    %5089 = vmatpush1.bf16.msra.mxu0 %v4869
    %5090 = vmatprep.subr.bf16.mxu0 %v4874
    %5091 = vmatpush1.bf16.msra.mxu0 %v4873
    %5092 = vmatprep.subr.bf16.mxu0 %v4878
    %5093 = vmatpush1.bf16.msra.mxu0 %v4877
    %5094 = vmatprep.mubr.bf16.mxu0 %v4214
    %5095 = vmatmul.mubr.bf16.gmra.mrb[0].mxu0 %v4213
    %v5096 = vpop.f32.mrb[0].mxu0
    %v5097 = vadd.f32 %v5044, %v5096
    %v5098 = vpop.f32.mrb[0].mxu0
    %v5099 = vadd.f32 %v5046, %v5098
    %v5100 = vpop.f32.mrb[0].mxu0
    %v5101 = vadd.f32 %v5048, %v5100
    %v5102 = vpop.f32.mrb[0].mxu0
    %v5103 = vadd.f32 %v5050, %v5102
    %5104 = vmatprep.mubr.bf16.mxu0 %v4218
    %5105 = vmatmul.mubr.bf16.gmra.mrb[0].mxu0 %v4217
    %v5106 = vpop.f32.mrb[0].mxu0
    %v5107 = vadd.f32 %v5054, %v5106
    %v5108 = vpop.f32.mrb[0].mxu0
    %v5109 = vadd.f32 %v5056, %v5108
    %v5110 = vpop.f32.mrb[0].mxu0
    %v5111 = vadd.f32 %v5058, %v5110
    %v5112 = vpop.f32.mrb[0].mxu0
    %v5113 = vadd.f32 %v5060, %v5112
    %5114 = vdwg.mxu0
    %5115 = vmatprep.subr.bf16.mxu0 %v4756
    %5116 = vmatpush1.bf16.msra.mxu0 %v4755
    %5117 = vmatprep.subr.bf16.mxu0 %v4760
    %5118 = vmatpush1.bf16.msra.mxu0 %v4759
    %5119 = vmatprep.subr.bf16.mxu0 %v4764
    %5120 = vmatpush1.bf16.msra.mxu0 %v4763
    %5121 = vmatprep.subr.bf16.mxu0 %v4768
    %5122 = vmatpush1.bf16.msra.mxu0 %v4767
    %5123 = vmatprep.subr.bf16.mxu0 %v4772
    %5124 = vmatpush1.bf16.msra.mxu0 %v4771
    %5125 = vmatprep.subr.bf16.mxu0 %v4776
    %5126 = vmatpush1.bf16.msra.mxu0 %v4775
    %5127 = vmatprep.subr.bf16.mxu0 %v4780
    %5128 = vmatpush1.bf16.msra.mxu0 %v4779
    %5129 = vmatprep.subr.bf16.mxu0 %v4784
    %5130 = vmatpush1.bf16.msra.mxu0 %v4783
    %5131 = vmatprep.subr.bf16.mxu0 %v4788
    %5132 = vmatpush1.bf16.msra.mxu0 %v4787
    %5133 = vmatprep.subr.bf16.mxu0 %v4792
    %5134 = vmatpush1.bf16.msra.mxu0 %v4791
    %5135 = vmatprep.subr.bf16.mxu0 %v4796
    %5136 = vmatpush1.bf16.msra.mxu0 %v4795
    %5137 = vmatprep.subr.bf16.mxu0 %v4800
    %5138 = vmatpush1.bf16.msra.mxu0 %v4799
    %5139 = vmatprep.subr.bf16.mxu0 %v4804
    %5140 = vmatpush1.bf16.msra.mxu0 %v4803
    %5141 = vmatprep.subr.bf16.mxu0 %v4808
    %5142 = vmatpush1.bf16.msra.mxu0 %v4807
    %5143 = vmatprep.subr.bf16.mxu0 %v4812
    %5144 = vmatpush1.bf16.msra.mxu0 %v4811
    %5145 = vmatprep.subr.bf16.mxu0 %v4816
    %5146 = vmatpush1.bf16.msra.mxu0 %v4815
    %5147 = vmatprep.mubr.bf16.mxu0 %v4212
    %5148 = vmatmul.mubr.bf16.gmra.mrb[0].mxu0 %v4211
    %v5149 = vpop.f32.mrb[0].mxu0
    %v5150 = vadd.f32 %v4360, %v5149
    %v5151 = vpop.f32.mrb[0].mxu0
    %v5152 = vadd.f32 %v4364, %v5151
    %v5153 = vpop.f32.mrb[0].mxu0
    %v5154 = vadd.f32 %v4360, %v5153
    %v5155 = vpop.f32.mrb[0].mxu0
    %v5156 = vadd.f32 %v4364, %v5155
    %5157 = vmatprep.mubr.bf16.mxu0 %v4216
    %5158 = vmatmul.mubr.bf16.gmra.mrb[0].mxu0 %v4215
    %v5159 = vpop.f32.mrb[0].mxu0
    %v5160 = vadd.f32 %v4360, %v5159
    %v5161 = vpop.f32.mrb[0].mxu0
    %v5162 = vadd.f32 %v4364, %v5161
    %v5163 = vpop.f32.mrb[0].mxu0
    %v5164 = vadd.f32 %v4360, %v5163
    %v5165 = vpop.f32.mrb[0].mxu0
    %v5166 = vadd.f32 %v4364, %v5165
    %5167 = vdwg.mxu0
    %5168 = vmatprep.subr.bf16.mxu0 %v4820
    %5169 = vmatpush1.bf16.msra.mxu0 %v4819
    %5170 = vmatprep.subr.bf16.mxu0 %v4824
    %5171 = vmatpush1.bf16.msra.mxu0 %v4823
    %5172 = vmatprep.subr.bf16.mxu0 %v4828
    %5173 = vmatpush1.bf16.msra.mxu0 %v4827
    %5174 = vmatprep.subr.bf16.mxu0 %v4832
    %5175 = vmatpush1.bf16.msra.mxu0 %v4831
    %5176 = vmatprep.subr.bf16.mxu0 %v4836
    %5177 = vmatpush1.bf16.msra.mxu0 %v4835
    %5178 = vmatprep.subr.bf16.mxu0 %v4840
    %5179 = vmatpush1.bf16.msra.mxu0 %v4839
    %5180 = vmatprep.subr.bf16.mxu0 %v4844
    %5181 = vmatpush1.bf16.msra.mxu0 %v4843
    %5182 = vmatprep.subr.bf16.mxu0 %v4848
    %5183 = vmatpush1.bf16.msra.mxu0 %v4847
    %5184 = vmatprep.subr.bf16.mxu0 %v4852
    %5185 = vmatpush1.bf16.msra.mxu0 %v4851
    %5186 = vmatprep.subr.bf16.mxu0 %v4856
    %5187 = vmatpush1.bf16.msra.mxu0 %v4855
    %5188 = vmatprep.subr.bf16.mxu0 %v4860
    %5189 = vmatpush1.bf16.msra.mxu0 %v4859
    %5190 = vmatprep.subr.bf16.mxu0 %v4864
    %5191 = vmatpush1.bf16.msra.mxu0 %v4863
    %5192 = vmatprep.subr.bf16.mxu0 %v4868
    %5193 = vmatpush1.bf16.msra.mxu0 %v4867
    %5194 = vmatprep.subr.bf16.mxu0 %v4872
    %5195 = vmatpush1.bf16.msra.mxu0 %v4871
    %5196 = vmatprep.subr.bf16.mxu0 %v4876
    %5197 = vmatpush1.bf16.msra.mxu0 %v4875
    %5198 = vmatprep.subr.bf16.mxu0 %v4880
    %5199 = vmatpush1.bf16.msra.mxu0 %v4879
    %5200 = vmatprep.mubr.bf16.mxu0 %v4214
    %5201 = vmatmul.mubr.bf16.gmra.mrb[0].mxu0 %v4213
    %v5202 = vpop.f32.mrb[0].mxu0
    %v5203 = vadd.f32 %v5150, %v5202
    %v5204 = vpop.f32.mrb[0].mxu0
    %v5205 = vadd.f32 %v5152, %v5204
    %v5206 = vpop.f32.mrb[0].mxu0
    %v5207 = vadd.f32 %v5154, %v5206
    %v5208 = vpop.f32.mrb[0].mxu0
    %v5209 = vadd.f32 %v5156, %v5208
    %5210 = vmatprep.mubr.bf16.mxu0 %v4218
    %5211 = vmatmul.mubr.bf16.gmra.mrb[0].mxu0 %v4217
    %v5212 = vpop.f32.mrb[0].mxu0
    %v5213 = vadd.f32 %v5160, %v5212
    %v5214 = vpop.f32.mrb[0].mxu0
    %v5215 = vadd.f32 %v5162, %v5214
    %v5216 = vpop.f32.mrb[0].mxu0
    %v5217 = vadd.f32 %v5164, %v5216
    %v5218 = vpop.f32.mrb[0].mxu0
    %v5219 = vadd.f32 %v5166, %v5218
    %5220 = vdwg.mxu0
    %v5221 = vmax.f32 %v5097, 0.0
    %v5222 = vmax.f32 %v5099, 0.0
    %v5223 = vmax.f32 %v5203, 0.0
    %v5224 = vmax.f32 %v5205, 0.0
    %v5225 = vmax.f32 %v5101, 0.0
    %v5226 = vmax.f32 %v5103, 0.0
    %v5227 = vmax.f32 %v5207, 0.0
    %v5228 = vmax.f32 %v5209, 0.0
    %v5229 = vmax.f32 %v5107, 0.0
    %v5230 = vmax.f32 %v5109, 0.0
    %v5231 = vmax.f32 %v5213, 0.0
    %v5232 = vmax.f32 %v5215, 0.0
    %v5233 = vmax.f32 %v5111, 0.0
    %v5234 = vmax.f32 %v5113, 0.0
    %v5235 = vmax.f32 %v5217, 0.0
    %v5236 = vmax.f32 %v5219, 0.0
    %v5237 = vpack.c.bf16 %v5225, %v5221
    %v5238 = vpack.c.bf16 %v5226, %v5222
    %v5239 = vpack.c.bf16 %v5227, %v5223
    %v5240 = vpack.c.bf16 %v5228, %v5224
    %v5241 = vpack.c.bf16 %v5233, %v5229
    %v5242 = vpack.c.bf16 %v5234, %v5230
    %v5243 = vpack.c.bf16 %v5235, %v5231
    %v5244 = vpack.c.bf16 %v5236, %v5232
    %v5245 = vld [vmem:[%s5] sm:$0xf]
    %v5246 = vld [vmem:[%s5 + $0x4] sm:$0xf]
    %v5247 = vld [vmem:[%s5 + $0x8] sm:$0xf]
    %v5248 = vld [vmem:[%s5 + $0xc] sm:$0xf]
    %v5249 = vld [vmem:[%s5 + $0x10] sm:$0xf]
    %v5250 = vld [vmem:[%s5 + $0x14] sm:$0xf]
    %v5251 = vld [vmem:[%s5 + $0x18] sm:$0xf]
    %v5252 = vld [vmem:[%s5 + $0x1c] sm:$0xf]
    %v5253 = vld [vmem:[%s5 + $0x20] sm:$0xf]
    %v5254 = vld [vmem:[%s5 + $0x24] sm:$0xf]
    %v5255 = vld [vmem:[%s5 + $0x28] sm:$0xf]
    %v5256 = vld [vmem:[%s5 + $0x2c] sm:$0xf]
    %v5257 = vld [vmem:[%s5 + $0x30] sm:$0xf]
    %v5258 = vld [vmem:[%s5 + $0x34] sm:$0xf]
    %v5259 = vld [vmem:[%s5 + $0x38] sm:$0xf]
    %v5260 = vld [vmem:[%s5 + $0x3c] sm:$0xf]
    %v5261 = vld [vmem:[%s5 + $0x40] sm:$0xf]
    %v5262 = vld [vmem:[%s5 + $0x44] sm:$0xf]
    %v5263 = vld [vmem:[%s5 + $0x48] sm:$0xf]
    %v5264 = vld [vmem:[%s5 + $0x4c] sm:$0xf]
    %v5265 = vld [vmem:[%s5 + $0x50] sm:$0xf]
    %v5266 = vld [vmem:[%s5 + $0x54] sm:$0xf]
    %v5267 = vld [vmem:[%s5 + $0x58] sm:$0xf]
    %v5268 = vld [vmem:[%s5 + $0x5c] sm:$0xf]
    %v5269 = vld [vmem:[%s5 + $0x60] sm:$0xf]
    %v5270 = vld [vmem:[%s5 + $0x64] sm:$0xf]
    %v5271 = vld [vmem:[%s5 + $0x68] sm:$0xf]
    %v5272 = vld [vmem:[%s5 + $0x6c] sm:$0xf]
    %v5273 = vld [vmem:[%s5 + $0x70] sm:$0xf]
    %v5274 = vld [vmem:[%s5 + $0x74] sm:$0xf]
    %v5275 = vld [vmem:[%s5 + $0x78] sm:$0xf]
    %v5276 = vld [vmem:[%s5 + $0x7c] sm:$0xf]
    %v5277 = vld [vmem:[%s5 + $0x80] sm:$0xf]
    %v5278 = vld [vmem:[%s5 + $0x84] sm:$0xf]
    %v5279 = vld [vmem:[%s5 + $0x88] sm:$0xf]
    %v5280 = vld [vmem:[%s5 + $0x8c] sm:$0xf]
    %v5281 = vld [vmem:[%s5 + $0x90] sm:$0xf]
    %v5282 = vld [vmem:[%s5 + $0x94] sm:$0xf]
    %v5283 = vld [vmem:[%s5 + $0x98] sm:$0xf]
    %v5284 = vld [vmem:[%s5 + $0x9c] sm:$0xf]
    %v5285 = vld [vmem:[%s5 + $0xa0] sm:$0xf]
    %v5286 = vld [vmem:[%s5 + $0xa4] sm:$0xf]
    %v5287 = vld [vmem:[%s5 + $0xa8] sm:$0xf]
    %v5288 = vld [vmem:[%s5 + $0xac] sm:$0xf]
    %v5289 = vld [vmem:[%s5 + $0xb0] sm:$0xf]
    %v5290 = vld [vmem:[%s5 + $0xb4] sm:$0xf]
    %v5291 = vld [vmem:[%s5 + $0xb8] sm:$0xf]
    %v5292 = vld [vmem:[%s5 + $0xbc] sm:$0xf]
    %v5293 = vld [vmem:[%s5 + $0xc0] sm:$0xf]
    %v5294 = vld [vmem:[%s5 + $0xc4] sm:$0xf]
    %v5295 = vld [vmem:[%s5 + $0xc8] sm:$0xf]
    %v5296 = vld [vmem:[%s5 + $0xcc] sm:$0xf]
    %v5297 = vld [vmem:[%s5 + $0xd0] sm:$0xf]
    %v5298 = vld [vmem:[%s5 + $0xd4] sm:$0xf]
    %v5299 = vld [vmem:[%s5 + $0xd8] sm:$0xf]
    %v5300 = vld [vmem:[%s5 + $0xdc] sm:$0xf]
    %v5301 = vld [vmem:[%s5 + $0xe0] sm:$0xf]
    %v5302 = vld [vmem:[%s5 + $0xe4] sm:$0xf]
    %v5303 = vld [vmem:[%s5 + $0xe8] sm:$0xf]
    %v5304 = vld [vmem:[%s5 + $0xec] sm:$0xf]
    %v5305 = vld [vmem:[%s5 + $0xf0] sm:$0xf]
    %v5306 = vld [vmem:[%s5 + $0xf4] sm:$0xf]
    %v5307 = vld [vmem:[%s5 + $0xf8] sm:$0xf]
    %v5308 = vld [vmem:[%s5 + $0xfc] sm:$0xf]
    %v5309 = vld [vmem:[#allocation8] sm:$0x1]
    %v5311 = vlaneseq
    %v5312 = vshrl.u32 %v5311, 7
    %v5313 = vsub.s32 0, %v5312
    %v5314 = vrot.slane %v5309, %v5313
    %v5380 = vunpack.c.l.b16 %v5245
    %v5381 = vunpack.c.l.b16 %v5246
    %v5382 = vunpack.c.l.b16 %v5247
    %v5383 = vunpack.c.l.b16 %v5248
    %v5384 = vunpack.c.l.b16 %v5249
    %v5385 = vunpack.c.l.b16 %v5250
    %v5386 = vunpack.c.l.b16 %v5251
    %v5387 = vunpack.c.l.b16 %v5252
    %v5388 = vunpack.c.l.b16 %v5253
    %v5389 = vunpack.c.l.b16 %v5254
    %v5390 = vunpack.c.l.b16 %v5255
    %v5391 = vunpack.c.l.b16 %v5256
    %v5392 = vunpack.c.l.b16 %v5257
    %v5393 = vunpack.c.l.b16 %v5258
    %v5394 = vunpack.c.l.b16 %v5259
    %v5395 = vunpack.c.l.b16 %v5260
    %v5396 = vunpack.c.l.b16 %v5261
    %v5397 = vunpack.c.l.b16 %v5262
    %v5398 = vunpack.c.l.b16 %v5263
    %v5399 = vunpack.c.l.b16 %v5264
    %v5400 = vunpack.c.l.b16 %v5265
    %v5401 = vunpack.c.l.b16 %v5266
    %v5402 = vunpack.c.l.b16 %v5267
    %v5403 = vunpack.c.l.b16 %v5268
    %v5404 = vunpack.c.l.b16 %v5269
    %v5405 = vunpack.c.l.b16 %v5270
    %v5406 = vunpack.c.l.b16 %v5271
    %v5407 = vunpack.c.l.b16 %v5272
    %v5408 = vunpack.c.l.b16 %v5273
    %v5409 = vunpack.c.l.b16 %v5274
    %v5410 = vunpack.c.l.b16 %v5275
    %v5411 = vunpack.c.l.b16 %v5276
    %v5412 = vunpack.c.l.b16 %v5277
    %v5413 = vunpack.c.l.b16 %v5278
    %v5414 = vunpack.c.l.b16 %v5279
    %v5415 = vunpack.c.l.b16 %v5280
    %v5416 = vunpack.c.l.b16 %v5281
    %v5417 = vunpack.c.l.b16 %v5282
    %v5418 = vunpack.c.l.b16 %v5283
    %v5419 = vunpack.c.l.b16 %v5284
    %v5420 = vunpack.c.l.b16 %v5285
    %v5421 = vunpack.c.l.b16 %v5286
    %v5422 = vunpack.c.l.b16 %v5287
    %v5423 = vunpack.c.l.b16 %v5288
    %v5424 = vunpack.c.l.b16 %v5289
    %v5425 = vunpack.c.l.b16 %v5290
    %v5426 = vunpack.c.l.b16 %v5291
    %v5427 = vunpack.c.l.b16 %v5292
    %v5428 = vunpack.c.l.b16 %v5293
    %v5429 = vunpack.c.l.b16 %v5294
    %v5430 = vunpack.c.l.b16 %v5295
    %v5431 = vunpack.c.l.b16 %v5296
    %v5432 = vunpack.c.l.b16 %v5297
    %v5433 = vunpack.c.l.b16 %v5298
    %v5434 = vunpack.c.l.b16 %v5299
    %v5435 = vunpack.c.l.b16 %v5300
    %v5436 = vunpack.c.l.b16 %v5301
    %v5437 = vunpack.c.l.b16 %v5302
    %v5438 = vunpack.c.l.b16 %v5303
    %v5439 = vunpack.c.l.b16 %v5304
    %v5440 = vunpack.c.l.b16 %v5305
    %v5441 = vunpack.c.l.b16 %v5306
    %v5442 = vunpack.c.l.b16 %v5307
    %v5443 = vunpack.c.l.b16 %v5308
    %v5444 = vpack.c.b16 %v5381, %v5380
    %v5445 = vpack.c.b16 %v5383, %v5382
    %v5446 = vpack.c.b16 %v5385, %v5384
    %v5447 = vpack.c.b16 %v5387, %v5386
    %v5448 = vpack.c.b16 %v5389, %v5388
    %v5449 = vpack.c.b16 %v5391, %v5390
    %v5450 = vpack.c.b16 %v5393, %v5392
    %v5451 = vpack.c.b16 %v5395, %v5394
    %v5452 = vpack.c.b16 %v5397, %v5396
    %v5453 = vpack.c.b16 %v5399, %v5398
    %v5454 = vpack.c.b16 %v5401, %v5400
    %v5455 = vpack.c.b16 %v5403, %v5402
    %v5456 = vpack.c.b16 %v5405, %v5404
    %v5457 = vpack.c.b16 %v5407, %v5406
    %v5458 = vpack.c.b16 %v5409, %v5408
    %v5459 = vpack.c.b16 %v5411, %v5410
    %v5460 = vpack.c.b16 %v5413, %v5412
    %v5461 = vpack.c.b16 %v5415, %v5414
    %v5462 = vpack.c.b16 %v5417, %v5416
    %v5463 = vpack.c.b16 %v5419, %v5418
    %v5464 = vpack.c.b16 %v5421, %v5420
    %v5465 = vpack.c.b16 %v5423, %v5422
    %v5466 = vpack.c.b16 %v5425, %v5424
    %v5467 = vpack.c.b16 %v5427, %v5426
    %v5468 = vpack.c.b16 %v5429, %v5428
    %v5469 = vpack.c.b16 %v5431, %v5430
    %v5470 = vpack.c.b16 %v5433, %v5432
    %v5471 = vpack.c.b16 %v5435, %v5434
    %v5472 = vpack.c.b16 %v5437, %v5436
    %v5473 = vpack.c.b16 %v5439, %v5438
    %v5474 = vpack.c.b16 %v5441, %v5440
    %v5475 = vpack.c.b16 %v5443, %v5442
    %5508 = vmatprep.subr.bf16.mxu0 0
    %5509 = vmatpush1.bf16.msra.mxu0 %v5444
    %5510 = vmatprep.subr.bf16.mxu0 0
    %5511 = vmatpush1.bf16.msra.mxu0 %v5445
    %5512 = vmatprep.subr.bf16.mxu0 0
    %5513 = vmatpush1.bf16.msra.mxu0 %v5446
    %5514 = vmatprep.subr.bf16.mxu0 0
    %5515 = vmatpush1.bf16.msra.mxu0 %v5447
    %5516 = vmatprep.subr.bf16.mxu0 0
    %5517 = vmatpush1.bf16.msra.mxu0 %v5448
    %5518 = vmatprep.subr.bf16.mxu0 0
    %5519 = vmatpush1.bf16.msra.mxu0 %v5449
    %5520 = vmatprep.subr.bf16.mxu0 0
    %5521 = vmatpush1.bf16.msra.mxu0 %v5450
    %5522 = vmatprep.subr.bf16.mxu0 0
    %5523 = vmatpush1.bf16.msra.mxu0 %v5451
    %5524 = vmatprep.subr.bf16.mxu0 0
    %5525 = vmatpush1.bf16.msra.mxu0 %v5452
    %5526 = vmatprep.subr.bf16.mxu0 0
    %5527 = vmatpush1.bf16.msra.mxu0 %v5453
    %5528 = vmatprep.subr.bf16.mxu0 0
    %5529 = vmatpush1.bf16.msra.mxu0 %v5454
    %5530 = vmatprep.subr.bf16.mxu0 0
    %5531 = vmatpush1.bf16.msra.mxu0 %v5455
    %5532 = vmatprep.subr.bf16.mxu0 0
    %5533 = vmatpush1.bf16.msra.mxu0 %v5456
    %5534 = vmatprep.subr.bf16.mxu0 0
    %5535 = vmatpush1.bf16.msra.mxu0 %v5457
    %5536 = vmatprep.subr.bf16.mxu0 0
    %5537 = vmatpush1.bf16.msra.mxu0 %v5458
    %5538 = vmatprep.subr.bf16.mxu0 0
    %5539 = vmatpush1.bf16.msra.mxu0 %v5459
    %5540 = vmatprep.mubr.bf16.mxu0 %v5238
    %5541 = vmatmul.mubr.bf16.gmra.mrb[0].mxu0 %v5237
    %v5542 = vpop.f32.mrb[0].mxu0
    %v5543 = vadd.f32 %v5314, %v5542
    %v5544 = vpop.f32.mrb[0].mxu0
    %v5545 = vpop.f32.mrb[0].mxu0
    %v5546 = vadd.f32 %v5314, %v5545
    %v5547 = vpop.f32.mrb[0].mxu0
    %5548 = vmatprep.mubr.bf16.mxu0 %v5242
    %5549 = vmatmul.mubr.bf16.gmra.mrb[0].mxu0 %v5241
    %v5550 = vpop.f32.mrb[0].mxu0
    %v5551 = vadd.f32 %v5314, %v5550
    %v5552 = vpop.f32.mrb[0].mxu0
    %v5553 = vpop.f32.mrb[0].mxu0
    %v5554 = vadd.f32 %v5314, %v5553
    %v5555 = vpop.f32.mrb[0].mxu0
    %5556 = vdwg.mxu0
    %5557 = vmatprep.subr.bf16.mxu0 0
    %5558 = vmatpush1.bf16.msra.mxu0 %v5460
    %5559 = vmatprep.subr.bf16.mxu0 0
    %5560 = vmatpush1.bf16.msra.mxu0 %v5461
    %5561 = vmatprep.subr.bf16.mxu0 0
    %5562 = vmatpush1.bf16.msra.mxu0 %v5462
    %5563 = vmatprep.subr.bf16.mxu0 0
    %5564 = vmatpush1.bf16.msra.mxu0 %v5463
    %5565 = vmatprep.subr.bf16.mxu0 0
    %5566 = vmatpush1.bf16.msra.mxu0 %v5464
    %5567 = vmatprep.subr.bf16.mxu0 0
    %5568 = vmatpush1.bf16.msra.mxu0 %v5465
    %5569 = vmatprep.subr.bf16.mxu0 0
    %5570 = vmatpush1.bf16.msra.mxu0 %v5466
    %5571 = vmatprep.subr.bf16.mxu0 0
    %5572 = vmatpush1.bf16.msra.mxu0 %v5467
    %5573 = vmatprep.subr.bf16.mxu0 0
    %5574 = vmatpush1.bf16.msra.mxu0 %v5468
    %5575 = vmatprep.subr.bf16.mxu0 0
    %5576 = vmatpush1.bf16.msra.mxu0 %v5469
    %5577 = vmatprep.subr.bf16.mxu0 0
    %5578 = vmatpush1.bf16.msra.mxu0 %v5470
    %5579 = vmatprep.subr.bf16.mxu0 0
    %5580 = vmatpush1.bf16.msra.mxu0 %v5471
    %5581 = vmatprep.subr.bf16.mxu0 0
    %5582 = vmatpush1.bf16.msra.mxu0 %v5472
    %5583 = vmatprep.subr.bf16.mxu0 0
    %5584 = vmatpush1.bf16.msra.mxu0 %v5473
    %5585 = vmatprep.subr.bf16.mxu0 0
    %5586 = vmatpush1.bf16.msra.mxu0 %v5474
    %5587 = vmatprep.subr.bf16.mxu0 0
    %5588 = vmatpush1.bf16.msra.mxu0 %v5475
    %5589 = vmatprep.mubr.bf16.mxu0 %v5240
    %5590 = vmatmul.mubr.bf16.gmra.mrb[0].mxu0 %v5239
    %v5591 = vpop.f32.mrb[0].mxu0
    %v5592 = vadd.f32 %v5543, %v5591
    %v5593 = vpop.f32.mrb[0].mxu0
    %v5594 = vpop.f32.mrb[0].mxu0
    %v5595 = vadd.f32 %v5546, %v5594
    %v5596 = vpop.f32.mrb[0].mxu0
    %5597 = vmatprep.mubr.bf16.mxu0 %v5244
    %5598 = vmatmul.mubr.bf16.gmra.mrb[0].mxu0 %v5243
    %v5599 = vpop.f32.mrb[0].mxu0
    %v5600 = vadd.f32 %v5551, %v5599
    %v5601 = vpop.f32.mrb[0].mxu0
    %v5602 = vpop.f32.mrb[0].mxu0
    %v5603 = vadd.f32 %v5554, %v5602
    %v5604 = vpop.f32.mrb[0].mxu0
    %5605 = vdwg.mxu0
    %v5606 = vand.u32 2147483647, %v5592
    %v5607 = vand.u32 2147483647, %v5595
    %v5608 = vand.u32 2147483647, %v5600
    %v5609 = vand.u32 2147483647, %v5603
    %v5610 = vsub.f32 0.0, %v5606
    %v5611 = vsub.f32 0.0, %v5607
    %v5612 = vsub.f32 0.0, %v5608
    %v5613 = vsub.f32 0.0, %v5609
    %v5614 = vmul.f32 %v5610, 1.442695
    %v5615 = vpow.pop %v5614
    %v5616 = vmul.f32 %v5611, 1.442695
    %v5617 = vpow.pop %v5616
    %v5618 = vmul.f32 %v5612, 1.442695
    %v5619 = vpow.pop %v5618
    %v5620 = vmul.f32 %v5613, 1.442695
    %v5621 = vpow.pop %v5620
    %v5622 = vadd.f32 %v5615, 1.0
    %v5623 = vadd.f32 %v5617, 1.0
    %v5624 = vadd.f32 %v5619, 1.0
    %v5625 = vadd.f32 %v5621, 1.0
    %v5626 = vrcp.pop %v5622
    %v5627 = vrcp.pop %v5623
    %v5628 = vrcp.pop %v5624
    %v5629 = vrcp.pop %v5625
    %vm5630 = vcmp.ge.f32.partialorder %v5592, 0.0
    %vm5631 = vcmp.ge.f32.partialorder %v5595, 0.0
    %vm5632 = vcmp.ge.f32.partialorder %v5600, 0.0
    %vm5633 = vcmp.ge.f32.partialorder %v5603, 0.0
    %v5634 = vmul.f32 %v5615, %v5626
    %v5635 = vmul.f32 %v5617, %v5627
    %v5636 = vmul.f32 %v5619, %v5628
    %v5637 = vmul.f32 %v5621, %v5629
    %v5638 = vsel %vm5630, %v5626, %v5634
    %v5639 = vsel %vm5631, %v5627, %v5635
    %v5640 = vsel %vm5632, %v5628, %v5636
    %v5641 = vsel %vm5633, %v5629, %v5637
    %vm5642 = vcmask 326656
    %5643 = vst.msk [vmem:[#allocation10] sm:$0xff] %vm5642, %v5638
    %5644 = vst.msk [vmem:[#allocation10 + $0x8] sm:$0xff] %vm5642, %v5639
    %5645 = vst.msk [vmem:[#allocation10 + $0x10] sm:$0xff] %vm5642, %v5640
    %5646 = vst.msk [vmem:[#allocation10 + $0x18] sm:$0xff] %vm5642, %v5641
    // Predicated region
    $region46: #{discriminator_forward.1} parent=1 // pred_check
      _
    $region47: #{discriminator_forward.1} parent=1 // pred_check_branch
      %5648 = sbr.rel (0) target = $region49
    $region48: #{discriminator_forward.1} parent=1 // pred_region
      %s5650 = ssub.s32 512, 512
      %5651 = vsyncadd [#allocation4], %s5650
      %s5652 = sshll.u32 [#allocation10], 4
      %s5653 = int_to_ptr.vmem [resolvable:$true] %s5652
      %5658 = dma.vmem_to_hbm [thread:$0]  %s5653, 512, %s7, [#allocation4], 128, 128, 8
    $region49: #{discriminator_forward.1} parent=1 // pred_fallthru
      _
    // Predicated region
    $region50: #{discriminator_forward.1} parent=1 // pred_check
      _
    $region51: #{discriminator_forward.1} parent=1 // pred_check_branch
      %5660 = sbr.rel (0) target = $region53
    $region52: #{discriminator_forward.1} parent=1 // pred_region
      %5661 = dma.done [#allocation4], 512
    $region53: #{discriminator_forward.1} parent=1 // pred_fallthru
      _
    %5662 = vsyncpa [#allocation3], 1
    %5663 = vsyncpa [#allocation6], 1
    %5664 = vsyncpa [#allocation9], 1
    %5665 = vsyncpa [#allocation4], 1

</llo_original>
